<compile_context>
chip_gen: v6e
topology: v6e:2x2x1
jax: 0.10.0
libtpu: 0.0.40
codegen_flags: <defaults>
</compile_context>

<pallas_src>
import jax
import jax.numpy as jnp
from jax.experimental import pallas as pl
from jax.experimental.pallas import tpu as pltpu

LANE = 128      # TPU lane width (hidden-dim alignment target)
SUBLANE = 8     # TPU sublane width (batch-tile alignment target)


def _round_up(x, m):
    return ((x + m - 1) // m) * m


def _pad2d(a, rows, cols):
    """Zero-pad a 2-D array up to (rows, cols)."""
    return jnp.pad(a, ((0, rows - a.shape[0]), (0, cols - a.shape[1])))


# -----------------------------------------------------------------------------
# Pallas kernel: full MLP forward (matmul + bias + ReLU chain) on a batch tile.
# Hidden dims are padded to multiples of 128; x / out keep their true width.
# -----------------------------------------------------------------------------
def _make_mlp_kernel(num_layers):
    def mlp_kernel(*refs):
        # refs = (x_ref, w_0..w_{L-1}, b_0..b_{L-1}, o_ref)
        x_ref = refs[0]
        w_refs = refs[1:1 + num_layers]
        b_refs = refs[1 + num_layers:1 + 2 * num_layers]
        o_ref = refs[-1]

        h = x_ref[...]
        for i in range(num_layers):
            h = jnp.dot(h, w_refs[i][...],
                        preferred_element_type=jnp.float32) + b_refs[i][...]
            if i < num_layers - 1:            # ReLU on all hidden layers
                h = jnp.maximum(h, 0.0)
        o_ref[...] = h.astype(o_ref.dtype)

    return mlp_kernel


def _choose_tiling(B, batch_tile):
    """Return (tile, steps), tile % 8 == 0.  One step when B fits a single
    tile; otherwise an even step count so both v7x TensorCores get equal work
    under dimension_semantics=('parallel',)."""
    B8 = _round_up(B, SUBLANE)
    steps = -(-B8 // batch_tile)
    if steps <= 1:
        return B8, 1
    steps = _round_up(steps, 2)
    tile = _round_up(-(-B8 // steps), SUBLANE)
    steps = _round_up(-(-B8 // tile), 2)
    return tile, steps


def mlp_forward(x_input, weights, biases, *, batch_tile=1024):
    """x_input: [B, d_in] f32; weights[i]: [in, out]; biases[i]: [1, out].
    Hidden dims are expected pre-padded to 128; d_in / d_out may be narrow."""
    num_layers = len(weights)
    B, d_in = x_input.shape
    d_out = weights[-1].shape[1]

    tile, steps = _choose_tiling(B, batch_tile)
    B_pad = tile * steps
    if B_pad != B:
        # the only O(B) pad left in the pipeline (ragged last tile)
        x_input = jnp.pad(x_input, ((0, B_pad - B), (0, 0)))

    kernel = _make_mlp_kernel(num_layers)

    # x / out tiled over batch at true feature width; weights & biases are
    # whole-array blocks with constant index_maps (resident every step).
    x_spec = pl.BlockSpec((tile, d_in), lambda i: (i, 0))
    w_specs = [pl.BlockSpec(w.shape, lambda i: (0, 0)) for w in weights]
    b_specs = [pl.BlockSpec(b.shape, lambda i: (0, 0)) for b in biases]
    out_spec = pl.BlockSpec((tile, d_out), lambda i: (i, 0))

    flops = 2 * B_pad * sum(w.shape[0] * w.shape[1] for w in weights)
    bytes_accessed = 4 * (B_pad * (d_in + d_out)
                          + sum(int(w.size) for w in weights)
                          + sum(int(b.size) for b in biases))

    out = pl.pallas_call(
        kernel,
        out_shape=jax.ShapeDtypeStruct((B_pad, d_out), jnp.float32),
        grid_spec=pltpu.PrefetchScalarGridSpec(
            num_scalar_prefetch=0,
            grid=(steps,),
            in_specs=[x_spec] + w_specs + b_specs,
            out_specs=out_spec,
        ),
        compiler_params=pltpu.CompilerParams(
            dimension_semantics=("parallel",)),
        cost_estimate=pl.CostEstimate(flops=flops, transcendentals=0,
                                      bytes_accessed=bytes_accessed),
    )(x_input, *weights, *biases)

    return out[:B] if B_pad != B else out


# -----------------------------------------------------------------------------
# HedgeModel (parameters + forward wrapper)
# -----------------------------------------------------------------------------
def init_hedge_model(key, N, d, layer_sizes, T):
    """Deterministic parameter init mirroring the PyTorch module's shapes.
    Stores logical (PyTorch-shaped, transposed) and kernel-layout weights."""
    dims = [d + 1] + list(layer_sizes) + [d]
    weights, biases = [], []
    for din, dout in zip(dims[:-1], dims[1:]):
        key, wk, bk = jax.random.split(key, 3)
        bound = 1.0 / jnp.sqrt(jnp.float32(din))      # matches nn.Linear init range
        weights.append(jax.random.uniform(wk, (din, dout), jnp.float32,
                                          minval=-bound, maxval=bound))
        biases.append(jax.random.uniform(bk, (1, dout), jnp.float32,
                                         minval=-bound, maxval=bound))

    # ---- kernel-layout copies: pad ONLY hidden dims to 128 -------------------
    # First layer: drop the time-feature row (folded into the bias at call
    # time) and keep the true input width d.  Last layer: keep output width d.
    num_layers = len(weights)
    weights_p, biases_p = [], []
    for i, (w, b) in enumerate(zip(weights, biases)):
        in_dim, out_dim = w.shape
        if i == 0:
            w_src, in_p = w[:d, :], d                       # true input width
        else:
            w_src, in_p = w, _round_up(in_dim, LANE)        # padded hidden in
        out_p = out_dim if i == num_layers - 1 else _round_up(out_dim, LANE)
        weights_p.append(_pad2d(w_src, in_p, out_p))
        biases_p.append(_pad2d(b, 1, out_p))

    out0_p = weights_p[0].shape[1]
    w0_time_row_p = _pad2d(weights[0][d:d + 1, :], 1, out0_p)   # [1, hidden0_p]

    return {
        "p0": jnp.ones((1,), jnp.float32),
        "delta0": jnp.ones((1, d), jnp.float32),
        "weights": weights, "biases": biases,            # logical (reference)
        "weights_p": weights_p, "biases_p": biases_p,    # kernel layout
        "w0_time_row_p": w0_time_row_p,
        "N": N, "T": T, "d": d,
    }


def _mlp_ref(x_input, weights, biases):
    """Pure-JAX reference (also used as the small-batch fast path)."""
    h = x_input
    for i, (w, b) in enumerate(zip(weights, biases)):
        h = h @ w + b
        if i < len(weights) - 1:
            h = jnp.maximum(h, 0.0)
    return h


def hedge_model_forward(params, n, x, *, batch_tile=1024, min_pallas_batch=64):
    """n: python int time index; x: [batch, d] f32.
    NOTE: branches on n / batch size at Python level (not jit-traceable n)."""
    batch = x.shape[0]
    d = params["d"]
    if n == 0:
        # (p0, delta0.expand(batch, -1)) — trivial broadcast, no kernel needed.
        return params["p0"], jnp.broadcast_to(params["delta0"], (batch, d))

    t_val = n * (params["T"] / (params["N"] - 1))

    if batch < min_pallas_batch:
        # Tiny batch: pallas_call fixed overhead exceeds the work; let XLA fuse.
        time_feature = jnp.full((batch, 1), t_val, dtype=x.dtype)
        x_in = jnp.concatenate([x, time_feature], axis=1)
        return _mlp_ref(x_in, params["weights"], params["biases"])

    # Pallas path: fold the time feature into the first-layer bias
    # (b0' = b0 + t * W0[d, :]); x is fed at its true width d (no feature pad).
    biases_p = list(params["biases_p"])
    biases_p[0] = biases_p[0] + jnp.float32(t_val) * params["w0_time_row_p"]

    return mlp_forward(x.astype(jnp.float32), params["weights_p"], biases_p,
                       batch_tile=batch_tile)


# -----------------------------------------------------------------------------
# Demo / correctness check
# -----------------------------------------------------------------------------
if __name__ == "__main__":
    N, d, T = 10, 4, 1.0
    layer_sizes = [32, 32]
    batch = 2048                      # -> 2 parallel grid steps at tile=1024

    key = jax.random.PRNGKey(0)
    pkey, xkey = jax.random.split(key)
    params = init_hedge_model(pkey, N, d, layer_sizes, T)
    x = jax.random.normal(xkey, (batch, d), jnp.float32)

    # n > 0 branch: MLP hedge network (Pallas kernel hot path)
    n = 3
    out = jax.block_until_ready(hedge_model_forward(params, n, x))

    # reference check against the unpadded / concat formulation
    t_val = n * (T / (N - 1))
    x_in = jnp.concatenate([x, jnp.full((batch, 1), t_val, jnp.float32)], axis=1)
    ref = _mlp_ref(x_in, params["weights"], params["biases"])
    assert out.shape == (batch, d)
    assert jnp.allclose(out, ref, atol=1e-5, rtol=1e-5)

    # odd batch size exercises the (single) ragged-batch pad + 1-step grid
    x_odd = x[:300]
    out_odd = jax.block_until_ready(hedge_model_forward(params, n, x_odd))
    assert out_odd.shape == (300, d)
    assert jnp.allclose(out_odd, ref[:300], atol=1e-5, rtol=1e-5)

    # small batch: XLA fallback path
    out_small = jax.block_until_ready(hedge_model_forward(params, n, x[:8]))
    assert jnp.allclose(out_small, ref[:8], atol=1e-5, rtol=1e-5)

    # n == 0 branch: (p0, expanded delta0)
    p0, delta0 = hedge_model_forward(params, 0, x)
    jax.block_until_ready(delta0)
    assert p0.shape == (1,) and delta0.shape == (batch, d)

    print("KERNEL_OK")
</pallas_src>

<mosaic_0001>
module attributes {stable_mosaic.version = 11 : i64} {
  func.func @mlp_kernel(%arg0: i32, %arg1: memref<1024x4xf32, #tpu.memory_space<vmem>>, %arg2: memref<4x128xf32, #tpu.memory_space<vmem>>, %arg3: memref<128x128xf32, #tpu.memory_space<vmem>>, %arg4: memref<128x4xf32, #tpu.memory_space<vmem>>, %arg5: memref<1x128xf32, #tpu.memory_space<vmem>>, %arg6: memref<1x128xf32, #tpu.memory_space<vmem>>, %arg7: memref<1x4xf32, #tpu.memory_space<vmem>>, %arg8: memref<1024x4xf32, #tpu.memory_space<vmem>>) attributes {dimension_semantics = [#tpu.dimension_semantics<parallel>], iteration_bounds = array<i64: 2>, scalar_prefetch = 0 : i64, scratch_operands = 0 : i64, tpu.core_type = #tpu.core_type<tc>, window_params = [{transform_indices = @transform_0, window_bounds = array<i64: 1024, 4>}, {pipeline_mode = #tpu.pipeline_mode<synchronous>, transform_indices = @transform_1, window_bounds = array<i64: 4, 128>}, {pipeline_mode = #tpu.pipeline_mode<synchronous>, transform_indices = @transform_2, window_bounds = array<i64: 128, 128>}, {pipeline_mode = #tpu.pipeline_mode<synchronous>, transform_indices = @transform_3, window_bounds = array<i64: 128, 4>}, {pipeline_mode = #tpu.pipeline_mode<synchronous>, transform_indices = @transform_4, window_bounds = array<i64: 1, 128>}, {pipeline_mode = #tpu.pipeline_mode<synchronous>, transform_indices = @transform_5, window_bounds = array<i64: 1, 128>}, {pipeline_mode = #tpu.pipeline_mode<synchronous>, transform_indices = @transform_6, window_bounds = array<i64: 1, 4>}, {transform_indices = @transform_7, window_bounds = array<i64: 1024, 4>}]} {
    %c0 = arith.constant 0 : index
    %c0_0 = arith.constant 0 : index
    %0 = vector.load %arg1[%c0, %c0_0] : memref<1024x4xf32, #tpu.memory_space<vmem>>, vector<1024x4xf32>
    %c0_1 = arith.constant 0 : index
    %c0_2 = arith.constant 0 : index
    %1 = vector.load %arg2[%c0_1, %c0_2] : memref<4x128xf32, #tpu.memory_space<vmem>>, vector<4x128xf32>
    %cst = arith.constant dense<0.000000e+00> : vector<1024x128xf32>
    %2 = tpu.matmul %0, %1, %cst {dimension_numbers = #tpu.dot_dimension_numbers<[1], [0], [0], [1], [0, 0, 1, 1], [], []>} : vector<1024x4xf32>, vector<4x128xf32>, vector<1024x128xf32> -> vector<1024x128xf32>
    %c0_3 = arith.constant 0 : index
    %c0_4 = arith.constant 0 : index
    %3 = vector.load %arg5[%c0_3, %c0_4] : memref<1x128xf32, #tpu.memory_space<vmem>>, vector<1x128xf32>
    %4 = vector.broadcast %3 : vector<1x128xf32> to vector<1024x128xf32>
    %5 = arith.addf %2, %4 : vector<1024x128xf32>
    %cst_5 = arith.constant 0.000000e+00 : f32
    %6 = vector.broadcast %cst_5 : f32 to vector<1024x128xf32>
    %7 = arith.maximumf %5, %6 : vector<1024x128xf32>
    %c0_6 = arith.constant 0 : index
    %c0_7 = arith.constant 0 : index
    %8 = vector.load %arg3[%c0_6, %c0_7] : memref<128x128xf32, #tpu.memory_space<vmem>>, vector<128x128xf32>
    %cst_8 = arith.constant dense<0.000000e+00> : vector<1024x128xf32>
    %9 = tpu.matmul %7, %8, %cst_8 {dimension_numbers = #tpu.dot_dimension_numbers<[1], [0], [0], [1], [0, 0, 1, 1], [], []>} : vector<1024x128xf32>, vector<128x128xf32>, vector<1024x128xf32> -> vector<1024x128xf32>
    %c0_9 = arith.constant 0 : index
    %c0_10 = arith.constant 0 : index
    %10 = vector.load %arg6[%c0_9, %c0_10] : memref<1x128xf32, #tpu.memory_space<vmem>>, vector<1x128xf32>
    %11 = vector.broadcast %10 : vector<1x128xf32> to vector<1024x128xf32>
    %12 = arith.addf %9, %11 : vector<1024x128xf32>
    %cst_11 = arith.constant 0.000000e+00 : f32
    %13 = vector.broadcast %cst_11 : f32 to vector<1024x128xf32>
    %14 = arith.maximumf %12, %13 : vector<1024x128xf32>
    %c0_12 = arith.constant 0 : index
    %c0_13 = arith.constant 0 : index
    %15 = vector.load %arg4[%c0_12, %c0_13] : memref<128x4xf32, #tpu.memory_space<vmem>>, vector<128x4xf32>
    %cst_14 = arith.constant dense<0.000000e+00> : vector<1024x4xf32>
    %16 = tpu.matmul %14, %15, %cst_14 {dimension_numbers = #tpu.dot_dimension_numbers<[1], [0], [0], [1], [0, 0, 1, 1], [], []>} : vector<1024x128xf32>, vector<128x4xf32>, vector<1024x4xf32> -> vector<1024x4xf32>
    %c0_15 = arith.constant 0 : index
    %c0_16 = arith.constant 0 : index
    %17 = vector.load %arg7[%c0_15, %c0_16] : memref<1x4xf32, #tpu.memory_space<vmem>>, vector<1x4xf32>
    %18 = vector.broadcast %17 : vector<1x4xf32> to vector<1024x4xf32>
    %19 = arith.addf %16, %18 : vector<1024x4xf32>
    %c0_17 = arith.constant 0 : index
    %c0_18 = arith.constant 0 : index
    %20 = vector.load %arg8[%c0_17, %c0_18] : memref<1024x4xf32, #tpu.memory_space<vmem>>, vector<1024x4xf32>
    tpu.vector_store %arg8[%c0_17, %c0_18], %19 {strides = array<i32>} : memref<1024x4xf32, #tpu.memory_space<vmem>>, vector<1024x4xf32>,
    return
  }
  func.func @transform_0(%arg0: i32) -> (i32, i32) {
    %c0_i32 = arith.constant 0 : i32
    %c0_i32_0 = arith.constant 0 : i32
    return %arg0, %c0_i32 : i32, i32
  }
  func.func @transform_1(%arg0: i32) -> (i32, i32) {
    %c0_i32 = arith.constant 0 : i32
    %c0_i32_0 = arith.constant 0 : i32
    %c0_i32_1 = arith.constant 0 : i32
    return %c0_i32, %c0_i32_0 : i32, i32
  }
  func.func @transform_2(%arg0: i32) -> (i32, i32) {
    %c0_i32 = arith.constant 0 : i32
    %c0_i32_0 = arith.constant 0 : i32
    %c0_i32_1 = arith.constant 0 : i32
    return %c0_i32, %c0_i32_0 : i32, i32
  }
  func.func @transform_3(%arg0: i32) -> (i32, i32) {
    %c0_i32 = arith.constant 0 : i32
    %c0_i32_0 = arith.constant 0 : i32
    %c0_i32_1 = arith.constant 0 : i32
    return %c0_i32, %c0_i32_0 : i32, i32
  }
  func.func @transform_4(%arg0: i32) -> (i32, i32) {
    %c0_i32 = arith.constant 0 : i32
    %c0_i32_0 = arith.constant 0 : i32
    %c0_i32_1 = arith.constant 0 : i32
    return %c0_i32, %c0_i32_0 : i32, i32
  }
  func.func @transform_5(%arg0: i32) -> (i32, i32) {
    %c0_i32 = arith.constant 0 : i32
    %c0_i32_0 = arith.constant 0 : i32
    %c0_i32_1 = arith.constant 0 : i32
    return %c0_i32, %c0_i32_0 : i32, i32
  }
  func.func @transform_6(%arg0: i32) -> (i32, i32) {
    %c0_i32 = arith.constant 0 : i32
    %c0_i32_0 = arith.constant 0 : i32
    %c0_i32_1 = arith.constant 0 : i32
    return %c0_i32, %c0_i32_0 : i32, i32
  }
  func.func @transform_7(%arg0: i32) -> (i32, i32) {
    %c0_i32 = arith.constant 0 : i32
    %c0_i32_0 = arith.constant 0 : i32
    return %arg0, %c0_i32 : i32, i32
  }
}

</mosaic_0001>

<llo_original>
// kernel: tpu_custom_call.1
$region0: #{tpu_custom_call.1}
  #allocation0 [shape = 'u32[]', space=smem, size = 0x4, offset = 0x4, fixed_abs, tag = 'smem constant byte address 0x4 - core index']
  #allocation1 [shape = 'u32[144,128]{1,0:T(1,128)}', space=vmem, size = 0x12000, scoped, tag = 'internal scratch']
  %s0 = inlined_call_operand.vmem [shape: f32[2048,4], index: 0, kind: input, shape index: {}]
  %s1 = inlined_call_operand.vmem [shape: f32[4,128], index: 1, kind: input, shape index: {}]
  %s2 = inlined_call_operand.vmem [shape: f32[128,128], index: 2, kind: input, shape index: {}]
  %s3 = inlined_call_operand.vmem [shape: f32[128,4], index: 3, kind: input, shape index: {}]
  %s4 = inlined_call_operand.vmem [shape: f32[1,128], index: 4, kind: input, shape index: {}]
  %s5 = inlined_call_operand.vmem [shape: f32[1,128], index: 5, kind: input, shape index: {}]
  %s6 = inlined_call_operand.vmem [shape: f32[1,4], index: 6, kind: input, shape index: {}]
  %s7 = inlined_call_operand.vmem [shape: f32[2048,4], index: 7, kind: output, shape index: {}]
  %s8 = sld [smem:[#allocation0]]
  $region61: #{tpu_custom_call.1} parent=0
    _
  %s10 = ssub.s32 1, %s8
  %s11 = scalar_select 0, %s10, %s8
  loop: start=0, step=1, limit=4
  $region2: #{tpu_custom_call.1} parent=0 // loop_pre_header
    _
  $region3: #{tpu_custom_call.1} parent=0 // loop_header
    %s13 = sphi 0, %s17
    %p14 = scmp.ge.s32.totalorder %s13, 4
    %s23 = sphi 0, %s25
    %s26 = sphi 0, %s23
    %s27 = sphi 0, %s26
    %s43 = sphi 0, %s27
    %s47 = sphi 0, %s47
    %s49 = sphi 0, %s47
    %s50 = sphi 0, %s49
    %s64 = sphi 0, %s50
    %s68 = sphi 0, %s68
    %s70 = sphi 0, %s68
    %s71 = sphi 0, %s70
    %s85 = sphi 0, %s71
    %s89 = sphi 0, %s89
    %s91 = sphi 0, %s89
    %s92 = sphi 0, %s91
    %s106 = sphi 0, %s92
    %s110 = sphi 0, %s110
    %s112 = sphi 0, %s110
    %s113 = sphi 0, %s112
    %s127 = sphi 0, %s113
    %s131 = sphi 0, %s131
    %s133 = sphi 0, %s131
    %s134 = sphi 0, %s133
    %s148 = sphi 0, %s134
    %s152 = sphi 0, %s152
    %s154 = sphi 0, %s152
    %s155 = sphi 0, %s154
    %s169 = sphi 0, %s155
    %s175 = sphi 0, %s177
    %s178 = sphi 0, %s175
    %s179 = sphi 0, %s178
    %s195 = sphi 0, %s179
  $region4: #{tpu_custom_call.1} parent=0 // loop_header_branch
    %16 = sbr.rel (%p14) target = $region8
  $region5: #{tpu_custom_call.1} parent=0 // loop_body
    %s18 = ssub.s32 %s13, 1
    %s19 = ssub.s32 %s13, 2
    %s20 = sadd.s32 %s13, 1
    %s21 = ssub.s32 %s13, %s20
    %p22 = scmp.eq.s32.totalorder %s21, 0
    %s24 = sadd.s32 %s23, 1
    %s25 = scalar_select %p22, %s23, %s24
    %p28 = pneg %p22
    %p29 = scmp.eq.s32.totalorder %s13, 1
    %p30 = por %p28, %p29
    %p31 = scmp.ne.s32.totalorder %s23, %s26
    %p32 = scmp.eq.s32.totalorder %s13, 0
    %p33 = por %p31, %p32
    %p34 = scmp.ne.s32.totalorder %s23, %s26
    %p35 = scmp.eq.s32.totalorder %s18, 1
    %p36 = por %p34, %p35
    %p37 = scmp.ne.s32.totalorder %s26, %s27
    %p38 = scmp.eq.s32.totalorder %s18, 0
    %p39 = por %p37, %p38
    %p40 = scmp.ne.s32.totalorder %s26, %s27
    %p41 = scmp.eq.s32.totalorder %s19, 1
    %p42 = por %p40, %p41
    %p44 = scmp.ne.s32.totalorder %s27, %s43
    %p45 = scmp.eq.s32.totalorder %s19, 0
    %p46 = por %p44, %p45
    %s48 = sadd.s32 %s47, 1
    %p51 = scmp.eq.s32.totalorder %s13, 1
    %p52 = scmp.ne.s32.totalorder %s47, %s49
    %p53 = scmp.eq.s32.totalorder %s13, 0
    %p54 = por %p52, %p53
    %p55 = scmp.ne.s32.totalorder %s47, %s49
    %p56 = scmp.eq.s32.totalorder %s18, 1
    %p57 = por %p55, %p56
    %p58 = scmp.ne.s32.totalorder %s49, %s50
    %p59 = scmp.eq.s32.totalorder %s18, 0
    %p60 = por %p58, %p59
    %p61 = scmp.ne.s32.totalorder %s49, %s50
    %p62 = scmp.eq.s32.totalorder %s19, 1
    %p63 = por %p61, %p62
    %p65 = scmp.ne.s32.totalorder %s50, %s64
    %p66 = scmp.eq.s32.totalorder %s19, 0
    %p67 = por %p65, %p66
    %s69 = sadd.s32 %s68, 1
    %p72 = scmp.eq.s32.totalorder %s13, 1
    %p73 = scmp.ne.s32.totalorder %s68, %s70
    %p74 = scmp.eq.s32.totalorder %s13, 0
    %p75 = por %p73, %p74
    %p76 = scmp.ne.s32.totalorder %s68, %s70
    %p77 = scmp.eq.s32.totalorder %s18, 1
    %p78 = por %p76, %p77
    %p79 = scmp.ne.s32.totalorder %s70, %s71
    %p80 = scmp.eq.s32.totalorder %s18, 0
    %p81 = por %p79, %p80
    %p82 = scmp.ne.s32.totalorder %s70, %s71
    %p83 = scmp.eq.s32.totalorder %s19, 1
    %p84 = por %p82, %p83
    %p86 = scmp.ne.s32.totalorder %s71, %s85
    %p87 = scmp.eq.s32.totalorder %s19, 0
    %p88 = por %p86, %p87
    %s90 = sadd.s32 %s89, 1
    %p93 = scmp.eq.s32.totalorder %s13, 1
    %p94 = scmp.ne.s32.totalorder %s89, %s91
    %p95 = scmp.eq.s32.totalorder %s13, 0
    %p96 = por %p94, %p95
    %p97 = scmp.ne.s32.totalorder %s89, %s91
    %p98 = scmp.eq.s32.totalorder %s18, 1
    %p99 = por %p97, %p98
    %p100 = scmp.ne.s32.totalorder %s91, %s92
    %p101 = scmp.eq.s32.totalorder %s18, 0
    %p102 = por %p100, %p101
    %p103 = scmp.ne.s32.totalorder %s91, %s92
    %p104 = scmp.eq.s32.totalorder %s19, 1
    %p105 = por %p103, %p104
    %p107 = scmp.ne.s32.totalorder %s92, %s106
    %p108 = scmp.eq.s32.totalorder %s19, 0
    %p109 = por %p107, %p108
    %s111 = sadd.s32 %s110, 1
    %p114 = scmp.eq.s32.totalorder %s13, 1
    %p115 = scmp.ne.s32.totalorder %s110, %s112
    %p116 = scmp.eq.s32.totalorder %s13, 0
    %p117 = por %p115, %p116
    %p118 = scmp.ne.s32.totalorder %s110, %s112
    %p119 = scmp.eq.s32.totalorder %s18, 1
    %p120 = por %p118, %p119
    %p121 = scmp.ne.s32.totalorder %s112, %s113
    %p122 = scmp.eq.s32.totalorder %s18, 0
    %p123 = por %p121, %p122
    %p124 = scmp.ne.s32.totalorder %s112, %s113
    %p125 = scmp.eq.s32.totalorder %s19, 1
    %p126 = por %p124, %p125
    %p128 = scmp.ne.s32.totalorder %s113, %s127
    %p129 = scmp.eq.s32.totalorder %s19, 0
    %p130 = por %p128, %p129
    %s132 = sadd.s32 %s131, 1
    %p135 = scmp.eq.s32.totalorder %s13, 1
    %p136 = scmp.ne.s32.totalorder %s131, %s133
    %p137 = scmp.eq.s32.totalorder %s13, 0
    %p138 = por %p136, %p137
    %p139 = scmp.ne.s32.totalorder %s131, %s133
    %p140 = scmp.eq.s32.totalorder %s18, 1
    %p141 = por %p139, %p140
    %p142 = scmp.ne.s32.totalorder %s133, %s134
    %p143 = scmp.eq.s32.totalorder %s18, 0
    %p144 = por %p142, %p143
    %p145 = scmp.ne.s32.totalorder %s133, %s134
    %p146 = scmp.eq.s32.totalorder %s19, 1
    %p147 = por %p145, %p146
    %p149 = scmp.ne.s32.totalorder %s134, %s148
    %p150 = scmp.eq.s32.totalorder %s19, 0
    %p151 = por %p149, %p150
    %s153 = sadd.s32 %s152, 1
    %p156 = scmp.eq.s32.totalorder %s13, 1
    %p157 = scmp.ne.s32.totalorder %s152, %s154
    %p158 = scmp.eq.s32.totalorder %s13, 0
    %p159 = por %p157, %p158
    %p160 = scmp.ne.s32.totalorder %s152, %s154
    %p161 = scmp.eq.s32.totalorder %s18, 1
    %p162 = por %p160, %p161
    %p163 = scmp.ne.s32.totalorder %s154, %s155
    %p164 = scmp.eq.s32.totalorder %s18, 0
    %p165 = por %p163, %p164
    %p166 = scmp.ne.s32.totalorder %s154, %s155
    %p167 = scmp.eq.s32.totalorder %s19, 1
    %p168 = por %p166, %p167
    %p170 = scmp.ne.s32.totalorder %s155, %s169
    %p171 = scmp.eq.s32.totalorder %s19, 0
    %p172 = por %p170, %p171
    %s173 = ssub.s32 %s13, %s20
    %p174 = scmp.eq.s32.totalorder %s173, 0
    %s176 = sadd.s32 %s175, 1
    %s177 = scalar_select %p174, %s175, %s176
    %p180 = pneg %p174
    %p181 = scmp.eq.s32.totalorder %s13, 1
    %p182 = por %p180, %p181
    %p183 = scmp.ne.s32.totalorder %s175, %s178
    %p184 = scmp.eq.s32.totalorder %s13, 0
    %p185 = por %p183, %p184
    %p186 = scmp.ne.s32.totalorder %s175, %s178
    %p187 = scmp.eq.s32.totalorder %s18, 1
    %p188 = por %p186, %p187
    %p189 = scmp.ne.s32.totalorder %s178, %s179
    %p190 = scmp.eq.s32.totalorder %s18, 0
    %p191 = por %p189, %p190
    %p192 = scmp.ne.s32.totalorder %s178, %s179
    %p193 = scmp.eq.s32.totalorder %s19, 1
    %p194 = por %p192, %p193
    %p196 = scmp.ne.s32.totalorder %s179, %s195
    %p197 = scmp.eq.s32.totalorder %s19, 0
    %p198 = por %p196, %p197
    %p199 = scmp.le.s32.totalorder 1, %s13
    %p200 = scmp.lt.s32.totalorder %s13, 3
    %p201 = pnand %p199, %p200
    %p202 = pneg %p201
    // Predicated region
    $region9: #{tpu_custom_call.1} parent=5 // pred_check
      _
    $region10: #{tpu_custom_call.1} parent=5 // pred_check_branch
      %204 = sbr.rel (%p201) target = $region12
    $region11: #{tpu_custom_call.1} parent=5 // pred_region
      %s205 = ssub.s32 %s13, 1
      // Predicated region
      $region13: #{tpu_custom_call.1} parent=11 // pred_check
        %p206 = pneg %p60
      $region14: #{tpu_custom_call.1} parent=11 // pred_check_branch
        %208 = sbr.rel (%p206) target = $region16
      $region15: #{tpu_custom_call.1} parent=11 // pred_region
        _
      $region16: #{tpu_custom_call.1} parent=11 // pred_fallthru
        _
      // Predicated region
      $region17: #{tpu_custom_call.1} parent=11 // pred_check
        %p209 = pneg %p81
      $region18: #{tpu_custom_call.1} parent=11 // pred_check_branch
        %211 = sbr.rel (%p209) target = $region20
      $region19: #{tpu_custom_call.1} parent=11 // pred_region
        _
      $region20: #{tpu_custom_call.1} parent=11 // pred_fallthru
        _
      // Predicated region
      $region21: #{tpu_custom_call.1} parent=11 // pred_check
        %p212 = pneg %p102
      $region22: #{tpu_custom_call.1} parent=11 // pred_check_branch
        %214 = sbr.rel (%p212) target = $region24
      $region23: #{tpu_custom_call.1} parent=11 // pred_region
        _
      $region24: #{tpu_custom_call.1} parent=11 // pred_fallthru
        _
      // Predicated region
      $region25: #{tpu_custom_call.1} parent=11 // pred_check
        %p215 = pneg %p123
      $region26: #{tpu_custom_call.1} parent=11 // pred_check_branch
        %217 = sbr.rel (%p215) target = $region28
      $region27: #{tpu_custom_call.1} parent=11 // pred_region
        _
      $region28: #{tpu_custom_call.1} parent=11 // pred_fallthru
        _
      // Predicated region
      $region29: #{tpu_custom_call.1} parent=11 // pred_check
        %p218 = pneg %p144
      $region30: #{tpu_custom_call.1} parent=11 // pred_check_branch
        %220 = sbr.rel (%p218) target = $region32
      $region31: #{tpu_custom_call.1} parent=11 // pred_region
        _
      $region32: #{tpu_custom_call.1} parent=11 // pred_fallthru
        _
      // Predicated region
      $region33: #{tpu_custom_call.1} parent=11 // pred_check
        %p221 = pneg %p165
      $region34: #{tpu_custom_call.1} parent=11 // pred_check_branch
        %223 = sbr.rel (%p221) target = $region36
      $region35: #{tpu_custom_call.1} parent=11 // pred_region
        _
      $region36: #{tpu_custom_call.1} parent=11 // pred_fallthru
        _
    $region12: #{tpu_custom_call.1} parent=5 // pred_fallthru
      _
    %p224 = scmp.lt.s32.totalorder %s13, 2
    // Predicated region
    $region37: #{tpu_custom_call.1} parent=5 // pred_check
      %p225 = pneg %p224
    $region38: #{tpu_custom_call.1} parent=5 // pred_check_branch
      %227 = sbr.rel (%p225) target = $region40
    $region39: #{tpu_custom_call.1} parent=5 // pred_region
      // Predicated region
      $region41: #{tpu_custom_call.1} parent=39 // pred_check
        %p228 = pneg %p33
      $region42: #{tpu_custom_call.1} parent=39 // pred_check_branch
        %230 = sbr.rel (%p228) target = $region44
      $region43: #{tpu_custom_call.1} parent=39 // pred_region
        %s231 = smul.u32 128, %s13
        %p232 = scmp.lt.s32.totalorder %s231, 255
        %s233 = scalar_select %p232, %s231, 255
        %s234 = smul.addr %s233, 8
        %s235 = scalar_lea.vmem %s0, %s234
        %s236 = smul.u32 128, %s13
      $region44: #{tpu_custom_call.1} parent=39 // pred_fallthru
        _
    $region40: #{tpu_custom_call.1} parent=5 // pred_fallthru
      _
    %p237 = scmp.le.s32.totalorder 1, %s13
    %p238 = scmp.lt.s32.totalorder %s13, 3
    %p239 = pnand %p237, %p238
    %p240 = pneg %p239
    // Predicated region
    $region45: #{tpu_custom_call.1} parent=5 // pred_check
      _
    $region46: #{tpu_custom_call.1} parent=5 // pred_check_branch
      %242 = sbr.rel (%p239) target = $region48
    $region47: #{tpu_custom_call.1} parent=5 // pred_region
      %s243 = ssub.s32 %s13, 1
      %s244 = smul.u32 128, %s18
      %p245 = scmp.lt.s32.totalorder %s244, 255
      %s246 = scalar_select %p245, %s244, 255
      %s247 = smul.addr %s246, 8
      %s248 = scalar_lea.vmem %s0, %s247
      %p249 = pneg %p39
      %p250 = pneg %p36
      %p251 = pneg %p60
      %p252 = pneg %p57
      %p253 = pneg %p81
      %p254 = pneg %p78
      %p255 = pneg %p102
      %p256 = pneg %p99
      %p257 = pneg %p123
      %p258 = pneg %p120
      %p259 = pneg %p144
      %p260 = pneg %p141
      %p261 = pneg %p165
      %p262 = pneg %p162
      %p263 = pneg %p191
      %p264 = pneg %p188
      %s265 = smul.u32 128, %s18
      %p266 = scmp.lt.s32.totalorder %s265, 255
      %s267 = scalar_select %p266, %s265, 255
      %s268 = smul.addr %s267, 8
      %s269 = scalar_lea.vmem %s7, %s268
      %s270 = smul.u32 128, %s18
      %p271 = scmp.lt.s32.totalorder %s270, 255
      %s272 = scalar_select %p271, %s270, 255
      %s273 = smul.addr %s272, 8
      %s274 = scalar_lea.vmem %s0, %s273
      %s275 = smul.u32 128, %s18
      %s276 = smul.u32 128, %s18
      %p277 = scmp.lt.s32.totalorder %s276, 255
      %s278 = scalar_select %p277, %s276, 255
      %s279 = smul.addr %s278, 8
      %s280 = scalar_lea.vmem %s7, %s279
      %s281 = smul.u32 128, %s18
      %v282 = vld [vmem:[%s274] sm:$0xff]
      %v283 = vld [vmem:[%s274 + $0x8] sm:$0xff]
      %v284 = vld [vmem:[%s274 + $0x10] sm:$0xff]
      %v285 = vld [vmem:[%s274 + $0x18] sm:$0xff]
      %v286 = vld [vmem:[%s274 + $0x20] sm:$0xff]
      %v287 = vld [vmem:[%s274 + $0x28] sm:$0xff]
      %v288 = vld [vmem:[%s274 + $0x30] sm:$0xff]
      %v289 = vld [vmem:[%s274 + $0x38] sm:$0xff]
      %v290 = vld [vmem:[%s274 + $0x40] sm:$0xff]
      %v291 = vld [vmem:[%s274 + $0x48] sm:$0xff]
      %v292 = vld [vmem:[%s274 + $0x50] sm:$0xff]
      %v293 = vld [vmem:[%s274 + $0x58] sm:$0xff]
      %v294 = vld [vmem:[%s274 + $0x60] sm:$0xff]
      %v295 = vld [vmem:[%s274 + $0x68] sm:$0xff]
      %v296 = vld [vmem:[%s274 + $0x70] sm:$0xff]
      %v297 = vld [vmem:[%s274 + $0x78] sm:$0xff]
      %v298 = vld [vmem:[%s274 + $0x80] sm:$0xff]
      %v299 = vld [vmem:[%s274 + $0x88] sm:$0xff]
      %v300 = vld [vmem:[%s274 + $0x90] sm:$0xff]
      %v301 = vld [vmem:[%s274 + $0x98] sm:$0xff]
      %v302 = vld [vmem:[%s274 + $0xa0] sm:$0xff]
      %v303 = vld [vmem:[%s274 + $0xa8] sm:$0xff]
      %v304 = vld [vmem:[%s274 + $0xb0] sm:$0xff]
      %v305 = vld [vmem:[%s274 + $0xb8] sm:$0xff]
      %v306 = vld [vmem:[%s274 + $0xc0] sm:$0xff]
      %v307 = vld [vmem:[%s274 + $0xc8] sm:$0xff]
      %v308 = vld [vmem:[%s274 + $0xd0] sm:$0xff]
      %v309 = vld [vmem:[%s274 + $0xd8] sm:$0xff]
      %v310 = vld [vmem:[%s274 + $0xe0] sm:$0xff]
      %v311 = vld [vmem:[%s274 + $0xe8] sm:$0xff]
      %v312 = vld [vmem:[%s274 + $0xf0] sm:$0xff]
      %v313 = vld [vmem:[%s274 + $0xf8] sm:$0xff]
      %v314 = vld [vmem:[%s274 + $0x100] sm:$0xff]
      %v315 = vld [vmem:[%s274 + $0x108] sm:$0xff]
      %v316 = vld [vmem:[%s274 + $0x110] sm:$0xff]
      %v317 = vld [vmem:[%s274 + $0x118] sm:$0xff]
      %v318 = vld [vmem:[%s274 + $0x120] sm:$0xff]
      %v319 = vld [vmem:[%s274 + $0x128] sm:$0xff]
      %v320 = vld [vmem:[%s274 + $0x130] sm:$0xff]
      %v321 = vld [vmem:[%s274 + $0x138] sm:$0xff]
      %v322 = vld [vmem:[%s274 + $0x140] sm:$0xff]
      %v323 = vld [vmem:[%s274 + $0x148] sm:$0xff]
      %v324 = vld [vmem:[%s274 + $0x150] sm:$0xff]
      %v325 = vld [vmem:[%s274 + $0x158] sm:$0xff]
      %v326 = vld [vmem:[%s274 + $0x160] sm:$0xff]
      %v327 = vld [vmem:[%s274 + $0x168] sm:$0xff]
      %v328 = vld [vmem:[%s274 + $0x170] sm:$0xff]
      %v329 = vld [vmem:[%s274 + $0x178] sm:$0xff]
      %v330 = vld [vmem:[%s274 + $0x180] sm:$0xff]
      %v331 = vld [vmem:[%s274 + $0x188] sm:$0xff]
      %v332 = vld [vmem:[%s274 + $0x190] sm:$0xff]
      %v333 = vld [vmem:[%s274 + $0x198] sm:$0xff]
      %v334 = vld [vmem:[%s274 + $0x1a0] sm:$0xff]
      %v335 = vld [vmem:[%s274 + $0x1a8] sm:$0xff]
      %v336 = vld [vmem:[%s274 + $0x1b0] sm:$0xff]
      %v337 = vld [vmem:[%s274 + $0x1b8] sm:$0xff]
      %v338 = vld [vmem:[%s274 + $0x1c0] sm:$0xff]
      %v339 = vld [vmem:[%s274 + $0x1c8] sm:$0xff]
      %v340 = vld [vmem:[%s274 + $0x1d0] sm:$0xff]
      %v341 = vld [vmem:[%s274 + $0x1d8] sm:$0xff]
      %v342 = vld [vmem:[%s274 + $0x1e0] sm:$0xff]
      %v343 = vld [vmem:[%s274 + $0x1e8] sm:$0xff]
      %v344 = vld [vmem:[%s274 + $0x1f0] sm:$0xff]
      %v345 = vld [vmem:[%s274 + $0x1f8] sm:$0xff]
      %v346 = vld [vmem:[%s274 + $0x200] sm:$0xff]
      %v347 = vld [vmem:[%s274 + $0x208] sm:$0xff]
      %v348 = vld [vmem:[%s274 + $0x210] sm:$0xff]
      %v349 = vld [vmem:[%s274 + $0x218] sm:$0xff]
      %v350 = vld [vmem:[%s274 + $0x220] sm:$0xff]
      %v351 = vld [vmem:[%s274 + $0x228] sm:$0xff]
      %v352 = vld [vmem:[%s274 + $0x230] sm:$0xff]
      %v353 = vld [vmem:[%s274 + $0x238] sm:$0xff]
      %v354 = vld [vmem:[%s274 + $0x240] sm:$0xff]
      %v355 = vld [vmem:[%s274 + $0x248] sm:$0xff]
      %v356 = vld [vmem:[%s274 + $0x250] sm:$0xff]
      %v357 = vld [vmem:[%s274 + $0x258] sm:$0xff]
      %v358 = vld [vmem:[%s274 + $0x260] sm:$0xff]
      %v359 = vld [vmem:[%s274 + $0x268] sm:$0xff]
      %v360 = vld [vmem:[%s274 + $0x270] sm:$0xff]
      %v361 = vld [vmem:[%s274 + $0x278] sm:$0xff]
      %v362 = vld [vmem:[%s274 + $0x280] sm:$0xff]
      %v363 = vld [vmem:[%s274 + $0x288] sm:$0xff]
      %v364 = vld [vmem:[%s274 + $0x290] sm:$0xff]
      %v365 = vld [vmem:[%s274 + $0x298] sm:$0xff]
      %v366 = vld [vmem:[%s274 + $0x2a0] sm:$0xff]
      %v367 = vld [vmem:[%s274 + $0x2a8] sm:$0xff]
      %v368 = vld [vmem:[%s274 + $0x2b0] sm:$0xff]
      %v369 = vld [vmem:[%s274 + $0x2b8] sm:$0xff]
      %v370 = vld [vmem:[%s274 + $0x2c0] sm:$0xff]
      %v371 = vld [vmem:[%s274 + $0x2c8] sm:$0xff]
      %v372 = vld [vmem:[%s274 + $0x2d0] sm:$0xff]
      %v373 = vld [vmem:[%s274 + $0x2d8] sm:$0xff]
      %v374 = vld [vmem:[%s274 + $0x2e0] sm:$0xff]
      %v375 = vld [vmem:[%s274 + $0x2e8] sm:$0xff]
      %v376 = vld [vmem:[%s274 + $0x2f0] sm:$0xff]
      %v377 = vld [vmem:[%s274 + $0x2f8] sm:$0xff]
      %v378 = vld [vmem:[%s274 + $0x300] sm:$0xff]
      %v379 = vld [vmem:[%s274 + $0x308] sm:$0xff]
      %v380 = vld [vmem:[%s274 + $0x310] sm:$0xff]
      %v381 = vld [vmem:[%s274 + $0x318] sm:$0xff]
      %v382 = vld [vmem:[%s274 + $0x320] sm:$0xff]
      %v383 = vld [vmem:[%s274 + $0x328] sm:$0xff]
      %v384 = vld [vmem:[%s274 + $0x330] sm:$0xff]
      %v385 = vld [vmem:[%s274 + $0x338] sm:$0xff]
      %v386 = vld [vmem:[%s274 + $0x340] sm:$0xff]
      %v387 = vld [vmem:[%s274 + $0x348] sm:$0xff]
      %v388 = vld [vmem:[%s274 + $0x350] sm:$0xff]
      %v389 = vld [vmem:[%s274 + $0x358] sm:$0xff]
      %v390 = vld [vmem:[%s274 + $0x360] sm:$0xff]
      %v391 = vld [vmem:[%s274 + $0x368] sm:$0xff]
      %v392 = vld [vmem:[%s274 + $0x370] sm:$0xff]
      %v393 = vld [vmem:[%s274 + $0x378] sm:$0xff]
      %v394 = vld [vmem:[%s274 + $0x380] sm:$0xff]
      %v395 = vld [vmem:[%s274 + $0x388] sm:$0xff]
      %v396 = vld [vmem:[%s274 + $0x390] sm:$0xff]
      %v397 = vld [vmem:[%s274 + $0x398] sm:$0xff]
      %v398 = vld [vmem:[%s274 + $0x3a0] sm:$0xff]
      %v399 = vld [vmem:[%s274 + $0x3a8] sm:$0xff]
      %v400 = vld [vmem:[%s274 + $0x3b0] sm:$0xff]
      %v401 = vld [vmem:[%s274 + $0x3b8] sm:$0xff]
      %v402 = vld [vmem:[%s274 + $0x3c0] sm:$0xff]
      %v403 = vld [vmem:[%s274 + $0x3c8] sm:$0xff]
      %v404 = vld [vmem:[%s274 + $0x3d0] sm:$0xff]
      %v405 = vld [vmem:[%s274 + $0x3d8] sm:$0xff]
      %v406 = vld [vmem:[%s274 + $0x3e0] sm:$0xff]
      %v407 = vld [vmem:[%s274 + $0x3e8] sm:$0xff]
      %v408 = vld [vmem:[%s274 + $0x3f0] sm:$0xff]
      %v409 = vld [vmem:[%s274 + $0x3f8] sm:$0xff]
      %v410 = vld [vmem:[%s1] sm:$0xf]
      %v411 = vld [vmem:[%s4] sm:$0x1]
      %v413 = vlaneseq
      %v414 = vshrl.u32 %v413, 7
      %v415 = vsub.s32 0, %v414
      %v416 = vrot.slane %v411, %v415
      %vm418 = vcmask 31744
      %v420 = vsel %vm418, %v282, 0
      %v423 = vsel %vm418, %v283, 0
      %v426 = vsel %vm418, %v284, 0
      %v429 = vsel %vm418, %v285, 0
      %v432 = vsel %vm418, %v286, 0
      %v435 = vsel %vm418, %v287, 0
      %v438 = vsel %vm418, %v288, 0
      %v441 = vsel %vm418, %v289, 0
      %v444 = vsel %vm418, %v290, 0
      %v447 = vsel %vm418, %v291, 0
      %v450 = vsel %vm418, %v292, 0
      %v453 = vsel %vm418, %v293, 0
      %v456 = vsel %vm418, %v294, 0
      %v459 = vsel %vm418, %v295, 0
      %v462 = vsel %vm418, %v296, 0
      %v465 = vsel %vm418, %v297, 0
      %v468 = vsel %vm418, %v298, 0
      %v471 = vsel %vm418, %v299, 0
      %v474 = vsel %vm418, %v300, 0
      %v477 = vsel %vm418, %v301, 0
      %v480 = vsel %vm418, %v302, 0
      %v483 = vsel %vm418, %v303, 0
      %v486 = vsel %vm418, %v304, 0
      %v489 = vsel %vm418, %v305, 0
      %v492 = vsel %vm418, %v306, 0
      %v495 = vsel %vm418, %v307, 0
      %v498 = vsel %vm418, %v308, 0
      %v501 = vsel %vm418, %v309, 0
      %v504 = vsel %vm418, %v310, 0
      %v507 = vsel %vm418, %v311, 0
      %v510 = vsel %vm418, %v312, 0
      %v513 = vsel %vm418, %v313, 0
      %v516 = vsel %vm418, %v314, 0
      %v519 = vsel %vm418, %v315, 0
      %v522 = vsel %vm418, %v316, 0
      %v525 = vsel %vm418, %v317, 0
      %v528 = vsel %vm418, %v318, 0
      %v531 = vsel %vm418, %v319, 0
      %v534 = vsel %vm418, %v320, 0
      %v537 = vsel %vm418, %v321, 0
      %v540 = vsel %vm418, %v322, 0
      %v543 = vsel %vm418, %v323, 0
      %v546 = vsel %vm418, %v324, 0
      %v549 = vsel %vm418, %v325, 0
      %v552 = vsel %vm418, %v326, 0
      %v555 = vsel %vm418, %v327, 0
      %v558 = vsel %vm418, %v328, 0
      %v561 = vsel %vm418, %v329, 0
      %v564 = vsel %vm418, %v330, 0
      %v567 = vsel %vm418, %v331, 0
      %v570 = vsel %vm418, %v332, 0
      %v573 = vsel %vm418, %v333, 0
      %v576 = vsel %vm418, %v334, 0
      %v579 = vsel %vm418, %v335, 0
      %v582 = vsel %vm418, %v336, 0
      %v585 = vsel %vm418, %v337, 0
      %v588 = vsel %vm418, %v338, 0
      %v591 = vsel %vm418, %v339, 0
      %v594 = vsel %vm418, %v340, 0
      %v597 = vsel %vm418, %v341, 0
      %v600 = vsel %vm418, %v342, 0
      %v603 = vsel %vm418, %v343, 0
      %v606 = vsel %vm418, %v344, 0
      %v609 = vsel %vm418, %v345, 0
      %v612 = vsel %vm418, %v346, 0
      %v615 = vsel %vm418, %v347, 0
      %v618 = vsel %vm418, %v348, 0
      %v621 = vsel %vm418, %v349, 0
      %v624 = vsel %vm418, %v350, 0
      %v627 = vsel %vm418, %v351, 0
      %v630 = vsel %vm418, %v352, 0
      %v633 = vsel %vm418, %v353, 0
      %v636 = vsel %vm418, %v354, 0
      %v639 = vsel %vm418, %v355, 0
      %v642 = vsel %vm418, %v356, 0
      %v645 = vsel %vm418, %v357, 0
      %v648 = vsel %vm418, %v358, 0
      %v651 = vsel %vm418, %v359, 0
      %v654 = vsel %vm418, %v360, 0
      %v657 = vsel %vm418, %v361, 0
      %v660 = vsel %vm418, %v362, 0
      %v663 = vsel %vm418, %v363, 0
      %v666 = vsel %vm418, %v364, 0
      %v669 = vsel %vm418, %v365, 0
      %v672 = vsel %vm418, %v366, 0
      %v675 = vsel %vm418, %v367, 0
      %v678 = vsel %vm418, %v368, 0
      %v681 = vsel %vm418, %v369, 0
      %v684 = vsel %vm418, %v370, 0
      %v687 = vsel %vm418, %v371, 0
      %v690 = vsel %vm418, %v372, 0
      %v693 = vsel %vm418, %v373, 0
      %v696 = vsel %vm418, %v374, 0
      %v699 = vsel %vm418, %v375, 0
      %v702 = vsel %vm418, %v376, 0
      %v705 = vsel %vm418, %v377, 0
      %v708 = vsel %vm418, %v378, 0
      %v711 = vsel %vm418, %v379, 0
      %v714 = vsel %vm418, %v380, 0
      %v717 = vsel %vm418, %v381, 0
      %v720 = vsel %vm418, %v382, 0
      %v723 = vsel %vm418, %v383, 0
      %v726 = vsel %vm418, %v384, 0
      %v729 = vsel %vm418, %v385, 0
      %v732 = vsel %vm418, %v386, 0
      %v735 = vsel %vm418, %v387, 0
      %v738 = vsel %vm418, %v388, 0
      %v741 = vsel %vm418, %v389, 0
      %v744 = vsel %vm418, %v390, 0
      %v747 = vsel %vm418, %v391, 0
      %v750 = vsel %vm418, %v392, 0
      %v753 = vsel %vm418, %v393, 0
      %v756 = vsel %vm418, %v394, 0
      %v759 = vsel %vm418, %v395, 0
      %v762 = vsel %vm418, %v396, 0
      %v765 = vsel %vm418, %v397, 0
      %v768 = vsel %vm418, %v398, 0
      %v771 = vsel %vm418, %v399, 0
      %v774 = vsel %vm418, %v400, 0
      %v777 = vsel %vm418, %v401, 0
      %v780 = vsel %vm418, %v402, 0
      %v783 = vsel %vm418, %v403, 0
      %v786 = vsel %vm418, %v404, 0
      %v789 = vsel %vm418, %v405, 0
      %v792 = vsel %vm418, %v406, 0
      %v795 = vsel %vm418, %v407, 0
      %v798 = vsel %vm418, %v408, 0
      %v801 = vsel %vm418, %v409, 0
      %vm803 = vcmask 1043456
      %v805 = vsel %vm803, %v410, 0
      %807 = vmatprep.subr.mxu0 0.0
      %808 = vmatpush1.msra.mxu0 0.0
      %809 = vmatprep.subr.mxu0 0.0
      %810 = vmatpush1.msra.mxu0 0.0
      %811 = vmatprep.subr.mxu0 0.0
      %812 = vmatpush1.msra.mxu0 0.0
      %813 = vmatprep.subr.mxu0 0.0
      %814 = vmatpush1.msra.mxu0 0.0
      %815 = vmatprep.subr.mxu0 0.0
      %816 = vmatpush1.msra.mxu0 0.0
      %817 = vmatprep.subr.mxu0 0.0
      %818 = vmatpush1.msra.mxu0 0.0
      %819 = vmatprep.subr.mxu0 0.0
      %820 = vmatpush1.msra.mxu0 0.0
      %821 = vmatprep.subr.mxu0 0.0
      %822 = vmatpush1.msra.mxu0 0.0
      %823 = vmatprep.subr.mxu0 0.0
      %824 = vmatpush1.msra.mxu0 0.0
      %825 = vmatprep.subr.mxu0 0.0
      %826 = vmatpush1.msra.mxu0 0.0
      %827 = vmatprep.subr.mxu0 0.0
      %828 = vmatpush1.msra.mxu0 0.0
      %829 = vmatprep.subr.mxu0 0.0
      %830 = vmatpush1.msra.mxu0 0.0
      %831 = vmatprep.subr.mxu0 0.0
      %832 = vmatpush1.msra.mxu0 0.0
      %833 = vmatprep.subr.mxu0 0.0
      %834 = vmatpush1.msra.mxu0 0.0
      %835 = vmatprep.subr.mxu0 0.0
      %836 = vmatpush1.msra.mxu0 0.0
      %837 = vmatprep.subr.mxu0 0.0
      %838 = vmatpush1.msra.mxu0 %v805
      %839 = vmatprep.subr.mxu0 0.0
      %840 = vmatpush2.msra.mxu0 0.0
      %841 = vmatprep.subr.mxu0 0.0
      %842 = vmatpush2.msra.mxu0 0.0
      %843 = vmatprep.subr.mxu0 0.0
      %844 = vmatpush2.msra.mxu0 0.0
      %845 = vmatprep.subr.mxu0 0.0
      %846 = vmatpush2.msra.mxu0 0.0
      %847 = vmatprep.subr.mxu0 0.0
      %848 = vmatpush2.msra.mxu0 0.0
      %849 = vmatprep.subr.mxu0 0.0
      %850 = vmatpush2.msra.mxu0 0.0
      %851 = vmatprep.subr.mxu0 0.0
      %852 = vmatpush2.msra.mxu0 0.0
      %853 = vmatprep.subr.mxu0 0.0
      %854 = vmatpush2.msra.mxu0 0.0
      %855 = vmatprep.subr.mxu0 0.0
      %856 = vmatpush2.msra.mxu0 0.0
      %857 = vmatprep.subr.mxu0 0.0
      %858 = vmatpush2.msra.mxu0 0.0
      %859 = vmatprep.subr.mxu0 0.0
      %860 = vmatpush2.msra.mxu0 0.0
      %861 = vmatprep.subr.mxu0 0.0
      %862 = vmatpush2.msra.mxu0 0.0
      %863 = vmatprep.subr.mxu0 0.0
      %864 = vmatpush2.msra.mxu0 0.0
      %865 = vmatprep.subr.mxu0 0.0
      %866 = vmatpush2.msra.mxu0 0.0
      %867 = vmatprep.subr.mxu0 0.0
      %868 = vmatpush2.msra.mxu0 0.0
      %869 = vmatprep.subr.mxu0 0.0
      %870 = vmatpush2.msra.mxu0 0.0
      %871 = vmatprep.mubr.f32.mxu0 0.0
      %872 = vmatmul.mubr.f32.gmra.mxu0 %v420
      %v873 = vpop.f32.mrf.mxu0
      %v874 = vadd.f32 %v416, %v873
      %v875 = vpop.f32.mrf.mxu0
      %876 = vmatprep.mubr.f32.mxu0 0.0
      %877 = vmatmul.mubr.f32.gmra.mxu0 %v423
      %v878 = vpop.f32.mrf.mxu0
      %v879 = vadd.f32 %v416, %v878
      %v880 = vpop.f32.mrf.mxu0
      %881 = vmatprep.mubr.f32.mxu0 0.0
      %882 = vmatmul.mubr.f32.gmra.mxu0 %v426
      %v883 = vpop.f32.mrf.mxu0
      %v884 = vadd.f32 %v416, %v883
      %v885 = vpop.f32.mrf.mxu0
      %886 = vmatprep.mubr.f32.mxu0 0.0
      %887 = vmatmul.mubr.f32.gmra.mxu0 %v429
      %v888 = vpop.f32.mrf.mxu0
      %v889 = vadd.f32 %v416, %v888
      %v890 = vpop.f32.mrf.mxu0
      %891 = vmatprep.mubr.f32.mxu0 0.0
      %892 = vmatmul.mubr.f32.gmra.mxu0 %v432
      %v893 = vpop.f32.mrf.mxu0
      %v894 = vadd.f32 %v416, %v893
      %v895 = vpop.f32.mrf.mxu0
      %896 = vmatprep.mubr.f32.mxu0 0.0
      %897 = vmatmul.mubr.f32.gmra.mxu0 %v435
      %v898 = vpop.f32.mrf.mxu0
      %v899 = vadd.f32 %v416, %v898
      %v900 = vpop.f32.mrf.mxu0
      %901 = vmatprep.mubr.f32.mxu0 0.0
      %902 = vmatmul.mubr.f32.gmra.mxu0 %v438
      %v903 = vpop.f32.mrf.mxu0
      %v904 = vadd.f32 %v416, %v903
      %v905 = vpop.f32.mrf.mxu0
      %906 = vmatprep.mubr.f32.mxu0 0.0
      %907 = vmatmul.mubr.f32.gmra.mxu0 %v441
      %v908 = vpop.f32.mrf.mxu0
      %v909 = vadd.f32 %v416, %v908
      %v910 = vpop.f32.mrf.mxu0
      %911 = vmatprep.mubr.f32.mxu0 0.0
      %912 = vmatmul.mubr.f32.gmra.mxu0 %v444
      %v913 = vpop.f32.mrf.mxu0
      %v914 = vadd.f32 %v416, %v913
      %v915 = vpop.f32.mrf.mxu0
      %916 = vmatprep.mubr.f32.mxu0 0.0
      %917 = vmatmul.mubr.f32.gmra.mxu0 %v447
      %v918 = vpop.f32.mrf.mxu0
      %v919 = vadd.f32 %v416, %v918
      %v920 = vpop.f32.mrf.mxu0
      %921 = vmatprep.mubr.f32.mxu0 0.0
      %922 = vmatmul.mubr.f32.gmra.mxu0 %v450
      %v923 = vpop.f32.mrf.mxu0
      %v924 = vadd.f32 %v416, %v923
      %v925 = vpop.f32.mrf.mxu0
      %926 = vmatprep.mubr.f32.mxu0 0.0
      %927 = vmatmul.mubr.f32.gmra.mxu0 %v453
      %v928 = vpop.f32.mrf.mxu0
      %v929 = vadd.f32 %v416, %v928
      %v930 = vpop.f32.mrf.mxu0
      %931 = vmatprep.mubr.f32.mxu0 0.0
      %932 = vmatmul.mubr.f32.gmra.mxu0 %v456
      %v933 = vpop.f32.mrf.mxu0
      %v934 = vadd.f32 %v416, %v933
      %v935 = vpop.f32.mrf.mxu0
      %936 = vmatprep.mubr.f32.mxu0 0.0
      %937 = vmatmul.mubr.f32.gmra.mxu0 %v459
      %v938 = vpop.f32.mrf.mxu0
      %v939 = vadd.f32 %v416, %v938
      %v940 = vpop.f32.mrf.mxu0
      %941 = vmatprep.mubr.f32.mxu0 0.0
      %942 = vmatmul.mubr.f32.gmra.mxu0 %v462
      %v943 = vpop.f32.mrf.mxu0
      %v944 = vadd.f32 %v416, %v943
      %v945 = vpop.f32.mrf.mxu0
      %946 = vmatprep.mubr.f32.mxu0 0.0
      %947 = vmatmul.mubr.f32.gmra.mxu0 %v465
      %v948 = vpop.f32.mrf.mxu0
      %v949 = vadd.f32 %v416, %v948
      %v950 = vpop.f32.mrf.mxu0
      %951 = vmatprep.mubr.f32.mxu0 0.0
      %952 = vmatmul.mubr.f32.gmra.mxu0 %v468
      %v953 = vpop.f32.mrf.mxu0
      %v954 = vadd.f32 %v416, %v953
      %v955 = vpop.f32.mrf.mxu0
      %956 = vmatprep.mubr.f32.mxu0 0.0
      %957 = vmatmul.mubr.f32.gmra.mxu0 %v471
      %v958 = vpop.f32.mrf.mxu0
      %v959 = vadd.f32 %v416, %v958
      %v960 = vpop.f32.mrf.mxu0
      %961 = vmatprep.mubr.f32.mxu0 0.0
      %962 = vmatmul.mubr.f32.gmra.mxu0 %v474
      %v963 = vpop.f32.mrf.mxu0
      %v964 = vadd.f32 %v416, %v963
      %v965 = vpop.f32.mrf.mxu0
      %966 = vmatprep.mubr.f32.mxu0 0.0
      %967 = vmatmul.mubr.f32.gmra.mxu0 %v477
      %v968 = vpop.f32.mrf.mxu0
      %v969 = vadd.f32 %v416, %v968
      %v970 = vpop.f32.mrf.mxu0
      %971 = vmatprep.mubr.f32.mxu0 0.0
      %972 = vmatmul.mubr.f32.gmra.mxu0 %v480
      %v973 = vpop.f32.mrf.mxu0
      %v974 = vadd.f32 %v416, %v973
      %v975 = vpop.f32.mrf.mxu0
      %976 = vmatprep.mubr.f32.mxu0 0.0
      %977 = vmatmul.mubr.f32.gmra.mxu0 %v483
      %v978 = vpop.f32.mrf.mxu0
      %v979 = vadd.f32 %v416, %v978
      %v980 = vpop.f32.mrf.mxu0
      %981 = vmatprep.mubr.f32.mxu0 0.0
      %982 = vmatmul.mubr.f32.gmra.mxu0 %v486
      %v983 = vpop.f32.mrf.mxu0
      %v984 = vadd.f32 %v416, %v983
      %v985 = vpop.f32.mrf.mxu0
      %986 = vmatprep.mubr.f32.mxu0 0.0
      %987 = vmatmul.mubr.f32.gmra.mxu0 %v489
      %v988 = vpop.f32.mrf.mxu0
      %v989 = vadd.f32 %v416, %v988
      %v990 = vpop.f32.mrf.mxu0
      %991 = vmatprep.mubr.f32.mxu0 0.0
      %992 = vmatmul.mubr.f32.gmra.mxu0 %v492
      %v993 = vpop.f32.mrf.mxu0
      %v994 = vadd.f32 %v416, %v993
      %v995 = vpop.f32.mrf.mxu0
      %996 = vmatprep.mubr.f32.mxu0 0.0
      %997 = vmatmul.mubr.f32.gmra.mxu0 %v495
      %v998 = vpop.f32.mrf.mxu0
      %v999 = vadd.f32 %v416, %v998
      %v1000 = vpop.f32.mrf.mxu0
      %1001 = vmatprep.mubr.f32.mxu0 0.0
      %1002 = vmatmul.mubr.f32.gmra.mxu0 %v498
      %v1003 = vpop.f32.mrf.mxu0
      %v1004 = vadd.f32 %v416, %v1003
      %v1005 = vpop.f32.mrf.mxu0
      %1006 = vmatprep.mubr.f32.mxu0 0.0
      %1007 = vmatmul.mubr.f32.gmra.mxu0 %v501
      %v1008 = vpop.f32.mrf.mxu0
      %v1009 = vadd.f32 %v416, %v1008
      %v1010 = vpop.f32.mrf.mxu0
      %1011 = vmatprep.mubr.f32.mxu0 0.0
      %1012 = vmatmul.mubr.f32.gmra.mxu0 %v504
      %v1013 = vpop.f32.mrf.mxu0
      %v1014 = vadd.f32 %v416, %v1013
      %v1015 = vpop.f32.mrf.mxu0
      %1016 = vmatprep.mubr.f32.mxu0 0.0
      %1017 = vmatmul.mubr.f32.gmra.mxu0 %v507
      %v1018 = vpop.f32.mrf.mxu0
      %v1019 = vadd.f32 %v416, %v1018
      %v1020 = vpop.f32.mrf.mxu0
      %1021 = vmatprep.mubr.f32.mxu0 0.0
      %1022 = vmatmul.mubr.f32.gmra.mxu0 %v510
      %v1023 = vpop.f32.mrf.mxu0
      %v1024 = vadd.f32 %v416, %v1023
      %v1025 = vpop.f32.mrf.mxu0
      %1026 = vmatprep.mubr.f32.mxu0 0.0
      %1027 = vmatmul.mubr.f32.gmra.mxu0 %v513
      %v1028 = vpop.f32.mrf.mxu0
      %v1029 = vadd.f32 %v416, %v1028
      %v1030 = vpop.f32.mrf.mxu0
      %1031 = vmatprep.mubr.f32.mxu0 0.0
      %1032 = vmatmul.mubr.f32.gmra.mxu0 %v516
      %v1033 = vpop.f32.mrf.mxu0
      %v1034 = vadd.f32 %v416, %v1033
      %v1035 = vpop.f32.mrf.mxu0
      %1036 = vmatprep.mubr.f32.mxu0 0.0
      %1037 = vmatmul.mubr.f32.gmra.mxu0 %v519
      %v1038 = vpop.f32.mrf.mxu0
      %v1039 = vadd.f32 %v416, %v1038
      %v1040 = vpop.f32.mrf.mxu0
      %1041 = vmatprep.mubr.f32.mxu0 0.0
      %1042 = vmatmul.mubr.f32.gmra.mxu0 %v522
      %v1043 = vpop.f32.mrf.mxu0
      %v1044 = vadd.f32 %v416, %v1043
      %v1045 = vpop.f32.mrf.mxu0
      %1046 = vmatprep.mubr.f32.mxu0 0.0
      %1047 = vmatmul.mubr.f32.gmra.mxu0 %v525
      %v1048 = vpop.f32.mrf.mxu0
      %v1049 = vadd.f32 %v416, %v1048
      %v1050 = vpop.f32.mrf.mxu0
      %1051 = vmatprep.mubr.f32.mxu0 0.0
      %1052 = vmatmul.mubr.f32.gmra.mxu0 %v528
      %v1053 = vpop.f32.mrf.mxu0
      %v1054 = vadd.f32 %v416, %v1053
      %v1055 = vpop.f32.mrf.mxu0
      %1056 = vmatprep.mubr.f32.mxu0 0.0
      %1057 = vmatmul.mubr.f32.gmra.mxu0 %v531
      %v1058 = vpop.f32.mrf.mxu0
      %v1059 = vadd.f32 %v416, %v1058
      %v1060 = vpop.f32.mrf.mxu0
      %1061 = vmatprep.mubr.f32.mxu0 0.0
      %1062 = vmatmul.mubr.f32.gmra.mxu0 %v534
      %v1063 = vpop.f32.mrf.mxu0
      %v1064 = vadd.f32 %v416, %v1063
      %v1065 = vpop.f32.mrf.mxu0
      %1066 = vmatprep.mubr.f32.mxu0 0.0
      %1067 = vmatmul.mubr.f32.gmra.mxu0 %v537
      %v1068 = vpop.f32.mrf.mxu0
      %v1069 = vadd.f32 %v416, %v1068
      %v1070 = vpop.f32.mrf.mxu0
      %1071 = vmatprep.mubr.f32.mxu0 0.0
      %1072 = vmatmul.mubr.f32.gmra.mxu0 %v540
      %v1073 = vpop.f32.mrf.mxu0
      %v1074 = vadd.f32 %v416, %v1073
      %v1075 = vpop.f32.mrf.mxu0
      %1076 = vmatprep.mubr.f32.mxu0 0.0
      %1077 = vmatmul.mubr.f32.gmra.mxu0 %v543
      %v1078 = vpop.f32.mrf.mxu0
      %v1079 = vadd.f32 %v416, %v1078
      %v1080 = vpop.f32.mrf.mxu0
      %1081 = vmatprep.mubr.f32.mxu0 0.0
      %1082 = vmatmul.mubr.f32.gmra.mxu0 %v546
      %v1083 = vpop.f32.mrf.mxu0
      %v1084 = vadd.f32 %v416, %v1083
      %v1085 = vpop.f32.mrf.mxu0
      %1086 = vmatprep.mubr.f32.mxu0 0.0
      %1087 = vmatmul.mubr.f32.gmra.mxu0 %v549
      %v1088 = vpop.f32.mrf.mxu0
      %v1089 = vadd.f32 %v416, %v1088
      %v1090 = vpop.f32.mrf.mxu0
      %1091 = vmatprep.mubr.f32.mxu0 0.0
      %1092 = vmatmul.mubr.f32.gmra.mxu0 %v552
      %v1093 = vpop.f32.mrf.mxu0
      %v1094 = vadd.f32 %v416, %v1093
      %v1095 = vpop.f32.mrf.mxu0
      %1096 = vmatprep.mubr.f32.mxu0 0.0
      %1097 = vmatmul.mubr.f32.gmra.mxu0 %v555
      %v1098 = vpop.f32.mrf.mxu0
      %v1099 = vadd.f32 %v416, %v1098
      %v1100 = vpop.f32.mrf.mxu0
      %1101 = vmatprep.mubr.f32.mxu0 0.0
      %1102 = vmatmul.mubr.f32.gmra.mxu0 %v558
      %v1103 = vpop.f32.mrf.mxu0
      %v1104 = vadd.f32 %v416, %v1103
      %v1105 = vpop.f32.mrf.mxu0
      %1106 = vmatprep.mubr.f32.mxu0 0.0
      %1107 = vmatmul.mubr.f32.gmra.mxu0 %v561
      %v1108 = vpop.f32.mrf.mxu0
      %v1109 = vadd.f32 %v416, %v1108
      %v1110 = vpop.f32.mrf.mxu0
      %1111 = vmatprep.mubr.f32.mxu0 0.0
      %1112 = vmatmul.mubr.f32.gmra.mxu0 %v564
      %v1113 = vpop.f32.mrf.mxu0
      %v1114 = vadd.f32 %v416, %v1113
      %v1115 = vpop.f32.mrf.mxu0
      %1116 = vmatprep.mubr.f32.mxu0 0.0
      %1117 = vmatmul.mubr.f32.gmra.mxu0 %v567
      %v1118 = vpop.f32.mrf.mxu0
      %v1119 = vadd.f32 %v416, %v1118
      %v1120 = vpop.f32.mrf.mxu0
      %1121 = vmatprep.mubr.f32.mxu0 0.0
      %1122 = vmatmul.mubr.f32.gmra.mxu0 %v570
      %v1123 = vpop.f32.mrf.mxu0
      %v1124 = vadd.f32 %v416, %v1123
      %v1125 = vpop.f32.mrf.mxu0
      %1126 = vmatprep.mubr.f32.mxu0 0.0
      %1127 = vmatmul.mubr.f32.gmra.mxu0 %v573
      %v1128 = vpop.f32.mrf.mxu0
      %v1129 = vadd.f32 %v416, %v1128
      %v1130 = vpop.f32.mrf.mxu0
      %1131 = vmatprep.mubr.f32.mxu0 0.0
      %1132 = vmatmul.mubr.f32.gmra.mxu0 %v576
      %v1133 = vpop.f32.mrf.mxu0
      %v1134 = vadd.f32 %v416, %v1133
      %v1135 = vpop.f32.mrf.mxu0
      %1136 = vmatprep.mubr.f32.mxu0 0.0
      %1137 = vmatmul.mubr.f32.gmra.mxu0 %v579
      %v1138 = vpop.f32.mrf.mxu0
      %v1139 = vadd.f32 %v416, %v1138
      %v1140 = vpop.f32.mrf.mxu0
      %1141 = vmatprep.mubr.f32.mxu0 0.0
      %1142 = vmatmul.mubr.f32.gmra.mxu0 %v582
      %v1143 = vpop.f32.mrf.mxu0
      %v1144 = vadd.f32 %v416, %v1143
      %v1145 = vpop.f32.mrf.mxu0
      %1146 = vmatprep.mubr.f32.mxu0 0.0
      %1147 = vmatmul.mubr.f32.gmra.mxu0 %v585
      %v1148 = vpop.f32.mrf.mxu0
      %v1149 = vadd.f32 %v416, %v1148
      %v1150 = vpop.f32.mrf.mxu0
      %1151 = vmatprep.mubr.f32.mxu0 0.0
      %1152 = vmatmul.mubr.f32.gmra.mxu0 %v588
      %v1153 = vpop.f32.mrf.mxu0
      %v1154 = vadd.f32 %v416, %v1153
      %v1155 = vpop.f32.mrf.mxu0
      %1156 = vmatprep.mubr.f32.mxu0 0.0
      %1157 = vmatmul.mubr.f32.gmra.mxu0 %v591
      %v1158 = vpop.f32.mrf.mxu0
      %v1159 = vadd.f32 %v416, %v1158
      %v1160 = vpop.f32.mrf.mxu0
      %1161 = vmatprep.mubr.f32.mxu0 0.0
      %1162 = vmatmul.mubr.f32.gmra.mxu0 %v594
      %v1163 = vpop.f32.mrf.mxu0
      %v1164 = vadd.f32 %v416, %v1163
      %v1165 = vpop.f32.mrf.mxu0
      %1166 = vmatprep.mubr.f32.mxu0 0.0
      %1167 = vmatmul.mubr.f32.gmra.mxu0 %v597
      %v1168 = vpop.f32.mrf.mxu0
      %v1169 = vadd.f32 %v416, %v1168
      %v1170 = vpop.f32.mrf.mxu0
      %1171 = vmatprep.mubr.f32.mxu0 0.0
      %1172 = vmatmul.mubr.f32.gmra.mxu0 %v600
      %v1173 = vpop.f32.mrf.mxu0
      %v1174 = vadd.f32 %v416, %v1173
      %v1175 = vpop.f32.mrf.mxu0
      %1176 = vmatprep.mubr.f32.mxu0 0.0
      %1177 = vmatmul.mubr.f32.gmra.mxu0 %v603
      %v1178 = vpop.f32.mrf.mxu0
      %v1179 = vadd.f32 %v416, %v1178
      %v1180 = vpop.f32.mrf.mxu0
      %1181 = vmatprep.mubr.f32.mxu0 0.0
      %1182 = vmatmul.mubr.f32.gmra.mxu0 %v606
      %v1183 = vpop.f32.mrf.mxu0
      %v1184 = vadd.f32 %v416, %v1183
      %v1185 = vpop.f32.mrf.mxu0
      %1186 = vmatprep.mubr.f32.mxu0 0.0
      %1187 = vmatmul.mubr.f32.gmra.mxu0 %v609
      %v1188 = vpop.f32.mrf.mxu0
      %v1189 = vadd.f32 %v416, %v1188
      %v1190 = vpop.f32.mrf.mxu0
      %1191 = vmatprep.mubr.f32.mxu0 0.0
      %1192 = vmatmul.mubr.f32.gmra.mxu0 %v612
      %v1193 = vpop.f32.mrf.mxu0
      %v1194 = vadd.f32 %v416, %v1193
      %v1195 = vpop.f32.mrf.mxu0
      %1196 = vmatprep.mubr.f32.mxu0 0.0
      %1197 = vmatmul.mubr.f32.gmra.mxu0 %v615
      %v1198 = vpop.f32.mrf.mxu0
      %v1199 = vadd.f32 %v416, %v1198
      %v1200 = vpop.f32.mrf.mxu0
      %1201 = vmatprep.mubr.f32.mxu0 0.0
      %1202 = vmatmul.mubr.f32.gmra.mxu0 %v618
      %v1203 = vpop.f32.mrf.mxu0
      %v1204 = vadd.f32 %v416, %v1203
      %v1205 = vpop.f32.mrf.mxu0
      %1206 = vmatprep.mubr.f32.mxu0 0.0
      %1207 = vmatmul.mubr.f32.gmra.mxu0 %v621
      %v1208 = vpop.f32.mrf.mxu0
      %v1209 = vadd.f32 %v416, %v1208
      %v1210 = vpop.f32.mrf.mxu0
      %1211 = vmatprep.mubr.f32.mxu0 0.0
      %1212 = vmatmul.mubr.f32.gmra.mxu0 %v624
      %v1213 = vpop.f32.mrf.mxu0
      %v1214 = vadd.f32 %v416, %v1213
      %v1215 = vpop.f32.mrf.mxu0
      %1216 = vmatprep.mubr.f32.mxu0 0.0
      %1217 = vmatmul.mubr.f32.gmra.mxu0 %v627
      %v1218 = vpop.f32.mrf.mxu0
      %v1219 = vadd.f32 %v416, %v1218
      %v1220 = vpop.f32.mrf.mxu0
      %1221 = vmatprep.mubr.f32.mxu0 0.0
      %1222 = vmatmul.mubr.f32.gmra.mxu0 %v630
      %v1223 = vpop.f32.mrf.mxu0
      %v1224 = vadd.f32 %v416, %v1223
      %v1225 = vpop.f32.mrf.mxu0
      %1226 = vmatprep.mubr.f32.mxu0 0.0
      %1227 = vmatmul.mubr.f32.gmra.mxu0 %v633
      %v1228 = vpop.f32.mrf.mxu0
      %v1229 = vadd.f32 %v416, %v1228
      %v1230 = vpop.f32.mrf.mxu0
      %1231 = vmatprep.mubr.f32.mxu0 0.0
      %1232 = vmatmul.mubr.f32.gmra.mxu0 %v636
      %v1233 = vpop.f32.mrf.mxu0
      %v1234 = vadd.f32 %v416, %v1233
      %v1235 = vpop.f32.mrf.mxu0
      %1236 = vmatprep.mubr.f32.mxu0 0.0
      %1237 = vmatmul.mubr.f32.gmra.mxu0 %v639
      %v1238 = vpop.f32.mrf.mxu0
      %v1239 = vadd.f32 %v416, %v1238
      %v1240 = vpop.f32.mrf.mxu0
      %1241 = vmatprep.mubr.f32.mxu0 0.0
      %1242 = vmatmul.mubr.f32.gmra.mxu0 %v642
      %v1243 = vpop.f32.mrf.mxu0
      %v1244 = vadd.f32 %v416, %v1243
      %v1245 = vpop.f32.mrf.mxu0
      %1246 = vmatprep.mubr.f32.mxu0 0.0
      %1247 = vmatmul.mubr.f32.gmra.mxu0 %v645
      %v1248 = vpop.f32.mrf.mxu0
      %v1249 = vadd.f32 %v416, %v1248
      %v1250 = vpop.f32.mrf.mxu0
      %1251 = vmatprep.mubr.f32.mxu0 0.0
      %1252 = vmatmul.mubr.f32.gmra.mxu0 %v648
      %v1253 = vpop.f32.mrf.mxu0
      %v1254 = vadd.f32 %v416, %v1253
      %v1255 = vpop.f32.mrf.mxu0
      %1256 = vmatprep.mubr.f32.mxu0 0.0
      %1257 = vmatmul.mubr.f32.gmra.mxu0 %v651
      %v1258 = vpop.f32.mrf.mxu0
      %v1259 = vadd.f32 %v416, %v1258
      %v1260 = vpop.f32.mrf.mxu0
      %1261 = vmatprep.mubr.f32.mxu0 0.0
      %1262 = vmatmul.mubr.f32.gmra.mxu0 %v654
      %v1263 = vpop.f32.mrf.mxu0
      %v1264 = vadd.f32 %v416, %v1263
      %v1265 = vpop.f32.mrf.mxu0
      %1266 = vmatprep.mubr.f32.mxu0 0.0
      %1267 = vmatmul.mubr.f32.gmra.mxu0 %v657
      %v1268 = vpop.f32.mrf.mxu0
      %v1269 = vadd.f32 %v416, %v1268
      %v1270 = vpop.f32.mrf.mxu0
      %1271 = vmatprep.mubr.f32.mxu0 0.0
      %1272 = vmatmul.mubr.f32.gmra.mxu0 %v660
      %v1273 = vpop.f32.mrf.mxu0
      %v1274 = vadd.f32 %v416, %v1273
      %v1275 = vpop.f32.mrf.mxu0
      %1276 = vmatprep.mubr.f32.mxu0 0.0
      %1277 = vmatmul.mubr.f32.gmra.mxu0 %v663
      %v1278 = vpop.f32.mrf.mxu0
      %v1279 = vadd.f32 %v416, %v1278
      %v1280 = vpop.f32.mrf.mxu0
      %1281 = vmatprep.mubr.f32.mxu0 0.0
      %1282 = vmatmul.mubr.f32.gmra.mxu0 %v666
      %v1283 = vpop.f32.mrf.mxu0
      %v1284 = vadd.f32 %v416, %v1283
      %v1285 = vpop.f32.mrf.mxu0
      %1286 = vmatprep.mubr.f32.mxu0 0.0
      %1287 = vmatmul.mubr.f32.gmra.mxu0 %v669
      %v1288 = vpop.f32.mrf.mxu0
      %v1289 = vadd.f32 %v416, %v1288
      %v1290 = vpop.f32.mrf.mxu0
      %1291 = vmatprep.mubr.f32.mxu0 0.0
      %1292 = vmatmul.mubr.f32.gmra.mxu0 %v672
      %v1293 = vpop.f32.mrf.mxu0
      %v1294 = vadd.f32 %v416, %v1293
      %v1295 = vpop.f32.mrf.mxu0
      %1296 = vmatprep.mubr.f32.mxu0 0.0
      %1297 = vmatmul.mubr.f32.gmra.mxu0 %v675
      %v1298 = vpop.f32.mrf.mxu0
      %v1299 = vadd.f32 %v416, %v1298
      %v1300 = vpop.f32.mrf.mxu0
      %1301 = vmatprep.mubr.f32.mxu0 0.0
      %1302 = vmatmul.mubr.f32.gmra.mxu0 %v678
      %v1303 = vpop.f32.mrf.mxu0
      %v1304 = vadd.f32 %v416, %v1303
      %v1305 = vpop.f32.mrf.mxu0
      %1306 = vmatprep.mubr.f32.mxu0 0.0
      %1307 = vmatmul.mubr.f32.gmra.mxu0 %v681
      %v1308 = vpop.f32.mrf.mxu0
      %v1309 = vadd.f32 %v416, %v1308
      %v1310 = vpop.f32.mrf.mxu0
      %1311 = vmatprep.mubr.f32.mxu0 0.0
      %1312 = vmatmul.mubr.f32.gmra.mxu0 %v684
      %v1313 = vpop.f32.mrf.mxu0
      %v1314 = vadd.f32 %v416, %v1313
      %v1315 = vpop.f32.mrf.mxu0
      %1316 = vmatprep.mubr.f32.mxu0 0.0
      %1317 = vmatmul.mubr.f32.gmra.mxu0 %v687
      %v1318 = vpop.f32.mrf.mxu0
      %v1319 = vadd.f32 %v416, %v1318
      %v1320 = vpop.f32.mrf.mxu0
      %1321 = vmatprep.mubr.f32.mxu0 0.0
      %1322 = vmatmul.mubr.f32.gmra.mxu0 %v690
      %v1323 = vpop.f32.mrf.mxu0
      %v1324 = vadd.f32 %v416, %v1323
      %v1325 = vpop.f32.mrf.mxu0
      %1326 = vmatprep.mubr.f32.mxu0 0.0
      %1327 = vmatmul.mubr.f32.gmra.mxu0 %v693
      %v1328 = vpop.f32.mrf.mxu0
      %v1329 = vadd.f32 %v416, %v1328
      %v1330 = vpop.f32.mrf.mxu0
      %1331 = vmatprep.mubr.f32.mxu0 0.0
      %1332 = vmatmul.mubr.f32.gmra.mxu0 %v696
      %v1333 = vpop.f32.mrf.mxu0
      %v1334 = vadd.f32 %v416, %v1333
      %v1335 = vpop.f32.mrf.mxu0
      %1336 = vmatprep.mubr.f32.mxu0 0.0
      %1337 = vmatmul.mubr.f32.gmra.mxu0 %v699
      %v1338 = vpop.f32.mrf.mxu0
      %v1339 = vadd.f32 %v416, %v1338
      %v1340 = vpop.f32.mrf.mxu0
      %1341 = vmatprep.mubr.f32.mxu0 0.0
      %1342 = vmatmul.mubr.f32.gmra.mxu0 %v702
      %v1343 = vpop.f32.mrf.mxu0
      %v1344 = vadd.f32 %v416, %v1343
      %v1345 = vpop.f32.mrf.mxu0
      %1346 = vmatprep.mubr.f32.mxu0 0.0
      %1347 = vmatmul.mubr.f32.gmra.mxu0 %v705
      %v1348 = vpop.f32.mrf.mxu0
      %v1349 = vadd.f32 %v416, %v1348
      %v1350 = vpop.f32.mrf.mxu0
      %1351 = vmatprep.mubr.f32.mxu0 0.0
      %1352 = vmatmul.mubr.f32.gmra.mxu0 %v708
      %v1353 = vpop.f32.mrf.mxu0
      %v1354 = vadd.f32 %v416, %v1353
      %v1355 = vpop.f32.mrf.mxu0
      %1356 = vmatprep.mubr.f32.mxu0 0.0
      %1357 = vmatmul.mubr.f32.gmra.mxu0 %v711
      %v1358 = vpop.f32.mrf.mxu0
      %v1359 = vadd.f32 %v416, %v1358
      %v1360 = vpop.f32.mrf.mxu0
      %1361 = vmatprep.mubr.f32.mxu0 0.0
      %1362 = vmatmul.mubr.f32.gmra.mxu0 %v714
      %v1363 = vpop.f32.mrf.mxu0
      %v1364 = vadd.f32 %v416, %v1363
      %v1365 = vpop.f32.mrf.mxu0
      %1366 = vmatprep.mubr.f32.mxu0 0.0
      %1367 = vmatmul.mubr.f32.gmra.mxu0 %v717
      %v1368 = vpop.f32.mrf.mxu0
      %v1369 = vadd.f32 %v416, %v1368
      %v1370 = vpop.f32.mrf.mxu0
      %1371 = vmatprep.mubr.f32.mxu0 0.0
      %1372 = vmatmul.mubr.f32.gmra.mxu0 %v720
      %v1373 = vpop.f32.mrf.mxu0
      %v1374 = vadd.f32 %v416, %v1373
      %v1375 = vpop.f32.mrf.mxu0
      %1376 = vmatprep.mubr.f32.mxu0 0.0
      %1377 = vmatmul.mubr.f32.gmra.mxu0 %v723
      %v1378 = vpop.f32.mrf.mxu0
      %v1379 = vadd.f32 %v416, %v1378
      %v1380 = vpop.f32.mrf.mxu0
      %1381 = vmatprep.mubr.f32.mxu0 0.0
      %1382 = vmatmul.mubr.f32.gmra.mxu0 %v726
      %v1383 = vpop.f32.mrf.mxu0
      %v1384 = vadd.f32 %v416, %v1383
      %v1385 = vpop.f32.mrf.mxu0
      %1386 = vmatprep.mubr.f32.mxu0 0.0
      %1387 = vmatmul.mubr.f32.gmra.mxu0 %v729
      %v1388 = vpop.f32.mrf.mxu0
      %v1389 = vadd.f32 %v416, %v1388
      %v1390 = vpop.f32.mrf.mxu0
      %1391 = vmatprep.mubr.f32.mxu0 0.0
      %1392 = vmatmul.mubr.f32.gmra.mxu0 %v732
      %v1393 = vpop.f32.mrf.mxu0
      %v1394 = vadd.f32 %v416, %v1393
      %v1395 = vpop.f32.mrf.mxu0
      %1396 = vmatprep.mubr.f32.mxu0 0.0
      %1397 = vmatmul.mubr.f32.gmra.mxu0 %v735
      %v1398 = vpop.f32.mrf.mxu0
      %v1399 = vadd.f32 %v416, %v1398
      %v1400 = vpop.f32.mrf.mxu0
      %1401 = vmatprep.mubr.f32.mxu0 0.0
      %1402 = vmatmul.mubr.f32.gmra.mxu0 %v738
      %v1403 = vpop.f32.mrf.mxu0
      %v1404 = vadd.f32 %v416, %v1403
      %v1405 = vpop.f32.mrf.mxu0
      %1406 = vmatprep.mubr.f32.mxu0 0.0
      %1407 = vmatmul.mubr.f32.gmra.mxu0 %v741
      %v1408 = vpop.f32.mrf.mxu0
      %v1409 = vadd.f32 %v416, %v1408
      %v1410 = vpop.f32.mrf.mxu0
      %1411 = vmatprep.mubr.f32.mxu0 0.0
      %1412 = vmatmul.mubr.f32.gmra.mxu0 %v744
      %v1413 = vpop.f32.mrf.mxu0
      %v1414 = vadd.f32 %v416, %v1413
      %v1415 = vpop.f32.mrf.mxu0
      %1416 = vmatprep.mubr.f32.mxu0 0.0
      %1417 = vmatmul.mubr.f32.gmra.mxu0 %v747
      %v1418 = vpop.f32.mrf.mxu0
      %v1419 = vadd.f32 %v416, %v1418
      %v1420 = vpop.f32.mrf.mxu0
      %1421 = vmatprep.mubr.f32.mxu0 0.0
      %1422 = vmatmul.mubr.f32.gmra.mxu0 %v750
      %v1423 = vpop.f32.mrf.mxu0
      %v1424 = vadd.f32 %v416, %v1423
      %v1425 = vpop.f32.mrf.mxu0
      %1426 = vmatprep.mubr.f32.mxu0 0.0
      %1427 = vmatmul.mubr.f32.gmra.mxu0 %v753
      %v1428 = vpop.f32.mrf.mxu0
      %v1429 = vadd.f32 %v416, %v1428
      %v1430 = vpop.f32.mrf.mxu0
      %1431 = vmatprep.mubr.f32.mxu0 0.0
      %1432 = vmatmul.mubr.f32.gmra.mxu0 %v756
      %v1433 = vpop.f32.mrf.mxu0
      %v1434 = vadd.f32 %v416, %v1433
      %v1435 = vpop.f32.mrf.mxu0
      %1436 = vmatprep.mubr.f32.mxu0 0.0
      %1437 = vmatmul.mubr.f32.gmra.mxu0 %v759
      %v1438 = vpop.f32.mrf.mxu0
      %v1439 = vadd.f32 %v416, %v1438
      %v1440 = vpop.f32.mrf.mxu0
      %1441 = vmatprep.mubr.f32.mxu0 0.0
      %1442 = vmatmul.mubr.f32.gmra.mxu0 %v762
      %v1443 = vpop.f32.mrf.mxu0
      %v1444 = vadd.f32 %v416, %v1443
      %v1445 = vpop.f32.mrf.mxu0
      %1446 = vmatprep.mubr.f32.mxu0 0.0
      %1447 = vmatmul.mubr.f32.gmra.mxu0 %v765
      %v1448 = vpop.f32.mrf.mxu0
      %v1449 = vadd.f32 %v416, %v1448
      %v1450 = vpop.f32.mrf.mxu0
      %1451 = vmatprep.mubr.f32.mxu0 0.0
      %1452 = vmatmul.mubr.f32.gmra.mxu0 %v768
      %v1453 = vpop.f32.mrf.mxu0
      %v1454 = vadd.f32 %v416, %v1453
      %v1455 = vpop.f32.mrf.mxu0
      %1456 = vmatprep.mubr.f32.mxu0 0.0
      %1457 = vmatmul.mubr.f32.gmra.mxu0 %v771
      %v1458 = vpop.f32.mrf.mxu0
      %v1459 = vadd.f32 %v416, %v1458
      %v1460 = vpop.f32.mrf.mxu0
      %1461 = vmatprep.mubr.f32.mxu0 0.0
      %1462 = vmatmul.mubr.f32.gmra.mxu0 %v774
      %v1463 = vpop.f32.mrf.mxu0
      %v1464 = vadd.f32 %v416, %v1463
      %v1465 = vpop.f32.mrf.mxu0
      %1466 = vmatprep.mubr.f32.mxu0 0.0
      %1467 = vmatmul.mubr.f32.gmra.mxu0 %v777
      %v1468 = vpop.f32.mrf.mxu0
      %v1469 = vadd.f32 %v416, %v1468
      %v1470 = vpop.f32.mrf.mxu0
      %1471 = vmatprep.mubr.f32.mxu0 0.0
      %1472 = vmatmul.mubr.f32.gmra.mxu0 %v780
      %v1473 = vpop.f32.mrf.mxu0
      %v1474 = vadd.f32 %v416, %v1473
      %v1475 = vpop.f32.mrf.mxu0
      %1476 = vmatprep.mubr.f32.mxu0 0.0
      %1477 = vmatmul.mubr.f32.gmra.mxu0 %v783
      %v1478 = vpop.f32.mrf.mxu0
      %v1479 = vadd.f32 %v416, %v1478
      %v1480 = vpop.f32.mrf.mxu0
      %1481 = vmatprep.mubr.f32.mxu0 0.0
      %1482 = vmatmul.mubr.f32.gmra.mxu0 %v786
      %v1483 = vpop.f32.mrf.mxu0
      %v1484 = vadd.f32 %v416, %v1483
      %v1485 = vpop.f32.mrf.mxu0
      %1486 = vmatprep.mubr.f32.mxu0 0.0
      %1487 = vmatmul.mubr.f32.gmra.mxu0 %v789
      %v1488 = vpop.f32.mrf.mxu0
      %v1489 = vadd.f32 %v416, %v1488
      %v1490 = vpop.f32.mrf.mxu0
      %1491 = vmatprep.mubr.f32.mxu0 0.0
      %1492 = vmatmul.mubr.f32.gmra.mxu0 %v792
      %v1493 = vpop.f32.mrf.mxu0
      %v1494 = vadd.f32 %v416, %v1493
      %v1495 = vpop.f32.mrf.mxu0
      %1496 = vmatprep.mubr.f32.mxu0 0.0
      %1497 = vmatmul.mubr.f32.gmra.mxu0 %v795
      %v1498 = vpop.f32.mrf.mxu0
      %v1499 = vadd.f32 %v416, %v1498
      %v1500 = vpop.f32.mrf.mxu0
      %1501 = vmatprep.mubr.f32.mxu0 0.0
      %1502 = vmatmul.mubr.f32.gmra.mxu0 %v798
      %v1503 = vpop.f32.mrf.mxu0
      %v1504 = vadd.f32 %v416, %v1503
      %v1505 = vpop.f32.mrf.mxu0
      %1506 = vmatprep.mubr.f32.mxu0 0.0
      %1507 = vmatmul.mubr.f32.gmra.mxu0 %v801
      %v1508 = vpop.f32.mrf.mxu0
      %v1509 = vadd.f32 %v416, %v1508
      %v1510 = vpop.f32.mrf.mxu0
      %1511 = vdwg.mxu0
      %v1512 = vmax.f32 %v874, 0.0
      %v1513 = vmax.f32 %v879, 0.0
      %v1514 = vmax.f32 %v884, 0.0
      %v1515 = vmax.f32 %v889, 0.0
      %v1516 = vmax.f32 %v894, 0.0
      %v1517 = vmax.f32 %v899, 0.0
      %v1518 = vmax.f32 %v904, 0.0
      %v1519 = vmax.f32 %v909, 0.0
      %v1520 = vmax.f32 %v914, 0.0
      %v1521 = vmax.f32 %v919, 0.0
      %v1522 = vmax.f32 %v924, 0.0
      %v1523 = vmax.f32 %v929, 0.0
      %v1524 = vmax.f32 %v934, 0.0
      %v1525 = vmax.f32 %v939, 0.0
      %v1526 = vmax.f32 %v944, 0.0
      %v1527 = vmax.f32 %v949, 0.0
      %v1528 = vmax.f32 %v954, 0.0
      %v1529 = vmax.f32 %v959, 0.0
      %v1530 = vmax.f32 %v964, 0.0
      %v1531 = vmax.f32 %v969, 0.0
      %v1532 = vmax.f32 %v974, 0.0
      %v1533 = vmax.f32 %v979, 0.0
      %v1534 = vmax.f32 %v984, 0.0
      %v1535 = vmax.f32 %v989, 0.0
      %v1536 = vmax.f32 %v994, 0.0
      %v1537 = vmax.f32 %v999, 0.0
      %v1538 = vmax.f32 %v1004, 0.0
      %v1539 = vmax.f32 %v1009, 0.0
      %v1540 = vmax.f32 %v1014, 0.0
      %v1541 = vmax.f32 %v1019, 0.0
      %v1542 = vmax.f32 %v1024, 0.0
      %v1543 = vmax.f32 %v1029, 0.0
      %v1544 = vmax.f32 %v1034, 0.0
      %v1545 = vmax.f32 %v1039, 0.0
      %v1546 = vmax.f32 %v1044, 0.0
      %v1547 = vmax.f32 %v1049, 0.0
      %v1548 = vmax.f32 %v1054, 0.0
      %v1549 = vmax.f32 %v1059, 0.0
      %v1550 = vmax.f32 %v1064, 0.0
      %v1551 = vmax.f32 %v1069, 0.0
      %v1552 = vmax.f32 %v1074, 0.0
      %v1553 = vmax.f32 %v1079, 0.0
      %v1554 = vmax.f32 %v1084, 0.0
      %v1555 = vmax.f32 %v1089, 0.0
      %v1556 = vmax.f32 %v1094, 0.0
      %v1557 = vmax.f32 %v1099, 0.0
      %v1558 = vmax.f32 %v1104, 0.0
      %v1559 = vmax.f32 %v1109, 0.0
      %v1560 = vmax.f32 %v1114, 0.0
      %v1561 = vmax.f32 %v1119, 0.0
      %v1562 = vmax.f32 %v1124, 0.0
      %v1563 = vmax.f32 %v1129, 0.0
      %v1564 = vmax.f32 %v1134, 0.0
      %v1565 = vmax.f32 %v1139, 0.0
      %v1566 = vmax.f32 %v1144, 0.0
      %v1567 = vmax.f32 %v1149, 0.0
      %v1568 = vmax.f32 %v1154, 0.0
      %v1569 = vmax.f32 %v1159, 0.0
      %v1570 = vmax.f32 %v1164, 0.0
      %v1571 = vmax.f32 %v1169, 0.0
      %v1572 = vmax.f32 %v1174, 0.0
      %v1573 = vmax.f32 %v1179, 0.0
      %v1574 = vmax.f32 %v1184, 0.0
      %v1575 = vmax.f32 %v1189, 0.0
      %v1576 = vmax.f32 %v1194, 0.0
      %v1577 = vmax.f32 %v1199, 0.0
      %v1578 = vmax.f32 %v1204, 0.0
      %v1579 = vmax.f32 %v1209, 0.0
      %v1580 = vmax.f32 %v1214, 0.0
      %v1581 = vmax.f32 %v1219, 0.0
      %v1582 = vmax.f32 %v1224, 0.0
      %v1583 = vmax.f32 %v1229, 0.0
      %v1584 = vmax.f32 %v1234, 0.0
      %v1585 = vmax.f32 %v1239, 0.0
      %v1586 = vmax.f32 %v1244, 0.0
      %v1587 = vmax.f32 %v1249, 0.0
      %v1588 = vmax.f32 %v1254, 0.0
      %v1589 = vmax.f32 %v1259, 0.0
      %v1590 = vmax.f32 %v1264, 0.0
      %v1591 = vmax.f32 %v1269, 0.0
      %v1592 = vmax.f32 %v1274, 0.0
      %v1593 = vmax.f32 %v1279, 0.0
      %v1594 = vmax.f32 %v1284, 0.0
      %v1595 = vmax.f32 %v1289, 0.0
      %v1596 = vmax.f32 %v1294, 0.0
      %v1597 = vmax.f32 %v1299, 0.0
      %v1598 = vmax.f32 %v1304, 0.0
      %v1599 = vmax.f32 %v1309, 0.0
      %v1600 = vmax.f32 %v1314, 0.0
      %v1601 = vmax.f32 %v1319, 0.0
      %v1602 = vmax.f32 %v1324, 0.0
      %v1603 = vmax.f32 %v1329, 0.0
      %v1604 = vmax.f32 %v1334, 0.0
      %v1605 = vmax.f32 %v1339, 0.0
      %v1606 = vmax.f32 %v1344, 0.0
      %v1607 = vmax.f32 %v1349, 0.0
      %v1608 = vmax.f32 %v1354, 0.0
      %v1609 = vmax.f32 %v1359, 0.0
      %v1610 = vmax.f32 %v1364, 0.0
      %v1611 = vmax.f32 %v1369, 0.0
      %v1612 = vmax.f32 %v1374, 0.0
      %v1613 = vmax.f32 %v1379, 0.0
      %v1614 = vmax.f32 %v1384, 0.0
      %v1615 = vmax.f32 %v1389, 0.0
      %v1616 = vmax.f32 %v1394, 0.0
      %v1617 = vmax.f32 %v1399, 0.0
      %v1618 = vmax.f32 %v1404, 0.0
      %v1619 = vmax.f32 %v1409, 0.0
      %v1620 = vmax.f32 %v1414, 0.0
      %v1621 = vmax.f32 %v1419, 0.0
      %v1622 = vmax.f32 %v1424, 0.0
      %v1623 = vmax.f32 %v1429, 0.0
      %v1624 = vmax.f32 %v1434, 0.0
      %v1625 = vmax.f32 %v1439, 0.0
      %v1626 = vmax.f32 %v1444, 0.0
      %v1627 = vmax.f32 %v1449, 0.0
      %v1628 = vmax.f32 %v1454, 0.0
      %v1629 = vmax.f32 %v1459, 0.0
      %v1630 = vmax.f32 %v1464, 0.0
      %v1631 = vmax.f32 %v1469, 0.0
      %v1632 = vmax.f32 %v1474, 0.0
      %v1633 = vmax.f32 %v1479, 0.0
      %v1634 = vmax.f32 %v1484, 0.0
      %v1635 = vmax.f32 %v1489, 0.0
      %v1636 = vmax.f32 %v1494, 0.0
      %v1637 = vmax.f32 %v1499, 0.0
      %v1638 = vmax.f32 %v1504, 0.0
      %v1639 = vmax.f32 %v1509, 0.0
      %v1640 = vld [vmem:[%s2] sm:$0xff]
      %v1641 = vld [vmem:[%s2 + $0x8] sm:$0xff]
      %v1642 = vld [vmem:[%s2 + $0x10] sm:$0xff]
      %v1643 = vld [vmem:[%s2 + $0x18] sm:$0xff]
      %v1644 = vld [vmem:[%s2 + $0x20] sm:$0xff]
      %v1645 = vld [vmem:[%s2 + $0x28] sm:$0xff]
      %v1646 = vld [vmem:[%s2 + $0x30] sm:$0xff]
      %v1647 = vld [vmem:[%s2 + $0x38] sm:$0xff]
      %v1648 = vld [vmem:[%s2 + $0x40] sm:$0xff]
      %v1649 = vld [vmem:[%s2 + $0x48] sm:$0xff]
      %v1650 = vld [vmem:[%s2 + $0x50] sm:$0xff]
      %v1651 = vld [vmem:[%s2 + $0x58] sm:$0xff]
      %v1652 = vld [vmem:[%s2 + $0x60] sm:$0xff]
      %v1653 = vld [vmem:[%s2 + $0x68] sm:$0xff]
      %v1654 = vld [vmem:[%s2 + $0x70] sm:$0xff]
      %v1655 = vld [vmem:[%s2 + $0x78] sm:$0xff]
      %v1656 = vld [vmem:[%s5] sm:$0x1]
      %v1658 = vlaneseq
      %v1659 = vshrl.u32 %v1658, 7
      %v1660 = vsub.s32 0, %v1659
      %v1661 = vrot.slane %v1656, %v1660
      %1663 = vmatprep.subr.mxu0 0.0
      %1664 = vmatpush1.msra.mxu0 %v1655
      %1665 = vmatprep.subr.mxu0 0.0
      %1666 = vmatpush1.msra.mxu0 %v1654
      %1667 = vmatprep.subr.mxu0 0.0
      %1668 = vmatpush1.msra.mxu0 %v1653
      %1669 = vmatprep.subr.mxu0 0.0
      %1670 = vmatpush1.msra.mxu0 %v1652
      %1671 = vmatprep.subr.mxu0 0.0
      %1672 = vmatpush1.msra.mxu0 %v1651
      %1673 = vmatprep.subr.mxu0 0.0
      %1674 = vmatpush1.msra.mxu0 %v1650
      %1675 = vmatprep.subr.mxu0 0.0
      %1676 = vmatpush1.msra.mxu0 %v1649
      %1677 = vmatprep.subr.mxu0 0.0
      %1678 = vmatpush1.msra.mxu0 %v1648
      %1679 = vmatprep.subr.mxu0 0.0
      %1680 = vmatpush1.msra.mxu0 %v1647
      %1681 = vmatprep.subr.mxu0 0.0
      %1682 = vmatpush1.msra.mxu0 %v1646
      %1683 = vmatprep.subr.mxu0 0.0
      %1684 = vmatpush1.msra.mxu0 %v1645
      %1685 = vmatprep.subr.mxu0 0.0
      %1686 = vmatpush1.msra.mxu0 %v1644
      %1687 = vmatprep.subr.mxu0 0.0
      %1688 = vmatpush1.msra.mxu0 %v1643
      %1689 = vmatprep.subr.mxu0 0.0
      %1690 = vmatpush1.msra.mxu0 %v1642
      %1691 = vmatprep.subr.mxu0 0.0
      %1692 = vmatpush1.msra.mxu0 %v1641
      %1693 = vmatprep.subr.mxu0 0.0
      %1694 = vmatpush1.msra.mxu0 %v1640
      %1695 = vmatprep.subr.mxu0 0.0
      %1696 = vmatpush2.msra.mxu0 0.0
      %1697 = vmatprep.subr.mxu0 0.0
      %1698 = vmatpush2.msra.mxu0 0.0
      %1699 = vmatprep.subr.mxu0 0.0
      %1700 = vmatpush2.msra.mxu0 0.0
      %1701 = vmatprep.subr.mxu0 0.0
      %1702 = vmatpush2.msra.mxu0 0.0
      %1703 = vmatprep.subr.mxu0 0.0
      %1704 = vmatpush2.msra.mxu0 0.0
      %1705 = vmatprep.subr.mxu0 0.0
      %1706 = vmatpush2.msra.mxu0 0.0
      %1707 = vmatprep.subr.mxu0 0.0
      %1708 = vmatpush2.msra.mxu0 0.0
      %1709 = vmatprep.subr.mxu0 0.0
      %1710 = vmatpush2.msra.mxu0 0.0
      %1711 = vmatprep.subr.mxu0 0.0
      %1712 = vmatpush2.msra.mxu0 0.0
      %1713 = vmatprep.subr.mxu0 0.0
      %1714 = vmatpush2.msra.mxu0 0.0
      %1715 = vmatprep.subr.mxu0 0.0
      %1716 = vmatpush2.msra.mxu0 0.0
      %1717 = vmatprep.subr.mxu0 0.0
      %1718 = vmatpush2.msra.mxu0 0.0
      %1719 = vmatprep.subr.mxu0 0.0
      %1720 = vmatpush2.msra.mxu0 0.0
      %1721 = vmatprep.subr.mxu0 0.0
      %1722 = vmatpush2.msra.mxu0 0.0
      %1723 = vmatprep.subr.mxu0 0.0
      %1724 = vmatpush2.msra.mxu0 0.0
      %1725 = vmatprep.subr.mxu0 0.0
      %1726 = vmatpush2.msra.mxu0 0.0
      %1727 = vmatprep.mubr.f32.mxu0 0.0
      %1728 = vmatmul.mubr.f32.gmra.mxu0 %v1512
      %v1729 = vpop.f32.mrf.mxu0
      %v1730 = vadd.f32 %v1661, %v1729
      %v1731 = vpop.f32.mrf.mxu0
      %1732 = vmatprep.mubr.f32.mxu0 0.0
      %1733 = vmatmul.mubr.f32.gmra.mxu0 %v1513
      %v1734 = vpop.f32.mrf.mxu0
      %v1735 = vadd.f32 %v1661, %v1734
      %v1736 = vpop.f32.mrf.mxu0
      %1737 = vmatprep.mubr.f32.mxu0 0.0
      %1738 = vmatmul.mubr.f32.gmra.mxu0 %v1514
      %v1739 = vpop.f32.mrf.mxu0
      %v1740 = vadd.f32 %v1661, %v1739
      %v1741 = vpop.f32.mrf.mxu0
      %1742 = vmatprep.mubr.f32.mxu0 0.0
      %1743 = vmatmul.mubr.f32.gmra.mxu0 %v1515
      %v1744 = vpop.f32.mrf.mxu0
      %v1745 = vadd.f32 %v1661, %v1744
      %v1746 = vpop.f32.mrf.mxu0
      %1747 = vmatprep.mubr.f32.mxu0 0.0
      %1748 = vmatmul.mubr.f32.gmra.mxu0 %v1516
      %v1749 = vpop.f32.mrf.mxu0
      %v1750 = vadd.f32 %v1661, %v1749
      %v1751 = vpop.f32.mrf.mxu0
      %1752 = vmatprep.mubr.f32.mxu0 0.0
      %1753 = vmatmul.mubr.f32.gmra.mxu0 %v1517
      %v1754 = vpop.f32.mrf.mxu0
      %v1755 = vadd.f32 %v1661, %v1754
      %v1756 = vpop.f32.mrf.mxu0
      %1757 = vmatprep.mubr.f32.mxu0 0.0
      %1758 = vmatmul.mubr.f32.gmra.mxu0 %v1518
      %v1759 = vpop.f32.mrf.mxu0
      %v1760 = vadd.f32 %v1661, %v1759
      %v1761 = vpop.f32.mrf.mxu0
      %1762 = vmatprep.mubr.f32.mxu0 0.0
      %1763 = vmatmul.mubr.f32.gmra.mxu0 %v1519
      %v1764 = vpop.f32.mrf.mxu0
      %v1765 = vadd.f32 %v1661, %v1764
      %v1766 = vpop.f32.mrf.mxu0
      %1767 = vmatprep.mubr.f32.mxu0 0.0
      %1768 = vmatmul.mubr.f32.gmra.mxu0 %v1520
      %v1769 = vpop.f32.mrf.mxu0
      %v1770 = vadd.f32 %v1661, %v1769
      %v1771 = vpop.f32.mrf.mxu0
      %1772 = vmatprep.mubr.f32.mxu0 0.0
      %1773 = vmatmul.mubr.f32.gmra.mxu0 %v1521
      %v1774 = vpop.f32.mrf.mxu0
      %v1775 = vadd.f32 %v1661, %v1774
      %v1776 = vpop.f32.mrf.mxu0
      %1777 = vmatprep.mubr.f32.mxu0 0.0
      %1778 = vmatmul.mubr.f32.gmra.mxu0 %v1522
      %v1779 = vpop.f32.mrf.mxu0
      %v1780 = vadd.f32 %v1661, %v1779
      %v1781 = vpop.f32.mrf.mxu0
      %1782 = vmatprep.mubr.f32.mxu0 0.0
      %1783 = vmatmul.mubr.f32.gmra.mxu0 %v1523
      %v1784 = vpop.f32.mrf.mxu0
      %v1785 = vadd.f32 %v1661, %v1784
      %v1786 = vpop.f32.mrf.mxu0
      %1787 = vmatprep.mubr.f32.mxu0 0.0
      %1788 = vmatmul.mubr.f32.gmra.mxu0 %v1524
      %v1789 = vpop.f32.mrf.mxu0
      %v1790 = vadd.f32 %v1661, %v1789
      %v1791 = vpop.f32.mrf.mxu0
      %1792 = vmatprep.mubr.f32.mxu0 0.0
      %1793 = vmatmul.mubr.f32.gmra.mxu0 %v1525
      %v1794 = vpop.f32.mrf.mxu0
      %v1795 = vadd.f32 %v1661, %v1794
      %v1796 = vpop.f32.mrf.mxu0
      %1797 = vmatprep.mubr.f32.mxu0 0.0
      %1798 = vmatmul.mubr.f32.gmra.mxu0 %v1526
      %v1799 = vpop.f32.mrf.mxu0
      %v1800 = vadd.f32 %v1661, %v1799
      %v1801 = vpop.f32.mrf.mxu0
      %1802 = vmatprep.mubr.f32.mxu0 0.0
      %1803 = vmatmul.mubr.f32.gmra.mxu0 %v1527
      %v1804 = vpop.f32.mrf.mxu0
      %v1805 = vadd.f32 %v1661, %v1804
      %v1806 = vpop.f32.mrf.mxu0
      %1807 = vmatprep.mubr.f32.mxu0 0.0
      %1808 = vmatmul.mubr.f32.gmra.mxu0 %v1528
      %v1809 = vpop.f32.mrf.mxu0
      %v1810 = vadd.f32 %v1661, %v1809
      %v1811 = vpop.f32.mrf.mxu0
      %1812 = vmatprep.mubr.f32.mxu0 0.0
      %1813 = vmatmul.mubr.f32.gmra.mxu0 %v1529
      %v1814 = vpop.f32.mrf.mxu0
      %v1815 = vadd.f32 %v1661, %v1814
      %v1816 = vpop.f32.mrf.mxu0
      %1817 = vmatprep.mubr.f32.mxu0 0.0
      %1818 = vmatmul.mubr.f32.gmra.mxu0 %v1530
      %v1819 = vpop.f32.mrf.mxu0
      %v1820 = vadd.f32 %v1661, %v1819
      %v1821 = vpop.f32.mrf.mxu0
      %1822 = vmatprep.mubr.f32.mxu0 0.0
      %1823 = vmatmul.mubr.f32.gmra.mxu0 %v1531
      %v1824 = vpop.f32.mrf.mxu0
      %v1825 = vadd.f32 %v1661, %v1824
      %v1826 = vpop.f32.mrf.mxu0
      %1827 = vmatprep.mubr.f32.mxu0 0.0
      %1828 = vmatmul.mubr.f32.gmra.mxu0 %v1532
      %v1829 = vpop.f32.mrf.mxu0
      %v1830 = vadd.f32 %v1661, %v1829
      %v1831 = vpop.f32.mrf.mxu0
      %1832 = vmatprep.mubr.f32.mxu0 0.0
      %1833 = vmatmul.mubr.f32.gmra.mxu0 %v1533
      %v1834 = vpop.f32.mrf.mxu0
      %v1835 = vadd.f32 %v1661, %v1834
      %v1836 = vpop.f32.mrf.mxu0
      %1837 = vmatprep.mubr.f32.mxu0 0.0
      %1838 = vmatmul.mubr.f32.gmra.mxu0 %v1534
      %v1839 = vpop.f32.mrf.mxu0
      %v1840 = vadd.f32 %v1661, %v1839
      %v1841 = vpop.f32.mrf.mxu0
      %1842 = vmatprep.mubr.f32.mxu0 0.0
      %1843 = vmatmul.mubr.f32.gmra.mxu0 %v1535
      %v1844 = vpop.f32.mrf.mxu0
      %v1845 = vadd.f32 %v1661, %v1844
      %v1846 = vpop.f32.mrf.mxu0
      %1847 = vmatprep.mubr.f32.mxu0 0.0
      %1848 = vmatmul.mubr.f32.gmra.mxu0 %v1536
      %v1849 = vpop.f32.mrf.mxu0
      %v1850 = vadd.f32 %v1661, %v1849
      %v1851 = vpop.f32.mrf.mxu0
      %1852 = vmatprep.mubr.f32.mxu0 0.0
      %1853 = vmatmul.mubr.f32.gmra.mxu0 %v1537
      %v1854 = vpop.f32.mrf.mxu0
      %v1855 = vadd.f32 %v1661, %v1854
      %v1856 = vpop.f32.mrf.mxu0
      %1857 = vmatprep.mubr.f32.mxu0 0.0
      %1858 = vmatmul.mubr.f32.gmra.mxu0 %v1538
      %v1859 = vpop.f32.mrf.mxu0
      %v1860 = vadd.f32 %v1661, %v1859
      %v1861 = vpop.f32.mrf.mxu0
      %1862 = vmatprep.mubr.f32.mxu0 0.0
      %1863 = vmatmul.mubr.f32.gmra.mxu0 %v1539
      %v1864 = vpop.f32.mrf.mxu0
      %v1865 = vadd.f32 %v1661, %v1864
      %v1866 = vpop.f32.mrf.mxu0
      %1867 = vmatprep.mubr.f32.mxu0 0.0
      %1868 = vmatmul.mubr.f32.gmra.mxu0 %v1540
      %v1869 = vpop.f32.mrf.mxu0
      %v1870 = vadd.f32 %v1661, %v1869
      %v1871 = vpop.f32.mrf.mxu0
      %1872 = vmatprep.mubr.f32.mxu0 0.0
      %1873 = vmatmul.mubr.f32.gmra.mxu0 %v1541
      %v1874 = vpop.f32.mrf.mxu0
      %v1875 = vadd.f32 %v1661, %v1874
      %v1876 = vpop.f32.mrf.mxu0
      %1877 = vmatprep.mubr.f32.mxu0 0.0
      %1878 = vmatmul.mubr.f32.gmra.mxu0 %v1542
      %v1879 = vpop.f32.mrf.mxu0
      %v1880 = vadd.f32 %v1661, %v1879
      %v1881 = vpop.f32.mrf.mxu0
      %1882 = vmatprep.mubr.f32.mxu0 0.0
      %1883 = vmatmul.mubr.f32.gmra.mxu0 %v1543
      %v1884 = vpop.f32.mrf.mxu0
      %v1885 = vadd.f32 %v1661, %v1884
      %v1886 = vpop.f32.mrf.mxu0
      %1887 = vmatprep.mubr.f32.mxu0 0.0
      %1888 = vmatmul.mubr.f32.gmra.mxu0 %v1544
      %v1889 = vpop.f32.mrf.mxu0
      %v1890 = vadd.f32 %v1661, %v1889
      %v1891 = vpop.f32.mrf.mxu0
      %1892 = vmatprep.mubr.f32.mxu0 0.0
      %1893 = vmatmul.mubr.f32.gmra.mxu0 %v1545
      %v1894 = vpop.f32.mrf.mxu0
      %v1895 = vadd.f32 %v1661, %v1894
      %v1896 = vpop.f32.mrf.mxu0
      %1897 = vmatprep.mubr.f32.mxu0 0.0
      %1898 = vmatmul.mubr.f32.gmra.mxu0 %v1546
      %v1899 = vpop.f32.mrf.mxu0
      %v1900 = vadd.f32 %v1661, %v1899
      %v1901 = vpop.f32.mrf.mxu0
      %1902 = vmatprep.mubr.f32.mxu0 0.0
      %1903 = vmatmul.mubr.f32.gmra.mxu0 %v1547
      %v1904 = vpop.f32.mrf.mxu0
      %v1905 = vadd.f32 %v1661, %v1904
      %v1906 = vpop.f32.mrf.mxu0
      %1907 = vmatprep.mubr.f32.mxu0 0.0
      %1908 = vmatmul.mubr.f32.gmra.mxu0 %v1548
      %v1909 = vpop.f32.mrf.mxu0
      %v1910 = vadd.f32 %v1661, %v1909
      %v1911 = vpop.f32.mrf.mxu0
      %1912 = vmatprep.mubr.f32.mxu0 0.0
      %1913 = vmatmul.mubr.f32.gmra.mxu0 %v1549
      %v1914 = vpop.f32.mrf.mxu0
      %v1915 = vadd.f32 %v1661, %v1914
      %v1916 = vpop.f32.mrf.mxu0
      %1917 = vmatprep.mubr.f32.mxu0 0.0
      %1918 = vmatmul.mubr.f32.gmra.mxu0 %v1550
      %v1919 = vpop.f32.mrf.mxu0
      %v1920 = vadd.f32 %v1661, %v1919
      %v1921 = vpop.f32.mrf.mxu0
      %1922 = vmatprep.mubr.f32.mxu0 0.0
      %1923 = vmatmul.mubr.f32.gmra.mxu0 %v1551
      %v1924 = vpop.f32.mrf.mxu0
      %v1925 = vadd.f32 %v1661, %v1924
      %v1926 = vpop.f32.mrf.mxu0
      %1927 = vmatprep.mubr.f32.mxu0 0.0
      %1928 = vmatmul.mubr.f32.gmra.mxu0 %v1552
      %v1929 = vpop.f32.mrf.mxu0
      %v1930 = vadd.f32 %v1661, %v1929
      %v1931 = vpop.f32.mrf.mxu0
      %1932 = vmatprep.mubr.f32.mxu0 0.0
      %1933 = vmatmul.mubr.f32.gmra.mxu0 %v1553
      %v1934 = vpop.f32.mrf.mxu0
      %v1935 = vadd.f32 %v1661, %v1934
      %v1936 = vpop.f32.mrf.mxu0
      %1937 = vmatprep.mubr.f32.mxu0 0.0
      %1938 = vmatmul.mubr.f32.gmra.mxu0 %v1554
      %v1939 = vpop.f32.mrf.mxu0
      %v1940 = vadd.f32 %v1661, %v1939
      %v1941 = vpop.f32.mrf.mxu0
      %1942 = vmatprep.mubr.f32.mxu0 0.0
      %1943 = vmatmul.mubr.f32.gmra.mxu0 %v1555
      %v1944 = vpop.f32.mrf.mxu0
      %v1945 = vadd.f32 %v1661, %v1944
      %v1946 = vpop.f32.mrf.mxu0
      %1947 = vmatprep.mubr.f32.mxu0 0.0
      %1948 = vmatmul.mubr.f32.gmra.mxu0 %v1556
      %v1949 = vpop.f32.mrf.mxu0
      %v1950 = vadd.f32 %v1661, %v1949
      %v1951 = vpop.f32.mrf.mxu0
      %1952 = vmatprep.mubr.f32.mxu0 0.0
      %1953 = vmatmul.mubr.f32.gmra.mxu0 %v1557
      %v1954 = vpop.f32.mrf.mxu0
      %v1955 = vadd.f32 %v1661, %v1954
      %v1956 = vpop.f32.mrf.mxu0
      %1957 = vmatprep.mubr.f32.mxu0 0.0
      %1958 = vmatmul.mubr.f32.gmra.mxu0 %v1558
      %v1959 = vpop.f32.mrf.mxu0
      %v1960 = vadd.f32 %v1661, %v1959
      %v1961 = vpop.f32.mrf.mxu0
      %1962 = vmatprep.mubr.f32.mxu0 0.0
      %1963 = vmatmul.mubr.f32.gmra.mxu0 %v1559
      %v1964 = vpop.f32.mrf.mxu0
      %v1965 = vadd.f32 %v1661, %v1964
      %v1966 = vpop.f32.mrf.mxu0
      %1967 = vmatprep.mubr.f32.mxu0 0.0
      %1968 = vmatmul.mubr.f32.gmra.mxu0 %v1560
      %v1969 = vpop.f32.mrf.mxu0
      %v1970 = vadd.f32 %v1661, %v1969
      %v1971 = vpop.f32.mrf.mxu0
      %1972 = vmatprep.mubr.f32.mxu0 0.0
      %1973 = vmatmul.mubr.f32.gmra.mxu0 %v1561
      %v1974 = vpop.f32.mrf.mxu0
      %v1975 = vadd.f32 %v1661, %v1974
      %v1976 = vpop.f32.mrf.mxu0
      %1977 = vmatprep.mubr.f32.mxu0 0.0
      %1978 = vmatmul.mubr.f32.gmra.mxu0 %v1562
      %v1979 = vpop.f32.mrf.mxu0
      %v1980 = vadd.f32 %v1661, %v1979
      %v1981 = vpop.f32.mrf.mxu0
      %1982 = vmatprep.mubr.f32.mxu0 0.0
      %1983 = vmatmul.mubr.f32.gmra.mxu0 %v1563
      %v1984 = vpop.f32.mrf.mxu0
      %v1985 = vadd.f32 %v1661, %v1984
      %v1986 = vpop.f32.mrf.mxu0
      %1987 = vmatprep.mubr.f32.mxu0 0.0
      %1988 = vmatmul.mubr.f32.gmra.mxu0 %v1564
      %v1989 = vpop.f32.mrf.mxu0
      %v1990 = vadd.f32 %v1661, %v1989
      %v1991 = vpop.f32.mrf.mxu0
      %1992 = vmatprep.mubr.f32.mxu0 0.0
      %1993 = vmatmul.mubr.f32.gmra.mxu0 %v1565
      %v1994 = vpop.f32.mrf.mxu0
      %v1995 = vadd.f32 %v1661, %v1994
      %v1996 = vpop.f32.mrf.mxu0
      %1997 = vmatprep.mubr.f32.mxu0 0.0
      %1998 = vmatmul.mubr.f32.gmra.mxu0 %v1566
      %v1999 = vpop.f32.mrf.mxu0
      %v2000 = vadd.f32 %v1661, %v1999
      %v2001 = vpop.f32.mrf.mxu0
      %2002 = vmatprep.mubr.f32.mxu0 0.0
      %2003 = vmatmul.mubr.f32.gmra.mxu0 %v1567
      %v2004 = vpop.f32.mrf.mxu0
      %v2005 = vadd.f32 %v1661, %v2004
      %v2006 = vpop.f32.mrf.mxu0
      %2007 = vmatprep.mubr.f32.mxu0 0.0
      %2008 = vmatmul.mubr.f32.gmra.mxu0 %v1568
      %v2009 = vpop.f32.mrf.mxu0
      %v2010 = vadd.f32 %v1661, %v2009
      %v2011 = vpop.f32.mrf.mxu0
      %2012 = vmatprep.mubr.f32.mxu0 0.0
      %2013 = vmatmul.mubr.f32.gmra.mxu0 %v1569
      %v2014 = vpop.f32.mrf.mxu0
      %v2015 = vadd.f32 %v1661, %v2014
      %v2016 = vpop.f32.mrf.mxu0
      %2017 = vmatprep.mubr.f32.mxu0 0.0
      %2018 = vmatmul.mubr.f32.gmra.mxu0 %v1570
      %v2019 = vpop.f32.mrf.mxu0
      %v2020 = vadd.f32 %v1661, %v2019
      %v2021 = vpop.f32.mrf.mxu0
      %2022 = vmatprep.mubr.f32.mxu0 0.0
      %2023 = vmatmul.mubr.f32.gmra.mxu0 %v1571
      %v2024 = vpop.f32.mrf.mxu0
      %v2025 = vadd.f32 %v1661, %v2024
      %v2026 = vpop.f32.mrf.mxu0
      %2027 = vmatprep.mubr.f32.mxu0 0.0
      %2028 = vmatmul.mubr.f32.gmra.mxu0 %v1572
      %v2029 = vpop.f32.mrf.mxu0
      %v2030 = vadd.f32 %v1661, %v2029
      %v2031 = vpop.f32.mrf.mxu0
      %2032 = vmatprep.mubr.f32.mxu0 0.0
      %2033 = vmatmul.mubr.f32.gmra.mxu0 %v1573
      %v2034 = vpop.f32.mrf.mxu0
      %v2035 = vadd.f32 %v1661, %v2034
      %v2036 = vpop.f32.mrf.mxu0
      %2037 = vmatprep.mubr.f32.mxu0 0.0
      %2038 = vmatmul.mubr.f32.gmra.mxu0 %v1574
      %v2039 = vpop.f32.mrf.mxu0
      %v2040 = vadd.f32 %v1661, %v2039
      %v2041 = vpop.f32.mrf.mxu0
      %2042 = vmatprep.mubr.f32.mxu0 0.0
      %2043 = vmatmul.mubr.f32.gmra.mxu0 %v1575
      %v2044 = vpop.f32.mrf.mxu0
      %v2045 = vadd.f32 %v1661, %v2044
      %v2046 = vpop.f32.mrf.mxu0
      %2047 = vmatprep.mubr.f32.mxu0 0.0
      %2048 = vmatmul.mubr.f32.gmra.mxu0 %v1576
      %v2049 = vpop.f32.mrf.mxu0
      %v2050 = vadd.f32 %v1661, %v2049
      %v2051 = vpop.f32.mrf.mxu0
      %2052 = vmatprep.mubr.f32.mxu0 0.0
      %2053 = vmatmul.mubr.f32.gmra.mxu0 %v1577
      %v2054 = vpop.f32.mrf.mxu0
      %v2055 = vadd.f32 %v1661, %v2054
      %v2056 = vpop.f32.mrf.mxu0
      %2057 = vmatprep.mubr.f32.mxu0 0.0
      %2058 = vmatmul.mubr.f32.gmra.mxu0 %v1578
      %v2059 = vpop.f32.mrf.mxu0
      %v2060 = vadd.f32 %v1661, %v2059
      %v2061 = vpop.f32.mrf.mxu0
      %2062 = vmatprep.mubr.f32.mxu0 0.0
      %2063 = vmatmul.mubr.f32.gmra.mxu0 %v1579
      %v2064 = vpop.f32.mrf.mxu0
      %v2065 = vadd.f32 %v1661, %v2064
      %v2066 = vpop.f32.mrf.mxu0
      %2067 = vmatprep.mubr.f32.mxu0 0.0
      %2068 = vmatmul.mubr.f32.gmra.mxu0 %v1580
      %v2069 = vpop.f32.mrf.mxu0
      %v2070 = vadd.f32 %v1661, %v2069
      %v2071 = vpop.f32.mrf.mxu0
      %2072 = vmatprep.mubr.f32.mxu0 0.0
      %2073 = vmatmul.mubr.f32.gmra.mxu0 %v1581
      %v2074 = vpop.f32.mrf.mxu0
      %v2075 = vadd.f32 %v1661, %v2074
      %v2076 = vpop.f32.mrf.mxu0
      %2077 = vmatprep.mubr.f32.mxu0 0.0
      %2078 = vmatmul.mubr.f32.gmra.mxu0 %v1582
      %v2079 = vpop.f32.mrf.mxu0
      %v2080 = vadd.f32 %v1661, %v2079
      %v2081 = vpop.f32.mrf.mxu0
      %2082 = vmatprep.mubr.f32.mxu0 0.0
      %2083 = vmatmul.mubr.f32.gmra.mxu0 %v1583
      %v2084 = vpop.f32.mrf.mxu0
      %v2085 = vadd.f32 %v1661, %v2084
      %v2086 = vpop.f32.mrf.mxu0
      %2087 = vmatprep.mubr.f32.mxu0 0.0
      %2088 = vmatmul.mubr.f32.gmra.mxu0 %v1584
      %v2089 = vpop.f32.mrf.mxu0
      %v2090 = vadd.f32 %v1661, %v2089
      %v2091 = vpop.f32.mrf.mxu0
      %2092 = vmatprep.mubr.f32.mxu0 0.0
      %2093 = vmatmul.mubr.f32.gmra.mxu0 %v1585
      %v2094 = vpop.f32.mrf.mxu0
      %v2095 = vadd.f32 %v1661, %v2094
      %v2096 = vpop.f32.mrf.mxu0
      %2097 = vmatprep.mubr.f32.mxu0 0.0
      %2098 = vmatmul.mubr.f32.gmra.mxu0 %v1586
      %v2099 = vpop.f32.mrf.mxu0
      %v2100 = vadd.f32 %v1661, %v2099
      %v2101 = vpop.f32.mrf.mxu0
      %2102 = vmatprep.mubr.f32.mxu0 0.0
      %2103 = vmatmul.mubr.f32.gmra.mxu0 %v1587
      %v2104 = vpop.f32.mrf.mxu0
      %v2105 = vadd.f32 %v1661, %v2104
      %v2106 = vpop.f32.mrf.mxu0
      %2107 = vmatprep.mubr.f32.mxu0 0.0
      %2108 = vmatmul.mubr.f32.gmra.mxu0 %v1588
      %v2109 = vpop.f32.mrf.mxu0
      %v2110 = vadd.f32 %v1661, %v2109
      %v2111 = vpop.f32.mrf.mxu0
      %2112 = vmatprep.mubr.f32.mxu0 0.0
      %2113 = vmatmul.mubr.f32.gmra.mxu0 %v1589
      %v2114 = vpop.f32.mrf.mxu0
      %v2115 = vadd.f32 %v1661, %v2114
      %v2116 = vpop.f32.mrf.mxu0
      %2117 = vmatprep.mubr.f32.mxu0 0.0
      %2118 = vmatmul.mubr.f32.gmra.mxu0 %v1590
      %v2119 = vpop.f32.mrf.mxu0
      %v2120 = vadd.f32 %v1661, %v2119
      %v2121 = vpop.f32.mrf.mxu0
      %2122 = vmatprep.mubr.f32.mxu0 0.0
      %2123 = vmatmul.mubr.f32.gmra.mxu0 %v1591
      %v2124 = vpop.f32.mrf.mxu0
      %v2125 = vadd.f32 %v1661, %v2124
      %v2126 = vpop.f32.mrf.mxu0
      %2127 = vmatprep.mubr.f32.mxu0 0.0
      %2128 = vmatmul.mubr.f32.gmra.mxu0 %v1592
      %v2129 = vpop.f32.mrf.mxu0
      %v2130 = vadd.f32 %v1661, %v2129
      %v2131 = vpop.f32.mrf.mxu0
      %2132 = vmatprep.mubr.f32.mxu0 0.0
      %2133 = vmatmul.mubr.f32.gmra.mxu0 %v1593
      %v2134 = vpop.f32.mrf.mxu0
      %v2135 = vadd.f32 %v1661, %v2134
      %v2136 = vpop.f32.mrf.mxu0
      %2137 = vmatprep.mubr.f32.mxu0 0.0
      %2138 = vmatmul.mubr.f32.gmra.mxu0 %v1594
      %v2139 = vpop.f32.mrf.mxu0
      %v2140 = vadd.f32 %v1661, %v2139
      %v2141 = vpop.f32.mrf.mxu0
      %2142 = vmatprep.mubr.f32.mxu0 0.0
      %2143 = vmatmul.mubr.f32.gmra.mxu0 %v1595
      %v2144 = vpop.f32.mrf.mxu0
      %v2145 = vadd.f32 %v1661, %v2144
      %v2146 = vpop.f32.mrf.mxu0
      %2147 = vmatprep.mubr.f32.mxu0 0.0
      %2148 = vmatmul.mubr.f32.gmra.mxu0 %v1596
      %v2149 = vpop.f32.mrf.mxu0
      %v2150 = vadd.f32 %v1661, %v2149
      %v2151 = vpop.f32.mrf.mxu0
      %2152 = vmatprep.mubr.f32.mxu0 0.0
      %2153 = vmatmul.mubr.f32.gmra.mxu0 %v1597
      %v2154 = vpop.f32.mrf.mxu0
      %v2155 = vadd.f32 %v1661, %v2154
      %v2156 = vpop.f32.mrf.mxu0
      %2157 = vmatprep.mubr.f32.mxu0 0.0
      %2158 = vmatmul.mubr.f32.gmra.mxu0 %v1598
      %v2159 = vpop.f32.mrf.mxu0
      %v2160 = vadd.f32 %v1661, %v2159
      %v2161 = vpop.f32.mrf.mxu0
      %2162 = vmatprep.mubr.f32.mxu0 0.0
      %2163 = vmatmul.mubr.f32.gmra.mxu0 %v1599
      %v2164 = vpop.f32.mrf.mxu0
      %v2165 = vadd.f32 %v1661, %v2164
      %v2166 = vpop.f32.mrf.mxu0
      %2167 = vmatprep.mubr.f32.mxu0 0.0
      %2168 = vmatmul.mubr.f32.gmra.mxu0 %v1600
      %v2169 = vpop.f32.mrf.mxu0
      %v2170 = vadd.f32 %v1661, %v2169
      %v2171 = vpop.f32.mrf.mxu0
      %2172 = vmatprep.mubr.f32.mxu0 0.0
      %2173 = vmatmul.mubr.f32.gmra.mxu0 %v1601
      %v2174 = vpop.f32.mrf.mxu0
      %v2175 = vadd.f32 %v1661, %v2174
      %v2176 = vpop.f32.mrf.mxu0
      %2177 = vmatprep.mubr.f32.mxu0 0.0
      %2178 = vmatmul.mubr.f32.gmra.mxu0 %v1602
      %v2179 = vpop.f32.mrf.mxu0
      %v2180 = vadd.f32 %v1661, %v2179
      %v2181 = vpop.f32.mrf.mxu0
      %2182 = vmatprep.mubr.f32.mxu0 0.0
      %2183 = vmatmul.mubr.f32.gmra.mxu0 %v1603
      %v2184 = vpop.f32.mrf.mxu0
      %v2185 = vadd.f32 %v1661, %v2184
      %v2186 = vpop.f32.mrf.mxu0
      %2187 = vmatprep.mubr.f32.mxu0 0.0
      %2188 = vmatmul.mubr.f32.gmra.mxu0 %v1604
      %v2189 = vpop.f32.mrf.mxu0
      %v2190 = vadd.f32 %v1661, %v2189
      %v2191 = vpop.f32.mrf.mxu0
      %2192 = vmatprep.mubr.f32.mxu0 0.0
      %2193 = vmatmul.mubr.f32.gmra.mxu0 %v1605
      %v2194 = vpop.f32.mrf.mxu0
      %v2195 = vadd.f32 %v1661, %v2194
      %v2196 = vpop.f32.mrf.mxu0
      %2197 = vmatprep.mubr.f32.mxu0 0.0
      %2198 = vmatmul.mubr.f32.gmra.mxu0 %v1606
      %v2199 = vpop.f32.mrf.mxu0
      %v2200 = vadd.f32 %v1661, %v2199
      %v2201 = vpop.f32.mrf.mxu0
      %2202 = vmatprep.mubr.f32.mxu0 0.0
      %2203 = vmatmul.mubr.f32.gmra.mxu0 %v1607
      %v2204 = vpop.f32.mrf.mxu0
      %v2205 = vadd.f32 %v1661, %v2204
      %v2206 = vpop.f32.mrf.mxu0
      %2207 = vmatprep.mubr.f32.mxu0 0.0
      %2208 = vmatmul.mubr.f32.gmra.mxu0 %v1608
      %v2209 = vpop.f32.mrf.mxu0
      %v2210 = vadd.f32 %v1661, %v2209
      %v2211 = vpop.f32.mrf.mxu0
      %2212 = vmatprep.mubr.f32.mxu0 0.0
      %2213 = vmatmul.mubr.f32.gmra.mxu0 %v1609
      %v2214 = vpop.f32.mrf.mxu0
      %v2215 = vadd.f32 %v1661, %v2214
      %v2216 = vpop.f32.mrf.mxu0
      %2217 = vmatprep.mubr.f32.mxu0 0.0
      %2218 = vmatmul.mubr.f32.gmra.mxu0 %v1610
      %v2219 = vpop.f32.mrf.mxu0
      %v2220 = vadd.f32 %v1661, %v2219
      %v2221 = vpop.f32.mrf.mxu0
      %2222 = vmatprep.mubr.f32.mxu0 0.0
      %2223 = vmatmul.mubr.f32.gmra.mxu0 %v1611
      %v2224 = vpop.f32.mrf.mxu0
      %v2225 = vadd.f32 %v1661, %v2224
      %v2226 = vpop.f32.mrf.mxu0
      %2227 = vmatprep.mubr.f32.mxu0 0.0
      %2228 = vmatmul.mubr.f32.gmra.mxu0 %v1612
      %v2229 = vpop.f32.mrf.mxu0
      %v2230 = vadd.f32 %v1661, %v2229
      %v2231 = vpop.f32.mrf.mxu0
      %2232 = vmatprep.mubr.f32.mxu0 0.0
      %2233 = vmatmul.mubr.f32.gmra.mxu0 %v1613
      %v2234 = vpop.f32.mrf.mxu0
      %v2235 = vadd.f32 %v1661, %v2234
      %v2236 = vpop.f32.mrf.mxu0
      %2237 = vmatprep.mubr.f32.mxu0 0.0
      %2238 = vmatmul.mubr.f32.gmra.mxu0 %v1614
      %v2239 = vpop.f32.mrf.mxu0
      %v2240 = vadd.f32 %v1661, %v2239
      %v2241 = vpop.f32.mrf.mxu0
      %2242 = vmatprep.mubr.f32.mxu0 0.0
      %2243 = vmatmul.mubr.f32.gmra.mxu0 %v1615
      %v2244 = vpop.f32.mrf.mxu0
      %v2245 = vadd.f32 %v1661, %v2244
      %v2246 = vpop.f32.mrf.mxu0
      %2247 = vmatprep.mubr.f32.mxu0 0.0
      %2248 = vmatmul.mubr.f32.gmra.mxu0 %v1616
      %v2249 = vpop.f32.mrf.mxu0
      %v2250 = vadd.f32 %v1661, %v2249
      %v2251 = vpop.f32.mrf.mxu0
      %2252 = vmatprep.mubr.f32.mxu0 0.0
      %2253 = vmatmul.mubr.f32.gmra.mxu0 %v1617
      %v2254 = vpop.f32.mrf.mxu0
      %v2255 = vadd.f32 %v1661, %v2254
      %v2256 = vpop.f32.mrf.mxu0
      %2257 = vmatprep.mubr.f32.mxu0 0.0
      %2258 = vmatmul.mubr.f32.gmra.mxu0 %v1618
      %v2259 = vpop.f32.mrf.mxu0
      %v2260 = vadd.f32 %v1661, %v2259
      %v2261 = vpop.f32.mrf.mxu0
      %2262 = vmatprep.mubr.f32.mxu0 0.0
      %2263 = vmatmul.mubr.f32.gmra.mxu0 %v1619
      %v2264 = vpop.f32.mrf.mxu0
      %v2265 = vadd.f32 %v1661, %v2264
      %v2266 = vpop.f32.mrf.mxu0
      %2267 = vmatprep.mubr.f32.mxu0 0.0
      %2268 = vmatmul.mubr.f32.gmra.mxu0 %v1620
      %v2269 = vpop.f32.mrf.mxu0
      %v2270 = vadd.f32 %v1661, %v2269
      %v2271 = vpop.f32.mrf.mxu0
      %2272 = vmatprep.mubr.f32.mxu0 0.0
      %2273 = vmatmul.mubr.f32.gmra.mxu0 %v1621
      %v2274 = vpop.f32.mrf.mxu0
      %v2275 = vadd.f32 %v1661, %v2274
      %v2276 = vpop.f32.mrf.mxu0
      %2277 = vmatprep.mubr.f32.mxu0 0.0
      %2278 = vmatmul.mubr.f32.gmra.mxu0 %v1622
      %v2279 = vpop.f32.mrf.mxu0
      %v2280 = vadd.f32 %v1661, %v2279
      %v2281 = vpop.f32.mrf.mxu0
      %2282 = vmatprep.mubr.f32.mxu0 0.0
      %2283 = vmatmul.mubr.f32.gmra.mxu0 %v1623
      %v2284 = vpop.f32.mrf.mxu0
      %v2285 = vadd.f32 %v1661, %v2284
      %v2286 = vpop.f32.mrf.mxu0
      %2287 = vmatprep.mubr.f32.mxu0 0.0
      %2288 = vmatmul.mubr.f32.gmra.mxu0 %v1624
      %v2289 = vpop.f32.mrf.mxu0
      %v2290 = vadd.f32 %v1661, %v2289
      %v2291 = vpop.f32.mrf.mxu0
      %2292 = vmatprep.mubr.f32.mxu0 0.0
      %2293 = vmatmul.mubr.f32.gmra.mxu0 %v1625
      %v2294 = vpop.f32.mrf.mxu0
      %v2295 = vadd.f32 %v1661, %v2294
      %v2296 = vpop.f32.mrf.mxu0
      %2297 = vmatprep.mubr.f32.mxu0 0.0
      %2298 = vmatmul.mubr.f32.gmra.mxu0 %v1626
      %v2299 = vpop.f32.mrf.mxu0
      %v2300 = vadd.f32 %v1661, %v2299
      %v2301 = vpop.f32.mrf.mxu0
      %2302 = vmatprep.mubr.f32.mxu0 0.0
      %2303 = vmatmul.mubr.f32.gmra.mxu0 %v1627
      %v2304 = vpop.f32.mrf.mxu0
      %v2305 = vadd.f32 %v1661, %v2304
      %v2306 = vpop.f32.mrf.mxu0
      %2307 = vmatprep.mubr.f32.mxu0 0.0
      %2308 = vmatmul.mubr.f32.gmra.mxu0 %v1628
      %v2309 = vpop.f32.mrf.mxu0
      %v2310 = vadd.f32 %v1661, %v2309
      %v2311 = vpop.f32.mrf.mxu0
      %2312 = vmatprep.mubr.f32.mxu0 0.0
      %2313 = vmatmul.mubr.f32.gmra.mxu0 %v1629
      %v2314 = vpop.f32.mrf.mxu0
      %v2315 = vadd.f32 %v1661, %v2314
      %v2316 = vpop.f32.mrf.mxu0
      %2317 = vmatprep.mubr.f32.mxu0 0.0
      %2318 = vmatmul.mubr.f32.gmra.mxu0 %v1630
      %v2319 = vpop.f32.mrf.mxu0
      %v2320 = vadd.f32 %v1661, %v2319
      %v2321 = vpop.f32.mrf.mxu0
      %2322 = vmatprep.mubr.f32.mxu0 0.0
      %2323 = vmatmul.mubr.f32.gmra.mxu0 %v1631
      %v2324 = vpop.f32.mrf.mxu0
      %v2325 = vadd.f32 %v1661, %v2324
      %v2326 = vpop.f32.mrf.mxu0
      %2327 = vmatprep.mubr.f32.mxu0 0.0
      %2328 = vmatmul.mubr.f32.gmra.mxu0 %v1632
      %v2329 = vpop.f32.mrf.mxu0
      %v2330 = vadd.f32 %v1661, %v2329
      %v2331 = vpop.f32.mrf.mxu0
      %2332 = vmatprep.mubr.f32.mxu0 0.0
      %2333 = vmatmul.mubr.f32.gmra.mxu0 %v1633
      %v2334 = vpop.f32.mrf.mxu0
      %v2335 = vadd.f32 %v1661, %v2334
      %v2336 = vpop.f32.mrf.mxu0
      %2337 = vmatprep.mubr.f32.mxu0 0.0
      %2338 = vmatmul.mubr.f32.gmra.mxu0 %v1634
      %v2339 = vpop.f32.mrf.mxu0
      %v2340 = vadd.f32 %v1661, %v2339
      %v2341 = vpop.f32.mrf.mxu0
      %2342 = vmatprep.mubr.f32.mxu0 0.0
      %2343 = vmatmul.mubr.f32.gmra.mxu0 %v1635
      %v2344 = vpop.f32.mrf.mxu0
      %v2345 = vadd.f32 %v1661, %v2344
      %v2346 = vpop.f32.mrf.mxu0
      %2347 = vmatprep.mubr.f32.mxu0 0.0
      %2348 = vmatmul.mubr.f32.gmra.mxu0 %v1636
      %v2349 = vpop.f32.mrf.mxu0
      %v2350 = vadd.f32 %v1661, %v2349
      %v2351 = vpop.f32.mrf.mxu0
      %2352 = vmatprep.mubr.f32.mxu0 0.0
      %2353 = vmatmul.mubr.f32.gmra.mxu0 %v1637
      %v2354 = vpop.f32.mrf.mxu0
      %v2355 = vadd.f32 %v1661, %v2354
      %v2356 = vpop.f32.mrf.mxu0
      %2357 = vmatprep.mubr.f32.mxu0 0.0
      %2358 = vmatmul.mubr.f32.gmra.mxu0 %v1638
      %v2359 = vpop.f32.mrf.mxu0
      %v2360 = vadd.f32 %v1661, %v2359
      %v2361 = vpop.f32.mrf.mxu0
      %2362 = vmatprep.mubr.f32.mxu0 0.0
      %2363 = vmatmul.mubr.f32.gmra.mxu0 %v1639
      %v2364 = vpop.f32.mrf.mxu0
      %v2365 = vadd.f32 %v1661, %v2364
      %v2366 = vpop.f32.mrf.mxu0
      %2367 = vdwg.mxu0
      %v2368 = vmax.f32 %v1730, 0.0
      %v2369 = vmax.f32 %v1735, 0.0
      %v2370 = vmax.f32 %v1740, 0.0
      %v2371 = vmax.f32 %v1745, 0.0
      %v2372 = vmax.f32 %v1750, 0.0
      %v2373 = vmax.f32 %v1755, 0.0
      %v2374 = vmax.f32 %v1760, 0.0
      %v2375 = vmax.f32 %v1765, 0.0
      %v2376 = vmax.f32 %v1770, 0.0
      %v2377 = vmax.f32 %v1775, 0.0
      %v2378 = vmax.f32 %v1780, 0.0
      %v2379 = vmax.f32 %v1785, 0.0
      %v2380 = vmax.f32 %v1790, 0.0
      %v2381 = vmax.f32 %v1795, 0.0
      %v2382 = vmax.f32 %v1800, 0.0
      %v2383 = vmax.f32 %v1805, 0.0
      %v2384 = vmax.f32 %v1810, 0.0
      %v2385 = vmax.f32 %v1815, 0.0
      %v2386 = vmax.f32 %v1820, 0.0
      %v2387 = vmax.f32 %v1825, 0.0
      %v2388 = vmax.f32 %v1830, 0.0
      %v2389 = vmax.f32 %v1835, 0.0
      %v2390 = vmax.f32 %v1840, 0.0
      %v2391 = vmax.f32 %v1845, 0.0
      %v2392 = vmax.f32 %v1850, 0.0
      %v2393 = vmax.f32 %v1855, 0.0
      %v2394 = vmax.f32 %v1860, 0.0
      %v2395 = vmax.f32 %v1865, 0.0
      %v2396 = vmax.f32 %v1870, 0.0
      %v2397 = vmax.f32 %v1875, 0.0
      %v2398 = vmax.f32 %v1880, 0.0
      %v2399 = vmax.f32 %v1885, 0.0
      %v2400 = vmax.f32 %v1890, 0.0
      %v2401 = vmax.f32 %v1895, 0.0
      %v2402 = vmax.f32 %v1900, 0.0
      %v2403 = vmax.f32 %v1905, 0.0
      %v2404 = vmax.f32 %v1910, 0.0
      %v2405 = vmax.f32 %v1915, 0.0
      %v2406 = vmax.f32 %v1920, 0.0
      %v2407 = vmax.f32 %v1925, 0.0
      %v2408 = vmax.f32 %v1930, 0.0
      %v2409 = vmax.f32 %v1935, 0.0
      %v2410 = vmax.f32 %v1940, 0.0
      %v2411 = vmax.f32 %v1945, 0.0
      %v2412 = vmax.f32 %v1950, 0.0
      %v2413 = vmax.f32 %v1955, 0.0
      %v2414 = vmax.f32 %v1960, 0.0
      %v2415 = vmax.f32 %v1965, 0.0
      %v2416 = vmax.f32 %v1970, 0.0
      %v2417 = vmax.f32 %v1975, 0.0
      %v2418 = vmax.f32 %v1980, 0.0
      %v2419 = vmax.f32 %v1985, 0.0
      %v2420 = vmax.f32 %v1990, 0.0
      %v2421 = vmax.f32 %v1995, 0.0
      %v2422 = vmax.f32 %v2000, 0.0
      %v2423 = vmax.f32 %v2005, 0.0
      %v2424 = vmax.f32 %v2010, 0.0
      %v2425 = vmax.f32 %v2015, 0.0
      %v2426 = vmax.f32 %v2020, 0.0
      %v2427 = vmax.f32 %v2025, 0.0
      %v2428 = vmax.f32 %v2030, 0.0
      %v2429 = vmax.f32 %v2035, 0.0
      %v2430 = vmax.f32 %v2040, 0.0
      %v2431 = vmax.f32 %v2045, 0.0
      %v2432 = vmax.f32 %v2050, 0.0
      %v2433 = vmax.f32 %v2055, 0.0
      %v2434 = vmax.f32 %v2060, 0.0
      %v2435 = vmax.f32 %v2065, 0.0
      %v2436 = vmax.f32 %v2070, 0.0
      %v2437 = vmax.f32 %v2075, 0.0
      %v2438 = vmax.f32 %v2080, 0.0
      %v2439 = vmax.f32 %v2085, 0.0
      %v2440 = vmax.f32 %v2090, 0.0
      %v2441 = vmax.f32 %v2095, 0.0
      %v2442 = vmax.f32 %v2100, 0.0
      %v2443 = vmax.f32 %v2105, 0.0
      %v2444 = vmax.f32 %v2110, 0.0
      %v2445 = vmax.f32 %v2115, 0.0
      %v2446 = vmax.f32 %v2120, 0.0
      %v2447 = vmax.f32 %v2125, 0.0
      %v2448 = vmax.f32 %v2130, 0.0
      %v2449 = vmax.f32 %v2135, 0.0
      %v2450 = vmax.f32 %v2140, 0.0
      %v2451 = vmax.f32 %v2145, 0.0
      %v2452 = vmax.f32 %v2150, 0.0
      %v2453 = vmax.f32 %v2155, 0.0
      %v2454 = vmax.f32 %v2160, 0.0
      %v2455 = vmax.f32 %v2165, 0.0
      %v2456 = vmax.f32 %v2170, 0.0
      %v2457 = vmax.f32 %v2175, 0.0
      %v2458 = vmax.f32 %v2180, 0.0
      %v2459 = vmax.f32 %v2185, 0.0
      %v2460 = vmax.f32 %v2190, 0.0
      %v2461 = vmax.f32 %v2195, 0.0
      %v2462 = vmax.f32 %v2200, 0.0
      %v2463 = vmax.f32 %v2205, 0.0
      %v2464 = vmax.f32 %v2210, 0.0
      %v2465 = vmax.f32 %v2215, 0.0
      %v2466 = vmax.f32 %v2220, 0.0
      %v2467 = vmax.f32 %v2225, 0.0
      %v2468 = vmax.f32 %v2230, 0.0
      %v2469 = vmax.f32 %v2235, 0.0
      %v2470 = vmax.f32 %v2240, 0.0
      %v2471 = vmax.f32 %v2245, 0.0
      %v2472 = vmax.f32 %v2250, 0.0
      %v2473 = vmax.f32 %v2255, 0.0
      %v2474 = vmax.f32 %v2260, 0.0
      %v2475 = vmax.f32 %v2265, 0.0
      %v2476 = vmax.f32 %v2270, 0.0
      %v2477 = vmax.f32 %v2275, 0.0
      %v2478 = vmax.f32 %v2280, 0.0
      %v2479 = vmax.f32 %v2285, 0.0
      %v2480 = vmax.f32 %v2290, 0.0
      %v2481 = vmax.f32 %v2295, 0.0
      %v2482 = vmax.f32 %v2300, 0.0
      %v2483 = vmax.f32 %v2305, 0.0
      %v2484 = vmax.f32 %v2310, 0.0
      %v2485 = vmax.f32 %v2315, 0.0
      %v2486 = vmax.f32 %v2320, 0.0
      %v2487 = vmax.f32 %v2325, 0.0
      %v2488 = vmax.f32 %v2330, 0.0
      %v2489 = vmax.f32 %v2335, 0.0
      %v2490 = vmax.f32 %v2340, 0.0
      %v2491 = vmax.f32 %v2345, 0.0
      %v2492 = vmax.f32 %v2350, 0.0
      %v2493 = vmax.f32 %v2355, 0.0
      %v2494 = vmax.f32 %v2360, 0.0
      %v2495 = vmax.f32 %v2365, 0.0
      %v2496 = vld [vmem:[%s3] sm:$0xff]
      %v2497 = vld [vmem:[%s3 + $0x8] sm:$0xff]
      %v2498 = vld [vmem:[%s3 + $0x10] sm:$0xff]
      %v2499 = vld [vmem:[%s3 + $0x18] sm:$0xff]
      %v2500 = vld [vmem:[%s3 + $0x20] sm:$0xff]
      %v2501 = vld [vmem:[%s3 + $0x28] sm:$0xff]
      %v2502 = vld [vmem:[%s3 + $0x30] sm:$0xff]
      %v2503 = vld [vmem:[%s3 + $0x38] sm:$0xff]
      %v2504 = vld [vmem:[%s3 + $0x40] sm:$0xff]
      %v2505 = vld [vmem:[%s3 + $0x48] sm:$0xff]
      %v2506 = vld [vmem:[%s3 + $0x50] sm:$0xff]
      %v2507 = vld [vmem:[%s3 + $0x58] sm:$0xff]
      %v2508 = vld [vmem:[%s3 + $0x60] sm:$0xff]
      %v2509 = vld [vmem:[%s3 + $0x68] sm:$0xff]
      %v2510 = vld [vmem:[%s3 + $0x70] sm:$0xff]
      %v2511 = vld [vmem:[%s3 + $0x78] sm:$0xff]
      %v2512 = vld [vmem:[%s6] sm:$0x1]
      %v2514 = vlaneseq
      %v2515 = vshrl.u32 %v2514, 7
      %v2516 = vsub.s32 0, %v2515
      %v2517 = vrot.slane %v2512, %v2516
      %2519 = vmatprep.subr.mxu0 0.0
      %2520 = vmatpush1.msra.mxu0 %v2511
      %2521 = vmatprep.subr.mxu0 0.0
      %2522 = vmatpush1.msra.mxu0 %v2510
      %2523 = vmatprep.subr.mxu0 0.0
      %2524 = vmatpush1.msra.mxu0 %v2509
      %2525 = vmatprep.subr.mxu0 0.0
      %2526 = vmatpush1.msra.mxu0 %v2508
      %2527 = vmatprep.subr.mxu0 0.0
      %2528 = vmatpush1.msra.mxu0 %v2507
      %2529 = vmatprep.subr.mxu0 0.0
      %2530 = vmatpush1.msra.mxu0 %v2506
      %2531 = vmatprep.subr.mxu0 0.0
      %2532 = vmatpush1.msra.mxu0 %v2505
      %2533 = vmatprep.subr.mxu0 0.0
      %2534 = vmatpush1.msra.mxu0 %v2504
      %2535 = vmatprep.subr.mxu0 0.0
      %2536 = vmatpush1.msra.mxu0 %v2503
      %2537 = vmatprep.subr.mxu0 0.0
      %2538 = vmatpush1.msra.mxu0 %v2502
      %2539 = vmatprep.subr.mxu0 0.0
      %2540 = vmatpush1.msra.mxu0 %v2501
      %2541 = vmatprep.subr.mxu0 0.0
      %2542 = vmatpush1.msra.mxu0 %v2500
      %2543 = vmatprep.subr.mxu0 0.0
      %2544 = vmatpush1.msra.mxu0 %v2499
      %2545 = vmatprep.subr.mxu0 0.0
      %2546 = vmatpush1.msra.mxu0 %v2498
      %2547 = vmatprep.subr.mxu0 0.0
      %2548 = vmatpush1.msra.mxu0 %v2497
      %2549 = vmatprep.subr.mxu0 0.0
      %2550 = vmatpush1.msra.mxu0 %v2496
      %2551 = vmatprep.subr.mxu0 0.0
      %2552 = vmatpush2.msra.mxu0 0.0
      %2553 = vmatprep.subr.mxu0 0.0
      %2554 = vmatpush2.msra.mxu0 0.0
      %2555 = vmatprep.subr.mxu0 0.0
      %2556 = vmatpush2.msra.mxu0 0.0
      %2557 = vmatprep.subr.mxu0 0.0
      %2558 = vmatpush2.msra.mxu0 0.0
      %2559 = vmatprep.subr.mxu0 0.0
      %2560 = vmatpush2.msra.mxu0 0.0
      %2561 = vmatprep.subr.mxu0 0.0
      %2562 = vmatpush2.msra.mxu0 0.0
      %2563 = vmatprep.subr.mxu0 0.0
      %2564 = vmatpush2.msra.mxu0 0.0
      %2565 = vmatprep.subr.mxu0 0.0
      %2566 = vmatpush2.msra.mxu0 0.0
      %2567 = vmatprep.subr.mxu0 0.0
      %2568 = vmatpush2.msra.mxu0 0.0
      %2569 = vmatprep.subr.mxu0 0.0
      %2570 = vmatpush2.msra.mxu0 0.0
      %2571 = vmatprep.subr.mxu0 0.0
      %2572 = vmatpush2.msra.mxu0 0.0
      %2573 = vmatprep.subr.mxu0 0.0
      %2574 = vmatpush2.msra.mxu0 0.0
      %2575 = vmatprep.subr.mxu0 0.0
      %2576 = vmatpush2.msra.mxu0 0.0
      %2577 = vmatprep.subr.mxu0 0.0
      %2578 = vmatpush2.msra.mxu0 0.0
      %2579 = vmatprep.subr.mxu0 0.0
      %2580 = vmatpush2.msra.mxu0 0.0
      %2581 = vmatprep.subr.mxu0 0.0
      %2582 = vmatpush2.msra.mxu0 0.0
      %2583 = vmatprep.mubr.f32.mxu0 0.0
      %2584 = vmatmul.mubr.f32.gmra.mxu0 %v2368
      %v2585 = vpop.f32.mrf.mxu0
      %v2586 = vadd.f32 %v2517, %v2585
      %v2587 = vpop.f32.mrf.mxu0
      %2588 = vmatprep.mubr.f32.mxu0 0.0
      %2589 = vmatmul.mubr.f32.gmra.mxu0 %v2369
      %v2590 = vpop.f32.mrf.mxu0
      %v2591 = vadd.f32 %v2517, %v2590
      %v2592 = vpop.f32.mrf.mxu0
      %2593 = vmatprep.mubr.f32.mxu0 0.0
      %2594 = vmatmul.mubr.f32.gmra.mxu0 %v2370
      %v2595 = vpop.f32.mrf.mxu0
      %v2596 = vadd.f32 %v2517, %v2595
      %v2597 = vpop.f32.mrf.mxu0
      %2598 = vmatprep.mubr.f32.mxu0 0.0
      %2599 = vmatmul.mubr.f32.gmra.mxu0 %v2371
      %v2600 = vpop.f32.mrf.mxu0
      %v2601 = vadd.f32 %v2517, %v2600
      %v2602 = vpop.f32.mrf.mxu0
      %2603 = vmatprep.mubr.f32.mxu0 0.0
      %2604 = vmatmul.mubr.f32.gmra.mxu0 %v2372
      %v2605 = vpop.f32.mrf.mxu0
      %v2606 = vadd.f32 %v2517, %v2605
      %v2607 = vpop.f32.mrf.mxu0
      %2608 = vmatprep.mubr.f32.mxu0 0.0
      %2609 = vmatmul.mubr.f32.gmra.mxu0 %v2373
      %v2610 = vpop.f32.mrf.mxu0
      %v2611 = vadd.f32 %v2517, %v2610
      %v2612 = vpop.f32.mrf.mxu0
      %2613 = vmatprep.mubr.f32.mxu0 0.0
      %2614 = vmatmul.mubr.f32.gmra.mxu0 %v2374
      %v2615 = vpop.f32.mrf.mxu0
      %v2616 = vadd.f32 %v2517, %v2615
      %v2617 = vpop.f32.mrf.mxu0
      %2618 = vmatprep.mubr.f32.mxu0 0.0
      %2619 = vmatmul.mubr.f32.gmra.mxu0 %v2375
      %v2620 = vpop.f32.mrf.mxu0
      %v2621 = vadd.f32 %v2517, %v2620
      %v2622 = vpop.f32.mrf.mxu0
      %2623 = vmatprep.mubr.f32.mxu0 0.0
      %2624 = vmatmul.mubr.f32.gmra.mxu0 %v2376
      %v2625 = vpop.f32.mrf.mxu0
      %v2626 = vadd.f32 %v2517, %v2625
      %v2627 = vpop.f32.mrf.mxu0
      %2628 = vmatprep.mubr.f32.mxu0 0.0
      %2629 = vmatmul.mubr.f32.gmra.mxu0 %v2377
      %v2630 = vpop.f32.mrf.mxu0
      %v2631 = vadd.f32 %v2517, %v2630
      %v2632 = vpop.f32.mrf.mxu0
      %2633 = vmatprep.mubr.f32.mxu0 0.0
      %2634 = vmatmul.mubr.f32.gmra.mxu0 %v2378
      %v2635 = vpop.f32.mrf.mxu0
      %v2636 = vadd.f32 %v2517, %v2635
      %v2637 = vpop.f32.mrf.mxu0
      %2638 = vmatprep.mubr.f32.mxu0 0.0
      %2639 = vmatmul.mubr.f32.gmra.mxu0 %v2379
      %v2640 = vpop.f32.mrf.mxu0
      %v2641 = vadd.f32 %v2517, %v2640
      %v2642 = vpop.f32.mrf.mxu0
      %2643 = vmatprep.mubr.f32.mxu0 0.0
      %2644 = vmatmul.mubr.f32.gmra.mxu0 %v2380
      %v2645 = vpop.f32.mrf.mxu0
      %v2646 = vadd.f32 %v2517, %v2645
      %v2647 = vpop.f32.mrf.mxu0
      %2648 = vmatprep.mubr.f32.mxu0 0.0
      %2649 = vmatmul.mubr.f32.gmra.mxu0 %v2381
      %v2650 = vpop.f32.mrf.mxu0
      %v2651 = vadd.f32 %v2517, %v2650
      %v2652 = vpop.f32.mrf.mxu0
      %2653 = vmatprep.mubr.f32.mxu0 0.0
      %2654 = vmatmul.mubr.f32.gmra.mxu0 %v2382
      %v2655 = vpop.f32.mrf.mxu0
      %v2656 = vadd.f32 %v2517, %v2655
      %v2657 = vpop.f32.mrf.mxu0
      %2658 = vmatprep.mubr.f32.mxu0 0.0
      %2659 = vmatmul.mubr.f32.gmra.mxu0 %v2383
      %v2660 = vpop.f32.mrf.mxu0
      %v2661 = vadd.f32 %v2517, %v2660
      %v2662 = vpop.f32.mrf.mxu0
      %2663 = vmatprep.mubr.f32.mxu0 0.0
      %2664 = vmatmul.mubr.f32.gmra.mxu0 %v2384
      %v2665 = vpop.f32.mrf.mxu0
      %v2666 = vadd.f32 %v2517, %v2665
      %v2667 = vpop.f32.mrf.mxu0
      %2668 = vmatprep.mubr.f32.mxu0 0.0
      %2669 = vmatmul.mubr.f32.gmra.mxu0 %v2385
      %v2670 = vpop.f32.mrf.mxu0
      %v2671 = vadd.f32 %v2517, %v2670
      %v2672 = vpop.f32.mrf.mxu0
      %2673 = vmatprep.mubr.f32.mxu0 0.0
      %2674 = vmatmul.mubr.f32.gmra.mxu0 %v2386
      %v2675 = vpop.f32.mrf.mxu0
      %v2676 = vadd.f32 %v2517, %v2675
      %v2677 = vpop.f32.mrf.mxu0
      %2678 = vmatprep.mubr.f32.mxu0 0.0
      %2679 = vmatmul.mubr.f32.gmra.mxu0 %v2387
      %v2680 = vpop.f32.mrf.mxu0
      %v2681 = vadd.f32 %v2517, %v2680
      %v2682 = vpop.f32.mrf.mxu0
      %2683 = vmatprep.mubr.f32.mxu0 0.0
      %2684 = vmatmul.mubr.f32.gmra.mxu0 %v2388
      %v2685 = vpop.f32.mrf.mxu0
      %v2686 = vadd.f32 %v2517, %v2685
      %v2687 = vpop.f32.mrf.mxu0
      %2688 = vmatprep.mubr.f32.mxu0 0.0
      %2689 = vmatmul.mubr.f32.gmra.mxu0 %v2389
      %v2690 = vpop.f32.mrf.mxu0
      %v2691 = vadd.f32 %v2517, %v2690
      %v2692 = vpop.f32.mrf.mxu0
      %2693 = vmatprep.mubr.f32.mxu0 0.0
      %2694 = vmatmul.mubr.f32.gmra.mxu0 %v2390
      %v2695 = vpop.f32.mrf.mxu0
      %v2696 = vadd.f32 %v2517, %v2695
      %v2697 = vpop.f32.mrf.mxu0
      %2698 = vmatprep.mubr.f32.mxu0 0.0
      %2699 = vmatmul.mubr.f32.gmra.mxu0 %v2391
      %v2700 = vpop.f32.mrf.mxu0
      %v2701 = vadd.f32 %v2517, %v2700
      %v2702 = vpop.f32.mrf.mxu0
      %2703 = vmatprep.mubr.f32.mxu0 0.0
      %2704 = vmatmul.mubr.f32.gmra.mxu0 %v2392
      %v2705 = vpop.f32.mrf.mxu0
      %v2706 = vadd.f32 %v2517, %v2705
      %v2707 = vpop.f32.mrf.mxu0
      %2708 = vmatprep.mubr.f32.mxu0 0.0
      %2709 = vmatmul.mubr.f32.gmra.mxu0 %v2393
      %v2710 = vpop.f32.mrf.mxu0
      %v2711 = vadd.f32 %v2517, %v2710
      %v2712 = vpop.f32.mrf.mxu0
      %2713 = vmatprep.mubr.f32.mxu0 0.0
      %2714 = vmatmul.mubr.f32.gmra.mxu0 %v2394
      %v2715 = vpop.f32.mrf.mxu0
      %v2716 = vadd.f32 %v2517, %v2715
      %v2717 = vpop.f32.mrf.mxu0
      %2718 = vmatprep.mubr.f32.mxu0 0.0
      %2719 = vmatmul.mubr.f32.gmra.mxu0 %v2395
      %v2720 = vpop.f32.mrf.mxu0
      %v2721 = vadd.f32 %v2517, %v2720
      %v2722 = vpop.f32.mrf.mxu0
      %2723 = vmatprep.mubr.f32.mxu0 0.0
      %2724 = vmatmul.mubr.f32.gmra.mxu0 %v2396
      %v2725 = vpop.f32.mrf.mxu0
      %v2726 = vadd.f32 %v2517, %v2725
      %v2727 = vpop.f32.mrf.mxu0
      %2728 = vmatprep.mubr.f32.mxu0 0.0
      %2729 = vmatmul.mubr.f32.gmra.mxu0 %v2397
      %v2730 = vpop.f32.mrf.mxu0
      %v2731 = vadd.f32 %v2517, %v2730
      %v2732 = vpop.f32.mrf.mxu0
      %2733 = vmatprep.mubr.f32.mxu0 0.0
      %2734 = vmatmul.mubr.f32.gmra.mxu0 %v2398
      %v2735 = vpop.f32.mrf.mxu0
      %v2736 = vadd.f32 %v2517, %v2735
      %v2737 = vpop.f32.mrf.mxu0
      %2738 = vmatprep.mubr.f32.mxu0 0.0
      %2739 = vmatmul.mubr.f32.gmra.mxu0 %v2399
      %v2740 = vpop.f32.mrf.mxu0
      %v2741 = vadd.f32 %v2517, %v2740
      %v2742 = vpop.f32.mrf.mxu0
      %2743 = vmatprep.mubr.f32.mxu0 0.0
      %2744 = vmatmul.mubr.f32.gmra.mxu0 %v2400
      %v2745 = vpop.f32.mrf.mxu0
      %v2746 = vadd.f32 %v2517, %v2745
      %v2747 = vpop.f32.mrf.mxu0
      %2748 = vmatprep.mubr.f32.mxu0 0.0
      %2749 = vmatmul.mubr.f32.gmra.mxu0 %v2401
      %v2750 = vpop.f32.mrf.mxu0
      %v2751 = vadd.f32 %v2517, %v2750
      %v2752 = vpop.f32.mrf.mxu0
      %2753 = vmatprep.mubr.f32.mxu0 0.0
      %2754 = vmatmul.mubr.f32.gmra.mxu0 %v2402
      %v2755 = vpop.f32.mrf.mxu0
      %v2756 = vadd.f32 %v2517, %v2755
      %v2757 = vpop.f32.mrf.mxu0
      %2758 = vmatprep.mubr.f32.mxu0 0.0
      %2759 = vmatmul.mubr.f32.gmra.mxu0 %v2403
      %v2760 = vpop.f32.mrf.mxu0
      %v2761 = vadd.f32 %v2517, %v2760
      %v2762 = vpop.f32.mrf.mxu0
      %2763 = vmatprep.mubr.f32.mxu0 0.0
      %2764 = vmatmul.mubr.f32.gmra.mxu0 %v2404
      %v2765 = vpop.f32.mrf.mxu0
      %v2766 = vadd.f32 %v2517, %v2765
      %v2767 = vpop.f32.mrf.mxu0
      %2768 = vmatprep.mubr.f32.mxu0 0.0
      %2769 = vmatmul.mubr.f32.gmra.mxu0 %v2405
      %v2770 = vpop.f32.mrf.mxu0
      %v2771 = vadd.f32 %v2517, %v2770
      %v2772 = vpop.f32.mrf.mxu0
      %2773 = vmatprep.mubr.f32.mxu0 0.0
      %2774 = vmatmul.mubr.f32.gmra.mxu0 %v2406
      %v2775 = vpop.f32.mrf.mxu0
      %v2776 = vadd.f32 %v2517, %v2775
      %v2777 = vpop.f32.mrf.mxu0
      %2778 = vmatprep.mubr.f32.mxu0 0.0
      %2779 = vmatmul.mubr.f32.gmra.mxu0 %v2407
      %v2780 = vpop.f32.mrf.mxu0
      %v2781 = vadd.f32 %v2517, %v2780
      %v2782 = vpop.f32.mrf.mxu0
      %2783 = vmatprep.mubr.f32.mxu0 0.0
      %2784 = vmatmul.mubr.f32.gmra.mxu0 %v2408
      %v2785 = vpop.f32.mrf.mxu0
      %v2786 = vadd.f32 %v2517, %v2785
      %v2787 = vpop.f32.mrf.mxu0
      %2788 = vmatprep.mubr.f32.mxu0 0.0
      %2789 = vmatmul.mubr.f32.gmra.mxu0 %v2409
      %v2790 = vpop.f32.mrf.mxu0
      %v2791 = vadd.f32 %v2517, %v2790
      %v2792 = vpop.f32.mrf.mxu0
      %2793 = vmatprep.mubr.f32.mxu0 0.0
      %2794 = vmatmul.mubr.f32.gmra.mxu0 %v2410
      %v2795 = vpop.f32.mrf.mxu0
      %v2796 = vadd.f32 %v2517, %v2795
      %v2797 = vpop.f32.mrf.mxu0
      %2798 = vmatprep.mubr.f32.mxu0 0.0
      %2799 = vmatmul.mubr.f32.gmra.mxu0 %v2411
      %v2800 = vpop.f32.mrf.mxu0
      %v2801 = vadd.f32 %v2517, %v2800
      %v2802 = vpop.f32.mrf.mxu0
      %2803 = vmatprep.mubr.f32.mxu0 0.0
      %2804 = vmatmul.mubr.f32.gmra.mxu0 %v2412
      %v2805 = vpop.f32.mrf.mxu0
      %v2806 = vadd.f32 %v2517, %v2805
      %v2807 = vpop.f32.mrf.mxu0
      %2808 = vmatprep.mubr.f32.mxu0 0.0
      %2809 = vmatmul.mubr.f32.gmra.mxu0 %v2413
      %v2810 = vpop.f32.mrf.mxu0
      %v2811 = vadd.f32 %v2517, %v2810
      %v2812 = vpop.f32.mrf.mxu0
      %2813 = vmatprep.mubr.f32.mxu0 0.0
      %2814 = vmatmul.mubr.f32.gmra.mxu0 %v2414
      %v2815 = vpop.f32.mrf.mxu0
      %v2816 = vadd.f32 %v2517, %v2815
      %v2817 = vpop.f32.mrf.mxu0
      %2818 = vmatprep.mubr.f32.mxu0 0.0
      %2819 = vmatmul.mubr.f32.gmra.mxu0 %v2415
      %v2820 = vpop.f32.mrf.mxu0
      %v2821 = vadd.f32 %v2517, %v2820
      %v2822 = vpop.f32.mrf.mxu0
      %2823 = vmatprep.mubr.f32.mxu0 0.0
      %2824 = vmatmul.mubr.f32.gmra.mxu0 %v2416
      %v2825 = vpop.f32.mrf.mxu0
      %v2826 = vadd.f32 %v2517, %v2825
      %v2827 = vpop.f32.mrf.mxu0
      %2828 = vmatprep.mubr.f32.mxu0 0.0
      %2829 = vmatmul.mubr.f32.gmra.mxu0 %v2417
      %v2830 = vpop.f32.mrf.mxu0
      %v2831 = vadd.f32 %v2517, %v2830
      %v2832 = vpop.f32.mrf.mxu0
      %2833 = vmatprep.mubr.f32.mxu0 0.0
      %2834 = vmatmul.mubr.f32.gmra.mxu0 %v2418
      %v2835 = vpop.f32.mrf.mxu0
      %v2836 = vadd.f32 %v2517, %v2835
      %v2837 = vpop.f32.mrf.mxu0
      %2838 = vmatprep.mubr.f32.mxu0 0.0
      %2839 = vmatmul.mubr.f32.gmra.mxu0 %v2419
      %v2840 = vpop.f32.mrf.mxu0
      %v2841 = vadd.f32 %v2517, %v2840
      %v2842 = vpop.f32.mrf.mxu0
      %2843 = vmatprep.mubr.f32.mxu0 0.0
      %2844 = vmatmul.mubr.f32.gmra.mxu0 %v2420
      %v2845 = vpop.f32.mrf.mxu0
      %v2846 = vadd.f32 %v2517, %v2845
      %v2847 = vpop.f32.mrf.mxu0
      %2848 = vmatprep.mubr.f32.mxu0 0.0
      %2849 = vmatmul.mubr.f32.gmra.mxu0 %v2421
      %v2850 = vpop.f32.mrf.mxu0
      %v2851 = vadd.f32 %v2517, %v2850
      %v2852 = vpop.f32.mrf.mxu0
      %2853 = vmatprep.mubr.f32.mxu0 0.0
      %2854 = vmatmul.mubr.f32.gmra.mxu0 %v2422
      %v2855 = vpop.f32.mrf.mxu0
      %v2856 = vadd.f32 %v2517, %v2855
      %v2857 = vpop.f32.mrf.mxu0
      %2858 = vmatprep.mubr.f32.mxu0 0.0
      %2859 = vmatmul.mubr.f32.gmra.mxu0 %v2423
      %v2860 = vpop.f32.mrf.mxu0
      %v2861 = vadd.f32 %v2517, %v2860
      %v2862 = vpop.f32.mrf.mxu0
      %2863 = vmatprep.mubr.f32.mxu0 0.0
      %2864 = vmatmul.mubr.f32.gmra.mxu0 %v2424
      %v2865 = vpop.f32.mrf.mxu0
      %v2866 = vadd.f32 %v2517, %v2865
      %v2867 = vpop.f32.mrf.mxu0
      %2868 = vmatprep.mubr.f32.mxu0 0.0
      %2869 = vmatmul.mubr.f32.gmra.mxu0 %v2425
      %v2870 = vpop.f32.mrf.mxu0
      %v2871 = vadd.f32 %v2517, %v2870
      %v2872 = vpop.f32.mrf.mxu0
      %2873 = vmatprep.mubr.f32.mxu0 0.0
      %2874 = vmatmul.mubr.f32.gmra.mxu0 %v2426
      %v2875 = vpop.f32.mrf.mxu0
      %v2876 = vadd.f32 %v2517, %v2875
      %v2877 = vpop.f32.mrf.mxu0
      %2878 = vmatprep.mubr.f32.mxu0 0.0
      %2879 = vmatmul.mubr.f32.gmra.mxu0 %v2427
      %v2880 = vpop.f32.mrf.mxu0
      %v2881 = vadd.f32 %v2517, %v2880
      %v2882 = vpop.f32.mrf.mxu0
      %2883 = vmatprep.mubr.f32.mxu0 0.0
      %2884 = vmatmul.mubr.f32.gmra.mxu0 %v2428
      %v2885 = vpop.f32.mrf.mxu0
      %v2886 = vadd.f32 %v2517, %v2885
      %v2887 = vpop.f32.mrf.mxu0
      %2888 = vmatprep.mubr.f32.mxu0 0.0
      %2889 = vmatmul.mubr.f32.gmra.mxu0 %v2429
      %v2890 = vpop.f32.mrf.mxu0
      %v2891 = vadd.f32 %v2517, %v2890
      %v2892 = vpop.f32.mrf.mxu0
      %2893 = vmatprep.mubr.f32.mxu0 0.0
      %2894 = vmatmul.mubr.f32.gmra.mxu0 %v2430
      %v2895 = vpop.f32.mrf.mxu0
      %v2896 = vadd.f32 %v2517, %v2895
      %v2897 = vpop.f32.mrf.mxu0
      %2898 = vmatprep.mubr.f32.mxu0 0.0
      %2899 = vmatmul.mubr.f32.gmra.mxu0 %v2431
      %v2900 = vpop.f32.mrf.mxu0
      %v2901 = vadd.f32 %v2517, %v2900
      %v2902 = vpop.f32.mrf.mxu0
      %2903 = vmatprep.mubr.f32.mxu0 0.0
      %2904 = vmatmul.mubr.f32.gmra.mxu0 %v2432
      %v2905 = vpop.f32.mrf.mxu0
      %v2906 = vadd.f32 %v2517, %v2905
      %v2907 = vpop.f32.mrf.mxu0
      %2908 = vmatprep.mubr.f32.mxu0 0.0
      %2909 = vmatmul.mubr.f32.gmra.mxu0 %v2433
      %v2910 = vpop.f32.mrf.mxu0
      %v2911 = vadd.f32 %v2517, %v2910
      %v2912 = vpop.f32.mrf.mxu0
      %2913 = vmatprep.mubr.f32.mxu0 0.0
      %2914 = vmatmul.mubr.f32.gmra.mxu0 %v2434
      %v2915 = vpop.f32.mrf.mxu0
      %v2916 = vadd.f32 %v2517, %v2915
      %v2917 = vpop.f32.mrf.mxu0
      %2918 = vmatprep.mubr.f32.mxu0 0.0
      %2919 = vmatmul.mubr.f32.gmra.mxu0 %v2435
      %v2920 = vpop.f32.mrf.mxu0
      %v2921 = vadd.f32 %v2517, %v2920
      %v2922 = vpop.f32.mrf.mxu0
      %2923 = vmatprep.mubr.f32.mxu0 0.0
      %2924 = vmatmul.mubr.f32.gmra.mxu0 %v2436
      %v2925 = vpop.f32.mrf.mxu0
      %v2926 = vadd.f32 %v2517, %v2925
      %v2927 = vpop.f32.mrf.mxu0
      %2928 = vmatprep.mubr.f32.mxu0 0.0
      %2929 = vmatmul.mubr.f32.gmra.mxu0 %v2437
      %v2930 = vpop.f32.mrf.mxu0
      %v2931 = vadd.f32 %v2517, %v2930
      %v2932 = vpop.f32.mrf.mxu0
      %2933 = vmatprep.mubr.f32.mxu0 0.0
      %2934 = vmatmul.mubr.f32.gmra.mxu0 %v2438
      %v2935 = vpop.f32.mrf.mxu0
      %v2936 = vadd.f32 %v2517, %v2935
      %v2937 = vpop.f32.mrf.mxu0
      %2938 = vmatprep.mubr.f32.mxu0 0.0
      %2939 = vmatmul.mubr.f32.gmra.mxu0 %v2439
      %v2940 = vpop.f32.mrf.mxu0
      %v2941 = vadd.f32 %v2517, %v2940
      %v2942 = vpop.f32.mrf.mxu0
      %2943 = vmatprep.mubr.f32.mxu0 0.0
      %2944 = vmatmul.mubr.f32.gmra.mxu0 %v2440
      %v2945 = vpop.f32.mrf.mxu0
      %v2946 = vadd.f32 %v2517, %v2945
      %v2947 = vpop.f32.mrf.mxu0
      %2948 = vmatprep.mubr.f32.mxu0 0.0
      %2949 = vmatmul.mubr.f32.gmra.mxu0 %v2441
      %v2950 = vpop.f32.mrf.mxu0
      %v2951 = vadd.f32 %v2517, %v2950
      %v2952 = vpop.f32.mrf.mxu0
      %2953 = vmatprep.mubr.f32.mxu0 0.0
      %2954 = vmatmul.mubr.f32.gmra.mxu0 %v2442
      %v2955 = vpop.f32.mrf.mxu0
      %v2956 = vadd.f32 %v2517, %v2955
      %v2957 = vpop.f32.mrf.mxu0
      %2958 = vmatprep.mubr.f32.mxu0 0.0
      %2959 = vmatmul.mubr.f32.gmra.mxu0 %v2443
      %v2960 = vpop.f32.mrf.mxu0
      %v2961 = vadd.f32 %v2517, %v2960
      %v2962 = vpop.f32.mrf.mxu0
      %2963 = vmatprep.mubr.f32.mxu0 0.0
      %2964 = vmatmul.mubr.f32.gmra.mxu0 %v2444
      %v2965 = vpop.f32.mrf.mxu0
      %v2966 = vadd.f32 %v2517, %v2965
      %v2967 = vpop.f32.mrf.mxu0
      %2968 = vmatprep.mubr.f32.mxu0 0.0
      %2969 = vmatmul.mubr.f32.gmra.mxu0 %v2445
      %v2970 = vpop.f32.mrf.mxu0
      %v2971 = vadd.f32 %v2517, %v2970
      %v2972 = vpop.f32.mrf.mxu0
      %2973 = vmatprep.mubr.f32.mxu0 0.0
      %2974 = vmatmul.mubr.f32.gmra.mxu0 %v2446
      %v2975 = vpop.f32.mrf.mxu0
      %v2976 = vadd.f32 %v2517, %v2975
      %v2977 = vpop.f32.mrf.mxu0
      %2978 = vmatprep.mubr.f32.mxu0 0.0
      %2979 = vmatmul.mubr.f32.gmra.mxu0 %v2447
      %v2980 = vpop.f32.mrf.mxu0
      %v2981 = vadd.f32 %v2517, %v2980
      %v2982 = vpop.f32.mrf.mxu0
      %2983 = vmatprep.mubr.f32.mxu0 0.0
      %2984 = vmatmul.mubr.f32.gmra.mxu0 %v2448
      %v2985 = vpop.f32.mrf.mxu0
      %v2986 = vadd.f32 %v2517, %v2985
      %v2987 = vpop.f32.mrf.mxu0
      %2988 = vmatprep.mubr.f32.mxu0 0.0
      %2989 = vmatmul.mubr.f32.gmra.mxu0 %v2449
      %v2990 = vpop.f32.mrf.mxu0
      %v2991 = vadd.f32 %v2517, %v2990
      %v2992 = vpop.f32.mrf.mxu0
      %2993 = vmatprep.mubr.f32.mxu0 0.0
      %2994 = vmatmul.mubr.f32.gmra.mxu0 %v2450
      %v2995 = vpop.f32.mrf.mxu0
      %v2996 = vadd.f32 %v2517, %v2995
      %v2997 = vpop.f32.mrf.mxu0
      %2998 = vmatprep.mubr.f32.mxu0 0.0
      %2999 = vmatmul.mubr.f32.gmra.mxu0 %v2451
      %v3000 = vpop.f32.mrf.mxu0
      %v3001 = vadd.f32 %v2517, %v3000
      %v3002 = vpop.f32.mrf.mxu0
      %3003 = vmatprep.mubr.f32.mxu0 0.0
      %3004 = vmatmul.mubr.f32.gmra.mxu0 %v2452
      %v3005 = vpop.f32.mrf.mxu0
      %v3006 = vadd.f32 %v2517, %v3005
      %v3007 = vpop.f32.mrf.mxu0
      %3008 = vmatprep.mubr.f32.mxu0 0.0
      %3009 = vmatmul.mubr.f32.gmra.mxu0 %v2453
      %v3010 = vpop.f32.mrf.mxu0
      %v3011 = vadd.f32 %v2517, %v3010
      %v3012 = vpop.f32.mrf.mxu0
      %3013 = vmatprep.mubr.f32.mxu0 0.0
      %3014 = vmatmul.mubr.f32.gmra.mxu0 %v2454
      %v3015 = vpop.f32.mrf.mxu0
      %v3016 = vadd.f32 %v2517, %v3015
      %v3017 = vpop.f32.mrf.mxu0
      %3018 = vmatprep.mubr.f32.mxu0 0.0
      %3019 = vmatmul.mubr.f32.gmra.mxu0 %v2455
      %v3020 = vpop.f32.mrf.mxu0
      %v3021 = vadd.f32 %v2517, %v3020
      %v3022 = vpop.f32.mrf.mxu0
      %3023 = vmatprep.mubr.f32.mxu0 0.0
      %3024 = vmatmul.mubr.f32.gmra.mxu0 %v2456
      %v3025 = vpop.f32.mrf.mxu0
      %v3026 = vadd.f32 %v2517, %v3025
      %v3027 = vpop.f32.mrf.mxu0
      %3028 = vmatprep.mubr.f32.mxu0 0.0
      %3029 = vmatmul.mubr.f32.gmra.mxu0 %v2457
      %v3030 = vpop.f32.mrf.mxu0
      %v3031 = vadd.f32 %v2517, %v3030
      %v3032 = vpop.f32.mrf.mxu0
      %3033 = vmatprep.mubr.f32.mxu0 0.0
      %3034 = vmatmul.mubr.f32.gmra.mxu0 %v2458
      %v3035 = vpop.f32.mrf.mxu0
      %v3036 = vadd.f32 %v2517, %v3035
      %v3037 = vpop.f32.mrf.mxu0
      %3038 = vmatprep.mubr.f32.mxu0 0.0
      %3039 = vmatmul.mubr.f32.gmra.mxu0 %v2459
      %v3040 = vpop.f32.mrf.mxu0
      %v3041 = vadd.f32 %v2517, %v3040
      %v3042 = vpop.f32.mrf.mxu0
      %3043 = vmatprep.mubr.f32.mxu0 0.0
      %3044 = vmatmul.mubr.f32.gmra.mxu0 %v2460
      %v3045 = vpop.f32.mrf.mxu0
      %v3046 = vadd.f32 %v2517, %v3045
      %v3047 = vpop.f32.mrf.mxu0
      %3048 = vmatprep.mubr.f32.mxu0 0.0
      %3049 = vmatmul.mubr.f32.gmra.mxu0 %v2461
      %v3050 = vpop.f32.mrf.mxu0
      %v3051 = vadd.f32 %v2517, %v3050
      %v3052 = vpop.f32.mrf.mxu0
      %3053 = vmatprep.mubr.f32.mxu0 0.0
      %3054 = vmatmul.mubr.f32.gmra.mxu0 %v2462
      %v3055 = vpop.f32.mrf.mxu0
      %v3056 = vadd.f32 %v2517, %v3055
      %v3057 = vpop.f32.mrf.mxu0
      %3058 = vmatprep.mubr.f32.mxu0 0.0
      %3059 = vmatmul.mubr.f32.gmra.mxu0 %v2463
      %v3060 = vpop.f32.mrf.mxu0
      %v3061 = vadd.f32 %v2517, %v3060
      %v3062 = vpop.f32.mrf.mxu0
      %3063 = vmatprep.mubr.f32.mxu0 0.0
      %3064 = vmatmul.mubr.f32.gmra.mxu0 %v2464
      %v3065 = vpop.f32.mrf.mxu0
      %v3066 = vadd.f32 %v2517, %v3065
      %v3067 = vpop.f32.mrf.mxu0
      %3068 = vmatprep.mubr.f32.mxu0 0.0
      %3069 = vmatmul.mubr.f32.gmra.mxu0 %v2465
      %v3070 = vpop.f32.mrf.mxu0
      %v3071 = vadd.f32 %v2517, %v3070
      %v3072 = vpop.f32.mrf.mxu0
      %3073 = vmatprep.mubr.f32.mxu0 0.0
      %3074 = vmatmul.mubr.f32.gmra.mxu0 %v2466
      %v3075 = vpop.f32.mrf.mxu0
      %v3076 = vadd.f32 %v2517, %v3075
      %v3077 = vpop.f32.mrf.mxu0
      %3078 = vmatprep.mubr.f32.mxu0 0.0
      %3079 = vmatmul.mubr.f32.gmra.mxu0 %v2467
      %v3080 = vpop.f32.mrf.mxu0
      %v3081 = vadd.f32 %v2517, %v3080
      %v3082 = vpop.f32.mrf.mxu0
      %3083 = vmatprep.mubr.f32.mxu0 0.0
      %3084 = vmatmul.mubr.f32.gmra.mxu0 %v2468
      %v3085 = vpop.f32.mrf.mxu0
      %v3086 = vadd.f32 %v2517, %v3085
      %v3087 = vpop.f32.mrf.mxu0
      %3088 = vmatprep.mubr.f32.mxu0 0.0
      %3089 = vmatmul.mubr.f32.gmra.mxu0 %v2469
      %v3090 = vpop.f32.mrf.mxu0
      %v3091 = vadd.f32 %v2517, %v3090
      %v3092 = vpop.f32.mrf.mxu0
      %3093 = vmatprep.mubr.f32.mxu0 0.0
      %3094 = vmatmul.mubr.f32.gmra.mxu0 %v2470
      %v3095 = vpop.f32.mrf.mxu0
      %v3096 = vadd.f32 %v2517, %v3095
      %v3097 = vpop.f32.mrf.mxu0
      %3098 = vmatprep.mubr.f32.mxu0 0.0
      %3099 = vmatmul.mubr.f32.gmra.mxu0 %v2471
      %v3100 = vpop.f32.mrf.mxu0
      %v3101 = vadd.f32 %v2517, %v3100
      %v3102 = vpop.f32.mrf.mxu0
      %3103 = vmatprep.mubr.f32.mxu0 0.0
      %3104 = vmatmul.mubr.f32.gmra.mxu0 %v2472
      %v3105 = vpop.f32.mrf.mxu0
      %v3106 = vadd.f32 %v2517, %v3105
      %v3107 = vpop.f32.mrf.mxu0
      %3108 = vmatprep.mubr.f32.mxu0 0.0
      %3109 = vmatmul.mubr.f32.gmra.mxu0 %v2473
      %v3110 = vpop.f32.mrf.mxu0
      %v3111 = vadd.f32 %v2517, %v3110
      %v3112 = vpop.f32.mrf.mxu0
      %3113 = vmatprep.mubr.f32.mxu0 0.0
      %3114 = vmatmul.mubr.f32.gmra.mxu0 %v2474
      %v3115 = vpop.f32.mrf.mxu0
      %v3116 = vadd.f32 %v2517, %v3115
      %v3117 = vpop.f32.mrf.mxu0
      %3118 = vmatprep.mubr.f32.mxu0 0.0
      %3119 = vmatmul.mubr.f32.gmra.mxu0 %v2475
      %v3120 = vpop.f32.mrf.mxu0
      %v3121 = vadd.f32 %v2517, %v3120
      %v3122 = vpop.f32.mrf.mxu0
      %3123 = vmatprep.mubr.f32.mxu0 0.0
      %3124 = vmatmul.mubr.f32.gmra.mxu0 %v2476
      %v3125 = vpop.f32.mrf.mxu0
      %v3126 = vadd.f32 %v2517, %v3125
      %v3127 = vpop.f32.mrf.mxu0
      %3128 = vmatprep.mubr.f32.mxu0 0.0
      %3129 = vmatmul.mubr.f32.gmra.mxu0 %v2477
      %v3130 = vpop.f32.mrf.mxu0
      %v3131 = vadd.f32 %v2517, %v3130
      %v3132 = vpop.f32.mrf.mxu0
      %3133 = vmatprep.mubr.f32.mxu0 0.0
      %3134 = vmatmul.mubr.f32.gmra.mxu0 %v2478
      %v3135 = vpop.f32.mrf.mxu0
      %v3136 = vadd.f32 %v2517, %v3135
      %v3137 = vpop.f32.mrf.mxu0
      %3138 = vmatprep.mubr.f32.mxu0 0.0
      %3139 = vmatmul.mubr.f32.gmra.mxu0 %v2479
      %v3140 = vpop.f32.mrf.mxu0
      %v3141 = vadd.f32 %v2517, %v3140
      %v3142 = vpop.f32.mrf.mxu0
      %3143 = vmatprep.mubr.f32.mxu0 0.0
      %3144 = vmatmul.mubr.f32.gmra.mxu0 %v2480
      %v3145 = vpop.f32.mrf.mxu0
      %v3146 = vadd.f32 %v2517, %v3145
      %v3147 = vpop.f32.mrf.mxu0
      %3148 = vmatprep.mubr.f32.mxu0 0.0
      %3149 = vmatmul.mubr.f32.gmra.mxu0 %v2481
      %v3150 = vpop.f32.mrf.mxu0
      %v3151 = vadd.f32 %v2517, %v3150
      %v3152 = vpop.f32.mrf.mxu0
      %3153 = vmatprep.mubr.f32.mxu0 0.0
      %3154 = vmatmul.mubr.f32.gmra.mxu0 %v2482
      %v3155 = vpop.f32.mrf.mxu0
      %v3156 = vadd.f32 %v2517, %v3155
      %v3157 = vpop.f32.mrf.mxu0
      %3158 = vmatprep.mubr.f32.mxu0 0.0
      %3159 = vmatmul.mubr.f32.gmra.mxu0 %v2483
      %v3160 = vpop.f32.mrf.mxu0
      %v3161 = vadd.f32 %v2517, %v3160
      %v3162 = vpop.f32.mrf.mxu0
      %3163 = vmatprep.mubr.f32.mxu0 0.0
      %3164 = vmatmul.mubr.f32.gmra.mxu0 %v2484
      %v3165 = vpop.f32.mrf.mxu0
      %v3166 = vadd.f32 %v2517, %v3165
      %v3167 = vpop.f32.mrf.mxu0
      %3168 = vmatprep.mubr.f32.mxu0 0.0
      %3169 = vmatmul.mubr.f32.gmra.mxu0 %v2485
      %v3170 = vpop.f32.mrf.mxu0
      %v3171 = vadd.f32 %v2517, %v3170
      %v3172 = vpop.f32.mrf.mxu0
      %3173 = vmatprep.mubr.f32.mxu0 0.0
      %3174 = vmatmul.mubr.f32.gmra.mxu0 %v2486
      %v3175 = vpop.f32.mrf.mxu0
      %v3176 = vadd.f32 %v2517, %v3175
      %v3177 = vpop.f32.mrf.mxu0
      %3178 = vmatprep.mubr.f32.mxu0 0.0
      %3179 = vmatmul.mubr.f32.gmra.mxu0 %v2487
      %v3180 = vpop.f32.mrf.mxu0
      %v3181 = vadd.f32 %v2517, %v3180
      %v3182 = vpop.f32.mrf.mxu0
      %3183 = vmatprep.mubr.f32.mxu0 0.0
      %3184 = vmatmul.mubr.f32.gmra.mxu0 %v2488
      %v3185 = vpop.f32.mrf.mxu0
      %v3186 = vadd.f32 %v2517, %v3185
      %v3187 = vpop.f32.mrf.mxu0
      %3188 = vmatprep.mubr.f32.mxu0 0.0
      %3189 = vmatmul.mubr.f32.gmra.mxu0 %v2489
      %v3190 = vpop.f32.mrf.mxu0
      %v3191 = vadd.f32 %v2517, %v3190
      %v3192 = vpop.f32.mrf.mxu0
      %3193 = vmatprep.mubr.f32.mxu0 0.0
      %3194 = vmatmul.mubr.f32.gmra.mxu0 %v2490
      %v3195 = vpop.f32.mrf.mxu0
      %v3196 = vadd.f32 %v2517, %v3195
      %v3197 = vpop.f32.mrf.mxu0
      %3198 = vmatprep.mubr.f32.mxu0 0.0
      %3199 = vmatmul.mubr.f32.gmra.mxu0 %v2491
      %v3200 = vpop.f32.mrf.mxu0
      %v3201 = vadd.f32 %v2517, %v3200
      %v3202 = vpop.f32.mrf.mxu0
      %3203 = vmatprep.mubr.f32.mxu0 0.0
      %3204 = vmatmul.mubr.f32.gmra.mxu0 %v2492
      %v3205 = vpop.f32.mrf.mxu0
      %v3206 = vadd.f32 %v2517, %v3205
      %v3207 = vpop.f32.mrf.mxu0
      %3208 = vmatprep.mubr.f32.mxu0 0.0
      %3209 = vmatmul.mubr.f32.gmra.mxu0 %v2493
      %v3210 = vpop.f32.mrf.mxu0
      %v3211 = vadd.f32 %v2517, %v3210
      %v3212 = vpop.f32.mrf.mxu0
      %3213 = vmatprep.mubr.f32.mxu0 0.0
      %3214 = vmatmul.mubr.f32.gmra.mxu0 %v2494
      %v3215 = vpop.f32.mrf.mxu0
      %v3216 = vadd.f32 %v2517, %v3215
      %v3217 = vpop.f32.mrf.mxu0
      %3218 = vmatprep.mubr.f32.mxu0 0.0
      %3219 = vmatmul.mubr.f32.gmra.mxu0 %v2495
      %v3220 = vpop.f32.mrf.mxu0
      %v3221 = vadd.f32 %v2517, %v3220
      %v3222 = vpop.f32.mrf.mxu0
      %3223 = vdwg.mxu0
      %3224 = vst.msk [vmem:[%s280] sm:$0xff] %vm418, %v2586
      %3225 = vst.msk [vmem:[%s280 + $0x8] sm:$0xff] %vm418, %v2591
      %3226 = vst.msk [vmem:[%s280 + $0x10] sm:$0xff] %vm418, %v2596
      %3227 = vst.msk [vmem:[%s280 + $0x18] sm:$0xff] %vm418, %v2601
      %3228 = vst.msk [vmem:[%s280 + $0x20] sm:$0xff] %vm418, %v2606
      %3229 = vst.msk [vmem:[%s280 + $0x28] sm:$0xff] %vm418, %v2611
      %3230 = vst.msk [vmem:[%s280 + $0x30] sm:$0xff] %vm418, %v2616
      %3231 = vst.msk [vmem:[%s280 + $0x38] sm:$0xff] %vm418, %v2621
      %3232 = vst.msk [vmem:[%s280 + $0x40] sm:$0xff] %vm418, %v2626
      %3233 = vst.msk [vmem:[%s280 + $0x48] sm:$0xff] %vm418, %v2631
      %3234 = vst.msk [vmem:[%s280 + $0x50] sm:$0xff] %vm418, %v2636
      %3235 = vst.msk [vmem:[%s280 + $0x58] sm:$0xff] %vm418, %v2641
      %3236 = vst.msk [vmem:[%s280 + $0x60] sm:$0xff] %vm418, %v2646
      %3237 = vst.msk [vmem:[%s280 + $0x68] sm:$0xff] %vm418, %v2651
      %3238 = vst.msk [vmem:[%s280 + $0x70] sm:$0xff] %vm418, %v2656
      %3239 = vst.msk [vmem:[%s280 + $0x78] sm:$0xff] %vm418, %v2661
      %3240 = vst.msk [vmem:[%s280 + $0x80] sm:$0xff] %vm418, %v2666
      %3241 = vst.msk [vmem:[%s280 + $0x88] sm:$0xff] %vm418, %v2671
      %3242 = vst.msk [vmem:[%s280 + $0x90] sm:$0xff] %vm418, %v2676
      %3243 = vst.msk [vmem:[%s280 + $0x98] sm:$0xff] %vm418, %v2681
      %3244 = vst.msk [vmem:[%s280 + $0xa0] sm:$0xff] %vm418, %v2686
      %3245 = vst.msk [vmem:[%s280 + $0xa8] sm:$0xff] %vm418, %v2691
      %3246 = vst.msk [vmem:[%s280 + $0xb0] sm:$0xff] %vm418, %v2696
      %3247 = vst.msk [vmem:[%s280 + $0xb8] sm:$0xff] %vm418, %v2701
      %3248 = vst.msk [vmem:[%s280 + $0xc0] sm:$0xff] %vm418, %v2706
      %3249 = vst.msk [vmem:[%s280 + $0xc8] sm:$0xff] %vm418, %v2711
      %3250 = vst.msk [vmem:[%s280 + $0xd0] sm:$0xff] %vm418, %v2716
      %3251 = vst.msk [vmem:[%s280 + $0xd8] sm:$0xff] %vm418, %v2721
      %3252 = vst.msk [vmem:[%s280 + $0xe0] sm:$0xff] %vm418, %v2726
      %3253 = vst.msk [vmem:[%s280 + $0xe8] sm:$0xff] %vm418, %v2731
      %3254 = vst.msk [vmem:[%s280 + $0xf0] sm:$0xff] %vm418, %v2736
      %3255 = vst.msk [vmem:[%s280 + $0xf8] sm:$0xff] %vm418, %v2741
      %3256 = vst.msk [vmem:[%s280 + $0x100] sm:$0xff] %vm418, %v2746
      %3257 = vst.msk [vmem:[%s280 + $0x108] sm:$0xff] %vm418, %v2751
      %3258 = vst.msk [vmem:[%s280 + $0x110] sm:$0xff] %vm418, %v2756
      %3259 = vst.msk [vmem:[%s280 + $0x118] sm:$0xff] %vm418, %v2761
      %3260 = vst.msk [vmem:[%s280 + $0x120] sm:$0xff] %vm418, %v2766
      %3261 = vst.msk [vmem:[%s280 + $0x128] sm:$0xff] %vm418, %v2771
      %3262 = vst.msk [vmem:[%s280 + $0x130] sm:$0xff] %vm418, %v2776
      %3263 = vst.msk [vmem:[%s280 + $0x138] sm:$0xff] %vm418, %v2781
      %3264 = vst.msk [vmem:[%s280 + $0x140] sm:$0xff] %vm418, %v2786
      %3265 = vst.msk [vmem:[%s280 + $0x148] sm:$0xff] %vm418, %v2791
      %3266 = vst.msk [vmem:[%s280 + $0x150] sm:$0xff] %vm418, %v2796
      %3267 = vst.msk [vmem:[%s280 + $0x158] sm:$0xff] %vm418, %v2801
      %3268 = vst.msk [vmem:[%s280 + $0x160] sm:$0xff] %vm418, %v2806
      %3269 = vst.msk [vmem:[%s280 + $0x168] sm:$0xff] %vm418, %v2811
      %3270 = vst.msk [vmem:[%s280 + $0x170] sm:$0xff] %vm418, %v2816
      %3271 = vst.msk [vmem:[%s280 + $0x178] sm:$0xff] %vm418, %v2821
      %3272 = vst.msk [vmem:[%s280 + $0x180] sm:$0xff] %vm418, %v2826
      %3273 = vst.msk [vmem:[%s280 + $0x188] sm:$0xff] %vm418, %v2831
      %3274 = vst.msk [vmem:[%s280 + $0x190] sm:$0xff] %vm418, %v2836
      %3275 = vst.msk [vmem:[%s280 + $0x198] sm:$0xff] %vm418, %v2841
      %3276 = vst.msk [vmem:[%s280 + $0x1a0] sm:$0xff] %vm418, %v2846
      %3277 = vst.msk [vmem:[%s280 + $0x1a8] sm:$0xff] %vm418, %v2851
      %3278 = vst.msk [vmem:[%s280 + $0x1b0] sm:$0xff] %vm418, %v2856
      %3279 = vst.msk [vmem:[%s280 + $0x1b8] sm:$0xff] %vm418, %v2861
      %3280 = vst.msk [vmem:[%s280 + $0x1c0] sm:$0xff] %vm418, %v2866
      %3281 = vst.msk [vmem:[%s280 + $0x1c8] sm:$0xff] %vm418, %v2871
      %3282 = vst.msk [vmem:[%s280 + $0x1d0] sm:$0xff] %vm418, %v2876
      %3283 = vst.msk [vmem:[%s280 + $0x1d8] sm:$0xff] %vm418, %v2881
      %3284 = vst.msk [vmem:[%s280 + $0x1e0] sm:$0xff] %vm418, %v2886
      %3285 = vst.msk [vmem:[%s280 + $0x1e8] sm:$0xff] %vm418, %v2891
      %3286 = vst.msk [vmem:[%s280 + $0x1f0] sm:$0xff] %vm418, %v2896
      %3287 = vst.msk [vmem:[%s280 + $0x1f8] sm:$0xff] %vm418, %v2901
      %3288 = vst.msk [vmem:[%s280 + $0x200] sm:$0xff] %vm418, %v2906
      %3289 = vst.msk [vmem:[%s280 + $0x208] sm:$0xff] %vm418, %v2911
      %3290 = vst.msk [vmem:[%s280 + $0x210] sm:$0xff] %vm418, %v2916
      %3291 = vst.msk [vmem:[%s280 + $0x218] sm:$0xff] %vm418, %v2921
      %3292 = vst.msk [vmem:[%s280 + $0x220] sm:$0xff] %vm418, %v2926
      %3293 = vst.msk [vmem:[%s280 + $0x228] sm:$0xff] %vm418, %v2931
      %3294 = vst.msk [vmem:[%s280 + $0x230] sm:$0xff] %vm418, %v2936
      %3295 = vst.msk [vmem:[%s280 + $0x238] sm:$0xff] %vm418, %v2941
      %3296 = vst.msk [vmem:[%s280 + $0x240] sm:$0xff] %vm418, %v2946
      %3297 = vst.msk [vmem:[%s280 + $0x248] sm:$0xff] %vm418, %v2951
      %3298 = vst.msk [vmem:[%s280 + $0x250] sm:$0xff] %vm418, %v2956
      %3299 = vst.msk [vmem:[%s280 + $0x258] sm:$0xff] %vm418, %v2961
      %3300 = vst.msk [vmem:[%s280 + $0x260] sm:$0xff] %vm418, %v2966
      %3301 = vst.msk [vmem:[%s280 + $0x268] sm:$0xff] %vm418, %v2971
      %3302 = vst.msk [vmem:[%s280 + $0x270] sm:$0xff] %vm418, %v2976
      %3303 = vst.msk [vmem:[%s280 + $0x278] sm:$0xff] %vm418, %v2981
      %3304 = vst.msk [vmem:[%s280 + $0x280] sm:$0xff] %vm418, %v2986
      %3305 = vst.msk [vmem:[%s280 + $0x288] sm:$0xff] %vm418, %v2991
      %3306 = vst.msk [vmem:[%s280 + $0x290] sm:$0xff] %vm418, %v2996
      %3307 = vst.msk [vmem:[%s280 + $0x298] sm:$0xff] %vm418, %v3001
      %3308 = vst.msk [vmem:[%s280 + $0x2a0] sm:$0xff] %vm418, %v3006
      %3309 = vst.msk [vmem:[%s280 + $0x2a8] sm:$0xff] %vm418, %v3011
      %3310 = vst.msk [vmem:[%s280 + $0x2b0] sm:$0xff] %vm418, %v3016
      %3311 = vst.msk [vmem:[%s280 + $0x2b8] sm:$0xff] %vm418, %v3021
      %3312 = vst.msk [vmem:[%s280 + $0x2c0] sm:$0xff] %vm418, %v3026
      %3313 = vst.msk [vmem:[%s280 + $0x2c8] sm:$0xff] %vm418, %v3031
      %3314 = vst.msk [vmem:[%s280 + $0x2d0] sm:$0xff] %vm418, %v3036
      %3315 = vst.msk [vmem:[%s280 + $0x2d8] sm:$0xff] %vm418, %v3041
      %3316 = vst.msk [vmem:[%s280 + $0x2e0] sm:$0xff] %vm418, %v3046
      %3317 = vst.msk [vmem:[%s280 + $0x2e8] sm:$0xff] %vm418, %v3051
      %3318 = vst.msk [vmem:[%s280 + $0x2f0] sm:$0xff] %vm418, %v3056
      %3319 = vst.msk [vmem:[%s280 + $0x2f8] sm:$0xff] %vm418, %v3061
      %3320 = vst.msk [vmem:[%s280 + $0x300] sm:$0xff] %vm418, %v3066
      %3321 = vst.msk [vmem:[%s280 + $0x308] sm:$0xff] %vm418, %v3071
      %3322 = vst.msk [vmem:[%s280 + $0x310] sm:$0xff] %vm418, %v3076
      %3323 = vst.msk [vmem:[%s280 + $0x318] sm:$0xff] %vm418, %v3081
      %3324 = vst.msk [vmem:[%s280 + $0x320] sm:$0xff] %vm418, %v3086
      %3325 = vst.msk [vmem:[%s280 + $0x328] sm:$0xff] %vm418, %v3091
      %3326 = vst.msk [vmem:[%s280 + $0x330] sm:$0xff] %vm418, %v3096
      %3327 = vst.msk [vmem:[%s280 + $0x338] sm:$0xff] %vm418, %v3101
      %3328 = vst.msk [vmem:[%s280 + $0x340] sm:$0xff] %vm418, %v3106
      %3329 = vst.msk [vmem:[%s280 + $0x348] sm:$0xff] %vm418, %v3111
      %3330 = vst.msk [vmem:[%s280 + $0x350] sm:$0xff] %vm418, %v3116
      %3331 = vst.msk [vmem:[%s280 + $0x358] sm:$0xff] %vm418, %v3121
      %3332 = vst.msk [vmem:[%s280 + $0x360] sm:$0xff] %vm418, %v3126
      %3333 = vst.msk [vmem:[%s280 + $0x368] sm:$0xff] %vm418, %v3131
      %3334 = vst.msk [vmem:[%s280 + $0x370] sm:$0xff] %vm418, %v3136
      %3335 = vst.msk [vmem:[%s280 + $0x378] sm:$0xff] %vm418, %v3141
      %3336 = vst.msk [vmem:[%s280 + $0x380] sm:$0xff] %vm418, %v3146
      %3337 = vst.msk [vmem:[%s280 + $0x388] sm:$0xff] %vm418, %v3151
      %3338 = vst.msk [vmem:[%s280 + $0x390] sm:$0xff] %vm418, %v3156
      %3339 = vst.msk [vmem:[%s280 + $0x398] sm:$0xff] %vm418, %v3161
      %3340 = vst.msk [vmem:[%s280 + $0x3a0] sm:$0xff] %vm418, %v3166
      %3341 = vst.msk [vmem:[%s280 + $0x3a8] sm:$0xff] %vm418, %v3171
      %3342 = vst.msk [vmem:[%s280 + $0x3b0] sm:$0xff] %vm418, %v3176
      %3343 = vst.msk [vmem:[%s280 + $0x3b8] sm:$0xff] %vm418, %v3181
      %3344 = vst.msk [vmem:[%s280 + $0x3c0] sm:$0xff] %vm418, %v3186
      %3345 = vst.msk [vmem:[%s280 + $0x3c8] sm:$0xff] %vm418, %v3191
      %3346 = vst.msk [vmem:[%s280 + $0x3d0] sm:$0xff] %vm418, %v3196
      %3347 = vst.msk [vmem:[%s280 + $0x3d8] sm:$0xff] %vm418, %v3201
      %3348 = vst.msk [vmem:[%s280 + $0x3e0] sm:$0xff] %vm418, %v3206
      %3349 = vst.msk [vmem:[%s280 + $0x3e8] sm:$0xff] %vm418, %v3211
      %3350 = vst.msk [vmem:[%s280 + $0x3f0] sm:$0xff] %vm418, %v3216
      %3351 = vst.msk [vmem:[%s280 + $0x3f8] sm:$0xff] %vm418, %v3221
      %s3352 = smul.u32 128, %s18
      %p3353 = scmp.lt.s32.totalorder %s3352, 255
      %s3354 = scalar_select %p3353, %s3352, 255
      %s3355 = smul.addr %s3354, 8
      %s3356 = scalar_lea.vmem %s7, %s3355
      // Predicated region
      $region49: #{tpu_custom_call.1} parent=47 // pred_check
        %p3357 = pneg %p188
      $region50: #{tpu_custom_call.1} parent=47 // pred_check_branch
        %3359 = sbr.rel (%p3357) target = $region52
      $region51: #{tpu_custom_call.1} parent=47 // pred_region
        %s3360 = smul.u32 128, %s18
      $region52: #{tpu_custom_call.1} parent=47 // pred_fallthru
        _
    $region48: #{tpu_custom_call.1} parent=5 // pred_fallthru
      _
    %p3361 = scmp.le.s32.totalorder 2, %s13
    // Predicated region
    $region53: #{tpu_custom_call.1} parent=5 // pred_check
      %p3362 = pneg %p3361
    $region54: #{tpu_custom_call.1} parent=5 // pred_check_branch
      %3364 = sbr.rel (%p3362) target = $region56
    $region55: #{tpu_custom_call.1} parent=5 // pred_region
      %s3365 = ssub.s32 %s13, 2
      // Predicated region
      $region57: #{tpu_custom_call.1} parent=55 // pred_check
        %p3366 = pneg %p194
      $region58: #{tpu_custom_call.1} parent=55 // pred_check_branch
        %3368 = sbr.rel (%p3366) target = $region60
      $region59: #{tpu_custom_call.1} parent=55 // pred_region
        %s3369 = smul.u32 128, %s19
        %p3370 = scmp.lt.s32.totalorder %s3369, 255
        %s3371 = scalar_select %p3370, %s3369, 255
        %s3372 = smul.addr %s3371, 8
        %s3373 = scalar_lea.vmem %s7, %s3372
      $region60: #{tpu_custom_call.1} parent=55 // pred_fallthru
        _
    $region56: #{tpu_custom_call.1} parent=5 // pred_fallthru
      _
  $region6: #{tpu_custom_call.1} parent=0 // loop_footer
    %s17 = sadd.s32 1, %s13
  $region7: #{tpu_custom_call.1} parent=0 // loop_footer_branch
    %12 = sbr.rel target = $region3
  $region8: #{tpu_custom_call.1} parent=0 // loop_exit
    _

</llo_original>
